<compile_context>
chip_gen: v5e
topology: v5e:2x2
jax: 0.10.0
libtpu: 0.0.40
codegen_flags: <defaults>
</compile_context>

<pallas_src>
import functools

import jax
import jax.numpy as jnp
from jax import lax
from jax.experimental import pallas as pl
from jax.experimental.pallas import tpu as pltpu


def _conv3x3_kernel(x_ref, w_ref, m_ref, o_ref, p_ref, acc_ref, *,
                    img_w, pad_l, cblk):
    """3x3 / SAME conv over a flat NCHW image, 'shift-the-output' formulation.

    x_ref  : (Cin, H*W)              flat NCHW input (batch 1)
    w_ref  : (9*Cblk, Cin)           fused weights, rows = tap-major, then channel
    m_ref  : (2, H*W)                0/1 masks killing horizontal row-wrap taps
    o_ref  : (Cblk, H*W)             flat NCHW output block
    p_ref  : (9*Cblk, H*W)           VMEM scratch: fused matmul result
    acc_ref: (Cblk, pad_l+H*W+pad_r) widened VMEM accumulator
    """
    hw = x_ref.shape[1]

    # ONE fused MXU matmul for all 9 taps: (9*Cblk, Cin) x (Cin, H*W).
    p_ref[...] = lax.dot_general(
        w_ref[...], x_ref[...],
        dimension_numbers=(((1,), (0,)), ((), ())),
        preferred_element_type=jnp.float32)

    # Zero the widened accumulator once (tiny), then scatter-accumulate the
    # nine small (Cblk, H*W) tap contributions at static shifted offsets.
    acc_ref[...] = jnp.zeros_like(acc_ref)
    for kh in range(3):
        for kw in range(3):
            t = kh * 3 + kw
            d = (kh - 1) * img_w + (kw - 1)   # flat input offset of this tap
            off = pad_l - d                   # static, in [pad_l-29, pad_l+29]
            contrib = p_ref[t * cblk:(t + 1) * cblk, :]
            if kw == 0:      # left tap: input col W-1 would wrap into output col 0
                contrib = contrib * m_ref[0:1, :]
            elif kw == 2:    # right tap: input col 0 would wrap into output col W-1
                contrib = contrib * m_ref[1:2, :]
            acc_ref[:, off:off + hw] += contrib

    # Interior of the accumulator is the SAME-padded conv output
    # (lane-aligned read: pad_l is a multiple of 128).
    o_ref[...] = acc_ref[:, pad_l:pad_l + hw]


def _pick_cout_blocks():
    # v7x has 2 TensorCores per chip -> split output channels across them.
    # v5e/v6e have a single TC: one grid step (best MXU fill, no per-step waste).
    try:
        kind = jax.devices()[0].device_kind.lower()
    except Exception:
        return 1
    if ("v7" in kind) or ("tpu7" in kind) or ("7x" in kind):
        return 2
    return 1


def conv2d_3x3_same(x_nchw, w_oihw, *, cout_blocks=None):
    """3x3 / stride 1 / pad 1 / no-bias conv as a single Pallas TPU kernel.

    x_nchw: (1, Cin, H, W) float32;  w_oihw: (Cout, Cin, 3, 3) float32
    returns (1, Cout, H, W) float32
    """
    n, cin, img_h, img_w = x_nchw.shape
    cout = w_oihw.shape[0]
    assert n == 1
    if cout_blocks is None:
        cout_blocks = _pick_cout_blocks()
    assert cout % cout_blocks == 0
    hw = img_h * img_w
    cblk = cout // cout_blocks

    # NCHW with batch 1: (Cin, H*W) is a pure reshape (no copy).
    x_flat = x_nchw.reshape(cin, hw)

    # OIHW -> fused (cout_blocks * 9 * cblk, cin) weight matrix:
    # rows ordered [block, tap(kh*3+kw), local out-channel]. Tiny; constant-folded.
    w_taps = jnp.transpose(w_oihw, (2, 3, 0, 1)).reshape(9, cout, cin)
    w_taps = w_taps.reshape(9, cout_blocks, cblk, cin)
    w_all = jnp.transpose(w_taps, (1, 0, 2, 3)).reshape(cout_blocks * 9 * cblk, cin)

    # 0/1 masks (in INPUT-column coordinates) cancelling horizontal row-wrap:
    #   row 0 (kw=0 taps): kill input col W-1 (would land in output col 0)
    #   row 1 (kw=2 taps): kill input col 0   (would land in output col W-1)
    col = jnp.arange(hw, dtype=jnp.int32) % img_w
    edge_masks = jnp.stack([col != img_w - 1, col != 0]).astype(jnp.float32)  # (2, hw)

    pad_l = 128                                   # lane-aligned, >= img_w + 1
    assert pad_l >= img_w + 1
    min_total = pad_l + hw + img_w + 1            # right border must cover +29 shift
    acc_w = ((min_total + 127) // 128) * 128      # round to full lanes (= 1024 here)

    kernel = functools.partial(_conv3x3_kernel, img_w=img_w, pad_l=pad_l, cblk=cblk)

    out_flat = pl.pallas_call(
        kernel,
        out_shape=jax.ShapeDtypeStruct((cout, hw), jnp.float32),
        grid_spec=pltpu.PrefetchScalarGridSpec(
            num_scalar_prefetch=0,
            grid=(cout_blocks,),
            in_specs=[
                pl.BlockSpec((cin, hw), lambda i: (0, 0)),             # full input
                pl.BlockSpec((9 * cblk, cin), lambda i: (i, 0)),       # fused taps
                pl.BlockSpec((2, hw), lambda i: (0, 0)),               # edge masks
            ],
            out_specs=pl.BlockSpec((cblk, hw), lambda i: (i, 0)),
            scratch_shapes=[
                pltpu.VMEM((9 * cblk, hw), jnp.float32),               # matmul result
                pltpu.VMEM((cblk, acc_w), jnp.float32),                # widened acc
            ],
        ),
        compiler_params=pltpu.CompilerParams(
            dimension_semantics=("parallel",)),      # v7x: one Cout half per TC
        cost_estimate=pl.CostEstimate(
            flops=2 * hw * cin * cout * 9,
            transcendentals=0,
            bytes_accessed=4 * (cin * hw + 9 * cout * cin + 2 * hw + cout * hw)),
    )(x_flat, w_all, edge_masks)

    return out_flat.reshape(1, cout, img_h, img_w)


def forward(params, x113, x51, x58, x65, x72, x79, x86, x93, x100, x107, x121):
    x114 = conv2d_3x3_same(x113, params["conv2d31_w"])
    # torch.cat(..., dim=1): pure data movement, left to XLA.
    x122 = jnp.concatenate(
        [x51, x58, x65, x72, x79, x86, x93, x100, x107, x114, x121], axis=1
    )
    return x122


if __name__ == "__main__":
    key = jax.random.PRNGKey(0)
    keys = jax.random.split(key, 12)

    H = W = 28
    # Conv2d(128, 32, 3x3, bias=False) weights.
    conv_w = jax.random.normal(keys[0], (32, 128, 3, 3), jnp.float32) * 0.05
    params = {"conv2d31_w": conv_w}

    x113 = jax.random.normal(keys[1], (1, 128, H, W), jnp.float32)
    x51 = jax.random.normal(keys[2], (1, 128, H, W), jnp.float32)
    x58 = jax.random.normal(keys[3], (1, 32, H, W), jnp.float32)
    x65 = jax.random.normal(keys[4], (1, 32, H, W), jnp.float32)
    x72 = jax.random.normal(keys[5], (1, 32, H, W), jnp.float32)
    x79 = jax.random.normal(keys[6], (1, 32, H, W), jnp.float32)
    x86 = jax.random.normal(keys[7], (1, 32, H, W), jnp.float32)
    x93 = jax.random.normal(keys[8], (1, 32, H, W), jnp.float32)
    x100 = jax.random.normal(keys[9], (1, 32, H, W), jnp.float32)
    x107 = jax.random.normal(keys[10], (1, 32, H, W), jnp.float32)
    x121 = jax.random.normal(keys[11], (1, 32, H, W), jnp.float32)

    fwd = jax.jit(forward)
    out = fwd(params, x113, x51, x58, x65, x72, x79, x86, x93, x100, x107, x121)
    out = jax.block_until_ready(out)
    assert out.shape == (1, 128 + 32 * 10, H, W), out.shape

    # Sanity-check the Pallas conv against XLA's reference conv.
    ref_conv = jax.lax.conv_general_dilated(
        x113, conv_w, window_strides=(1, 1), padding=((1, 1), (1, 1)),
        dimension_numbers=("NCHW", "OIHW", "NCHW"),
    )
    pallas_conv = out[:, 128 + 32 * 8: 128 + 32 * 9]  # slot of x114 in the concat
    assert jnp.allclose(pallas_conv, ref_conv, atol=2e-3, rtol=2e-3)

    print("KERNEL_OK")
</pallas_src>

<mosaic_0001>
module attributes {stable_mosaic.version = 11 : i64} {
  func.func @_conv3x3_kernel(%arg0: i32, %arg1: memref<128x784xf32, #tpu.memory_space<vmem>>, %arg2: memref<288x128xf32, #tpu.memory_space<vmem>>, %arg3: memref<2x784xf32, #tpu.memory_space<vmem>>, %arg4: memref<32x784xf32, #tpu.memory_space<vmem>>, %arg5: memref<288x784xf32, #tpu.memory_space<vmem>>, %arg6: memref<32x1024xf32, #tpu.memory_space<vmem>>) attributes {dimension_semantics = [#tpu.dimension_semantics<parallel>], iteration_bounds = array<i64: 1>, scalar_prefetch = 0 : i64, scratch_operands = 2 : i64, tpu.core_type = #tpu.core_type<tc>, window_params = [{pipeline_mode = #tpu.pipeline_mode<synchronous>, transform_indices = @transform_0, window_bounds = array<i64: 128, 784>}, {transform_indices = @transform_1, window_bounds = array<i64: 288, 128>}, {pipeline_mode = #tpu.pipeline_mode<synchronous>, transform_indices = @transform_2, window_bounds = array<i64: 2, 784>}, {transform_indices = @transform_3, window_bounds = array<i64: 32, 784>}]} {
    %c0 = arith.constant 0 : index
    %c0_0 = arith.constant 0 : index
    %0 = vector.load %arg2[%c0, %c0_0] : memref<288x128xf32, #tpu.memory_space<vmem>>, vector<288x128xf32>
    %c0_1 = arith.constant 0 : index
    %c0_2 = arith.constant 0 : index
    %1 = vector.load %arg1[%c0_1, %c0_2] : memref<128x784xf32, #tpu.memory_space<vmem>>, vector<128x784xf32>
    %cst = arith.constant dense<0.000000e+00> : vector<288x784xf32>
    %2 = tpu.matmul %0, %1, %cst {dimension_numbers = #tpu.dot_dimension_numbers<[1], [0], [0], [1], [0, 0, 1, 1], [], []>} : vector<288x128xf32>, vector<128x784xf32>, vector<288x784xf32> -> vector<288x784xf32>
    %c0_3 = arith.constant 0 : index
    %c0_4 = arith.constant 0 : index
    %3 = vector.load %arg5[%c0_3, %c0_4] : memref<288x784xf32, #tpu.memory_space<vmem>>, vector<288x784xf32>
    tpu.vector_store %arg5[%c0_3, %c0_4], %2 {strides = array<i32>} : memref<288x784xf32, #tpu.memory_space<vmem>>, vector<288x784xf32>,
    %cst_5 = arith.constant 0.000000e+00 : f32
    %4 = vector.broadcast %cst_5 : f32 to vector<32x1024xf32>
    %c0_6 = arith.constant 0 : index
    %c0_7 = arith.constant 0 : index
    %5 = vector.load %arg6[%c0_6, %c0_7] : memref<32x1024xf32, #tpu.memory_space<vmem>>, vector<32x1024xf32>
    tpu.vector_store %arg6[%c0_6, %c0_7], %4 {strides = array<i32>} : memref<32x1024xf32, #tpu.memory_space<vmem>>, vector<32x1024xf32>,
    %c0_8 = arith.constant 0 : index
    %c0_9 = arith.constant 0 : index
    %6 = vector.load %arg5[%c0_8, %c0_9] : memref<288x784xf32, #tpu.memory_space<vmem>>, vector<32x784xf32>
    %c0_10 = arith.constant 0 : index
    %c0_11 = arith.constant 0 : index
    %7 = vector.load %arg3[%c0_10, %c0_11] : memref<2x784xf32, #tpu.memory_space<vmem>>, vector<1x784xf32>
    %8 = vector.broadcast %7 : vector<1x784xf32> to vector<32x784xf32>
    %9 = arith.mulf %6, %8 : vector<32x784xf32>
    %c0_12 = arith.constant 0 : index
    %c157 = arith.constant 157 : index
    %10 = vector.load %arg6[%c0_12, %c157] : memref<32x1024xf32, #tpu.memory_space<vmem>>, vector<32x784xf32>
    %11 = arith.addf %10, %9 : vector<32x784xf32>
    %c0_13 = arith.constant 0 : index
    %c157_14 = arith.constant 157 : index
    %12 = vector.load %arg6[%c0_13, %c157_14] : memref<32x1024xf32, #tpu.memory_space<vmem>>, vector<32x784xf32>
    tpu.vector_store %arg6[%c0_13, %c157_14], %11 {strides = array<i32>} : memref<32x1024xf32, #tpu.memory_space<vmem>>, vector<32x784xf32>,
    %c32 = arith.constant 32 : index
    %c0_15 = arith.constant 0 : index
    %13 = vector.load %arg5[%c32, %c0_15] : memref<288x784xf32, #tpu.memory_space<vmem>>, vector<32x784xf32>
    %c0_16 = arith.constant 0 : index
    %c156 = arith.constant 156 : index
    %14 = vector.load %arg6[%c0_16, %c156] : memref<32x1024xf32, #tpu.memory_space<vmem>>, vector<32x784xf32>
    %15 = arith.addf %14, %13 : vector<32x784xf32>
    %c0_17 = arith.constant 0 : index
    %c156_18 = arith.constant 156 : index
    %16 = vector.load %arg6[%c0_17, %c156_18] : memref<32x1024xf32, #tpu.memory_space<vmem>>, vector<32x784xf32>
    tpu.vector_store %arg6[%c0_17, %c156_18], %15 {strides = array<i32>} : memref<32x1024xf32, #tpu.memory_space<vmem>>, vector<32x784xf32>,
    %c64 = arith.constant 64 : index
    %c0_19 = arith.constant 0 : index
    %17 = vector.load %arg5[%c64, %c0_19] : memref<288x784xf32, #tpu.memory_space<vmem>>, vector<32x784xf32>
    %c1 = arith.constant 1 : index
    %c0_20 = arith.constant 0 : index
    %18 = vector.load %arg3[%c1, %c0_20] : memref<2x784xf32, #tpu.memory_space<vmem>>, vector<1x784xf32>
    %19 = vector.broadcast %18 : vector<1x784xf32> to vector<32x784xf32>
    %20 = arith.mulf %17, %19 : vector<32x784xf32>
    %c0_21 = arith.constant 0 : index
    %c155 = arith.constant 155 : index
    %21 = vector.load %arg6[%c0_21, %c155] : memref<32x1024xf32, #tpu.memory_space<vmem>>, vector<32x784xf32>
    %22 = arith.addf %21, %20 : vector<32x784xf32>
    %c0_22 = arith.constant 0 : index
    %c155_23 = arith.constant 155 : index
    %23 = vector.load %arg6[%c0_22, %c155_23] : memref<32x1024xf32, #tpu.memory_space<vmem>>, vector<32x784xf32>
    tpu.vector_store %arg6[%c0_22, %c155_23], %22 {strides = array<i32>} : memref<32x1024xf32, #tpu.memory_space<vmem>>, vector<32x784xf32>,
    %c96 = arith.constant 96 : index
    %c0_24 = arith.constant 0 : index
    %24 = vector.load %arg5[%c96, %c0_24] : memref<288x784xf32, #tpu.memory_space<vmem>>, vector<32x784xf32>
    %c0_25 = arith.constant 0 : index
    %c0_26 = arith.constant 0 : index
    %25 = vector.load %arg3[%c0_25, %c0_26] : memref<2x784xf32, #tpu.memory_space<vmem>>, vector<1x784xf32>
    %26 = vector.broadcast %25 : vector<1x784xf32> to vector<32x784xf32>
    %27 = arith.mulf %24, %26 : vector<32x784xf32>
    %c0_27 = arith.constant 0 : index
    %c129 = arith.constant 129 : index
    %28 = vector.load %arg6[%c0_27, %c129] : memref<32x1024xf32, #tpu.memory_space<vmem>>, vector<32x784xf32>
    %29 = arith.addf %28, %27 : vector<32x784xf32>
    %c0_28 = arith.constant 0 : index
    %c129_29 = arith.constant 129 : index
    %30 = vector.load %arg6[%c0_28, %c129_29] : memref<32x1024xf32, #tpu.memory_space<vmem>>, vector<32x784xf32>
    tpu.vector_store %arg6[%c0_28, %c129_29], %29 {strides = array<i32>} : memref<32x1024xf32, #tpu.memory_space<vmem>>, vector<32x784xf32>,
    %c128 = arith.constant 128 : index
    %c0_30 = arith.constant 0 : index
    %31 = vector.load %arg5[%c128, %c0_30] : memref<288x784xf32, #tpu.memory_space<vmem>>, vector<32x784xf32>
    %c0_31 = arith.constant 0 : index
    %c128_32 = arith.constant 128 : index
    %32 = vector.load %arg6[%c0_31, %c128_32] : memref<32x1024xf32, #tpu.memory_space<vmem>>, vector<32x784xf32>
    %33 = arith.addf %32, %31 : vector<32x784xf32>
    %c0_33 = arith.constant 0 : index
    %c128_34 = arith.constant 128 : index
    %34 = vector.load %arg6[%c0_33, %c128_34] : memref<32x1024xf32, #tpu.memory_space<vmem>>, vector<32x784xf32>
    tpu.vector_store %arg6[%c0_33, %c128_34], %33 {strides = array<i32>} : memref<32x1024xf32, #tpu.memory_space<vmem>>, vector<32x784xf32>,
    %c160 = arith.constant 160 : index
    %c0_35 = arith.constant 0 : index
    %35 = vector.load %arg5[%c160, %c0_35] : memref<288x784xf32, #tpu.memory_space<vmem>>, vector<32x784xf32>
    %c1_36 = arith.constant 1 : index
    %c0_37 = arith.constant 0 : index
    %36 = vector.load %arg3[%c1_36, %c0_37] : memref<2x784xf32, #tpu.memory_space<vmem>>, vector<1x784xf32>
    %37 = vector.broadcast %36 : vector<1x784xf32> to vector<32x784xf32>
    %38 = arith.mulf %35, %37 : vector<32x784xf32>
    %c0_38 = arith.constant 0 : index
    %c127 = arith.constant 127 : index
    %39 = vector.load %arg6[%c0_38, %c127] : memref<32x1024xf32, #tpu.memory_space<vmem>>, vector<32x784xf32>
    %40 = arith.addf %39, %38 : vector<32x784xf32>
    %c0_39 = arith.constant 0 : index
    %c127_40 = arith.constant 127 : index
    %41 = vector.load %arg6[%c0_39, %c127_40] : memref<32x1024xf32, #tpu.memory_space<vmem>>, vector<32x784xf32>
    tpu.vector_store %arg6[%c0_39, %c127_40], %40 {strides = array<i32>} : memref<32x1024xf32, #tpu.memory_space<vmem>>, vector<32x784xf32>,
    %c192 = arith.constant 192 : index
    %c0_41 = arith.constant 0 : index
    %42 = vector.load %arg5[%c192, %c0_41] : memref<288x784xf32, #tpu.memory_space<vmem>>, vector<32x784xf32>
    %c0_42 = arith.constant 0 : index
    %c0_43 = arith.constant 0 : index
    %43 = vector.load %arg3[%c0_42, %c0_43] : memref<2x784xf32, #tpu.memory_space<vmem>>, vector<1x784xf32>
    %44 = vector.broadcast %43 : vector<1x784xf32> to vector<32x784xf32>
    %45 = arith.mulf %42, %44 : vector<32x784xf32>
    %c0_44 = arith.constant 0 : index
    %c101 = arith.constant 101 : index
    %46 = vector.load %arg6[%c0_44, %c101] : memref<32x1024xf32, #tpu.memory_space<vmem>>, vector<32x784xf32>
    %47 = arith.addf %46, %45 : vector<32x784xf32>
    %c0_45 = arith.constant 0 : index
    %c101_46 = arith.constant 101 : index
    %48 = vector.load %arg6[%c0_45, %c101_46] : memref<32x1024xf32, #tpu.memory_space<vmem>>, vector<32x784xf32>
    tpu.vector_store %arg6[%c0_45, %c101_46], %47 {strides = array<i32>} : memref<32x1024xf32, #tpu.memory_space<vmem>>, vector<32x784xf32>,
    %c224 = arith.constant 224 : index
    %c0_47 = arith.constant 0 : index
    %49 = vector.load %arg5[%c224, %c0_47] : memref<288x784xf32, #tpu.memory_space<vmem>>, vector<32x784xf32>
    %c0_48 = arith.constant 0 : index
    %c100 = arith.constant 100 : index
    %50 = vector.load %arg6[%c0_48, %c100] : memref<32x1024xf32, #tpu.memory_space<vmem>>, vector<32x784xf32>
    %51 = arith.addf %50, %49 : vector<32x784xf32>
    %c0_49 = arith.constant 0 : index
    %c100_50 = arith.constant 100 : index
    %52 = vector.load %arg6[%c0_49, %c100_50] : memref<32x1024xf32, #tpu.memory_space<vmem>>, vector<32x784xf32>
    tpu.vector_store %arg6[%c0_49, %c100_50], %51 {strides = array<i32>} : memref<32x1024xf32, #tpu.memory_space<vmem>>, vector<32x784xf32>,
    %c256 = arith.constant 256 : index
    %c0_51 = arith.constant 0 : index
    %53 = vector.load %arg5[%c256, %c0_51] : memref<288x784xf32, #tpu.memory_space<vmem>>, vector<32x784xf32>
    %c1_52 = arith.constant 1 : index
    %c0_53 = arith.constant 0 : index
    %54 = vector.load %arg3[%c1_52, %c0_53] : memref<2x784xf32, #tpu.memory_space<vmem>>, vector<1x784xf32>
    %55 = vector.broadcast %54 : vector<1x784xf32> to vector<32x784xf32>
    %56 = arith.mulf %53, %55 : vector<32x784xf32>
    %c0_54 = arith.constant 0 : index
    %c99 = arith.constant 99 : index
    %57 = vector.load %arg6[%c0_54, %c99] : memref<32x1024xf32, #tpu.memory_space<vmem>>, vector<32x784xf32>
    %58 = arith.addf %57, %56 : vector<32x784xf32>
    %c0_55 = arith.constant 0 : index
    %c99_56 = arith.constant 99 : index
    %59 = vector.load %arg6[%c0_55, %c99_56] : memref<32x1024xf32, #tpu.memory_space<vmem>>, vector<32x784xf32>
    tpu.vector_store %arg6[%c0_55, %c99_56], %58 {strides = array<i32>} : memref<32x1024xf32, #tpu.memory_space<vmem>>, vector<32x784xf32>,
    %c0_57 = arith.constant 0 : index
    %c128_58 = arith.constant 128 : index
    %60 = vector.load %arg6[%c0_57, %c128_58] : memref<32x1024xf32, #tpu.memory_space<vmem>>, vector<32x784xf32>
    %c0_59 = arith.constant 0 : index
    %c0_60 = arith.constant 0 : index
    %61 = vector.load %arg4[%c0_59, %c0_60] : memref<32x784xf32, #tpu.memory_space<vmem>>, vector<32x784xf32>
    tpu.vector_store %arg4[%c0_59, %c0_60], %60 {strides = array<i32>} : memref<32x784xf32, #tpu.memory_space<vmem>>, vector<32x784xf32>,
    return
  }
  func.func @transform_0(%arg0: i32) -> (i32, i32) {
    %c0_i32 = arith.constant 0 : i32
    %c0_i32_0 = arith.constant 0 : i32
    %c0_i32_1 = arith.constant 0 : i32
    return %c0_i32, %c0_i32_0 : i32, i32
  }
  func.func @transform_1(%arg0: i32) -> (i32, i32) {
    %c0_i32 = arith.constant 0 : i32
    %c0_i32_0 = arith.constant 0 : i32
    return %arg0, %c0_i32 : i32, i32
  }
  func.func @transform_2(%arg0: i32) -> (i32, i32) {
    %c0_i32 = arith.constant 0 : i32
    %c0_i32_0 = arith.constant 0 : i32
    %c0_i32_1 = arith.constant 0 : i32
    return %c0_i32, %c0_i32_0 : i32, i32
  }
  func.func @transform_3(%arg0: i32) -> (i32, i32) {
    %c0_i32 = arith.constant 0 : i32
    %c0_i32_0 = arith.constant 0 : i32
    return %arg0, %c0_i32 : i32, i32
  }
}

</mosaic_0001>

<llo_original>
// kernel: forward.1
$region0: #{forward.1}
  #allocation0 [shape = 'u32[]', space=smem, size = 0x4, offset = 0x4, fixed_abs, tag = 'smem constant byte address 0x4 - core index']
  #allocation1 [shape = 'u32[72,128]{1,0:T(1,128)}', space=vmem, size = 0x9000, scoped, tag = 'internal scratch']
  #allocation2 [shape = 'f32[288,784]{1,0:T(8,128)}', space=vmem, size = 0xfc000, scoped, tag = 'scratch operand']
  #allocation3 [shape = 'f32[32,1024]{1,0:T(8,128)}', space=vmem, size = 0x20000, scoped, tag = 'scratch operand']
  %s0 = inlined_call_operand.vmem [shape: f32[128,784], index: 0, kind: input, shape index: {}]
  %s1 = inlined_call_operand.hbm [shape: f32[288,128], index: 1, kind: input, shape index: {}]
  %s2 = inlined_call_operand.vmem [shape: f32[2,784], index: 2, kind: input, shape index: {}]
  %s3 = inlined_call_operand.vmem [shape: f32[32,784], index: 3, kind: output, shape index: {}]
  %s4 = sld [smem:[#allocation0]]
  $region26: #{forward.1} parent=0
    _
  %s6 = ssub.s32 1, %s4
  %s7 = scalar_select 0, %s6, %s4
  $region1: #{forward.1} parent=0
    #allocation4 [shape = 'u8[147456]{0}', space=vmem, size = 0x24000, scoped, tag = 'input window, operand 1, single buffered']
    #allocation5 [shape = 's32[1]{0}', space=sflag, size = 0x4, scoped, tag = 'scoped memory for forward.1']
    %8 = vsyncpa [#allocation5], 0
    // Predicated region
    $region2: #{forward.1} parent=1 // pred_check
      _
    $region3: #{forward.1} parent=1 // pred_check_branch
      %10 = sbr.rel (0) target = $region5
    $region4: #{forward.1} parent=1 // pred_region
      _
    $region5: #{forward.1} parent=1 // pred_fallthru
      _
    // Predicated region
    $region6: #{forward.1} parent=1 // pred_check
      _
    $region7: #{forward.1} parent=1 // pred_check_branch
      %12 = sbr.rel (0) target = $region9
    $region8: #{forward.1} parent=1 // pred_region
      %14 = vsyncadd [#allocation5], 0
      %s15 = sshll.u32 %s1, 4
      %s16 = int_to_ptr.hbm [resolvable:$true] %s15
      %s17 = sshll.u32 [#allocation4], 4
      %s18 = int_to_ptr.vmem [resolvable:$true] %s17
      %23 = dma.hbm_to_vmem [thread:$0]  %s16, 4608, %s18, [#allocation5], 128, 128, 8
    $region9: #{forward.1} parent=1 // pred_fallthru
      _
    // Predicated region
    $region10: #{forward.1} parent=1 // pred_check
      _
    $region11: #{forward.1} parent=1 // pred_check_branch
      %25 = sbr.rel (0) target = $region13
    $region12: #{forward.1} parent=1 // pred_region
      _
    $region13: #{forward.1} parent=1 // pred_fallthru
      _
    // Predicated region
    $region14: #{forward.1} parent=1 // pred_check
      _
    $region15: #{forward.1} parent=1 // pred_check_branch
      %27 = sbr.rel (0) target = $region17
    $region16: #{forward.1} parent=1 // pred_region
      %29 = dma.done [#allocation5], 4608
    $region17: #{forward.1} parent=1 // pred_fallthru
      _
    %v30 = vld [vmem:[#allocation4] sm:$0xff]
    %v31 = vld [vmem:[#allocation4 + $0x8] sm:$0xff]
    %v32 = vld [vmem:[#allocation4 + $0x10] sm:$0xff]
    %v33 = vld [vmem:[#allocation4 + $0x18] sm:$0xff]
    %v34 = vld [vmem:[#allocation4 + $0x20] sm:$0xff]
    %v35 = vld [vmem:[#allocation4 + $0x28] sm:$0xff]
    %v36 = vld [vmem:[#allocation4 + $0x30] sm:$0xff]
    %v37 = vld [vmem:[#allocation4 + $0x38] sm:$0xff]
    %v38 = vld [vmem:[#allocation4 + $0x40] sm:$0xff]
    %v39 = vld [vmem:[#allocation4 + $0x48] sm:$0xff]
    %v40 = vld [vmem:[#allocation4 + $0x50] sm:$0xff]
    %v41 = vld [vmem:[#allocation4 + $0x58] sm:$0xff]
    %v42 = vld [vmem:[#allocation4 + $0x60] sm:$0xff]
    %v43 = vld [vmem:[#allocation4 + $0x68] sm:$0xff]
    %v44 = vld [vmem:[#allocation4 + $0x70] sm:$0xff]
    %v45 = vld [vmem:[#allocation4 + $0x78] sm:$0xff]
    %v46 = vld [vmem:[#allocation4 + $0x80] sm:$0xff]
    %v47 = vld [vmem:[#allocation4 + $0x88] sm:$0xff]
    %v48 = vld [vmem:[#allocation4 + $0x90] sm:$0xff]
    %v49 = vld [vmem:[#allocation4 + $0x98] sm:$0xff]
    %v50 = vld [vmem:[#allocation4 + $0xa0] sm:$0xff]
    %v51 = vld [vmem:[#allocation4 + $0xa8] sm:$0xff]
    %v52 = vld [vmem:[#allocation4 + $0xb0] sm:$0xff]
    %v53 = vld [vmem:[#allocation4 + $0xb8] sm:$0xff]
    %v54 = vld [vmem:[#allocation4 + $0xc0] sm:$0xff]
    %v55 = vld [vmem:[#allocation4 + $0xc8] sm:$0xff]
    %v56 = vld [vmem:[#allocation4 + $0xd0] sm:$0xff]
    %v57 = vld [vmem:[#allocation4 + $0xd8] sm:$0xff]
    %v58 = vld [vmem:[#allocation4 + $0xe0] sm:$0xff]
    %v59 = vld [vmem:[#allocation4 + $0xe8] sm:$0xff]
    %v60 = vld [vmem:[#allocation4 + $0xf0] sm:$0xff]
    %v61 = vld [vmem:[#allocation4 + $0xf8] sm:$0xff]
    %v62 = vld [vmem:[#allocation4 + $0x100] sm:$0xff]
    %v63 = vld [vmem:[#allocation4 + $0x108] sm:$0xff]
    %v64 = vld [vmem:[#allocation4 + $0x110] sm:$0xff]
    %v65 = vld [vmem:[#allocation4 + $0x118] sm:$0xff]
    %v66 = vld [vmem:[%s0] sm:$0xff]
    %v67 = vld [vmem:[%s0 + $0x8] sm:$0xff]
    %v68 = vld [vmem:[%s0 + $0x10] sm:$0xff]
    %v69 = vld [vmem:[%s0 + $0x18] sm:$0xff]
    %v70 = vld [vmem:[%s0 + $0x20] sm:$0xff]
    %v71 = vld [vmem:[%s0 + $0x28] sm:$0xff]
    %v72 = vld [vmem:[%s0 + $0x30] sm:$0xff]
    %v73 = vld [vmem:[%s0 + $0x38] sm:$0xff]
    %v74 = vld [vmem:[%s0 + $0x40] sm:$0xff]
    %v75 = vld [vmem:[%s0 + $0x48] sm:$0xff]
    %v76 = vld [vmem:[%s0 + $0x50] sm:$0xff]
    %v77 = vld [vmem:[%s0 + $0x58] sm:$0xff]
    %v78 = vld [vmem:[%s0 + $0x60] sm:$0xff]
    %v79 = vld [vmem:[%s0 + $0x68] sm:$0xff]
    %v80 = vld [vmem:[%s0 + $0x70] sm:$0xff]
    %v81 = vld [vmem:[%s0 + $0x78] sm:$0xff]
    %v82 = vld [vmem:[%s0 + $0x80] sm:$0xff]
    %v83 = vld [vmem:[%s0 + $0x88] sm:$0xff]
    %v84 = vld [vmem:[%s0 + $0x90] sm:$0xff]
    %v85 = vld [vmem:[%s0 + $0x98] sm:$0xff]
    %v86 = vld [vmem:[%s0 + $0xa0] sm:$0xff]
    %v87 = vld [vmem:[%s0 + $0xa8] sm:$0xff]
    %v88 = vld [vmem:[%s0 + $0xb0] sm:$0xff]
    %v89 = vld [vmem:[%s0 + $0xb8] sm:$0xff]
    %v90 = vld [vmem:[%s0 + $0xc0] sm:$0xff]
    %v91 = vld [vmem:[%s0 + $0xc8] sm:$0xff]
    %v92 = vld [vmem:[%s0 + $0xd0] sm:$0xff]
    %v93 = vld [vmem:[%s0 + $0xd8] sm:$0xff]
    %v94 = vld [vmem:[%s0 + $0xe0] sm:$0xff]
    %v95 = vld [vmem:[%s0 + $0xe8] sm:$0xff]
    %v96 = vld [vmem:[%s0 + $0xf0] sm:$0xff]
    %v97 = vld [vmem:[%s0 + $0xf8] sm:$0xff]
    %v98 = vld [vmem:[%s0 + $0x100] sm:$0xff]
    %v99 = vld [vmem:[%s0 + $0x108] sm:$0xff]
    %v100 = vld [vmem:[%s0 + $0x110] sm:$0xff]
    %v101 = vld [vmem:[%s0 + $0x118] sm:$0xff]
    %v102 = vld [vmem:[%s0 + $0x120] sm:$0xff]
    %v103 = vld [vmem:[%s0 + $0x128] sm:$0xff]
    %v104 = vld [vmem:[%s0 + $0x130] sm:$0xff]
    %v105 = vld [vmem:[%s0 + $0x138] sm:$0xff]
    %v106 = vld [vmem:[%s0 + $0x140] sm:$0xff]
    %v107 = vld [vmem:[%s0 + $0x148] sm:$0xff]
    %v108 = vld [vmem:[%s0 + $0x150] sm:$0xff]
    %v109 = vld [vmem:[%s0 + $0x158] sm:$0xff]
    %v110 = vld [vmem:[%s0 + $0x160] sm:$0xff]
    %v111 = vld [vmem:[%s0 + $0x168] sm:$0xff]
    %v112 = vld [vmem:[%s0 + $0x170] sm:$0xff]
    %v113 = vld [vmem:[%s0 + $0x178] sm:$0xff]
    %v114 = vld [vmem:[%s0 + $0x180] sm:$0xff]
    %v115 = vld [vmem:[%s0 + $0x188] sm:$0xff]
    %v116 = vld [vmem:[%s0 + $0x190] sm:$0xff]
    %v117 = vld [vmem:[%s0 + $0x198] sm:$0xff]
    %v118 = vld [vmem:[%s0 + $0x1a0] sm:$0xff]
    %v119 = vld [vmem:[%s0 + $0x1a8] sm:$0xff]
    %v120 = vld [vmem:[%s0 + $0x1b0] sm:$0xff]
    %v121 = vld [vmem:[%s0 + $0x1b8] sm:$0xff]
    %v122 = vld [vmem:[%s0 + $0x1c0] sm:$0xff]
    %v123 = vld [vmem:[%s0 + $0x1c8] sm:$0xff]
    %v124 = vld [vmem:[%s0 + $0x1d0] sm:$0xff]
    %v125 = vld [vmem:[%s0 + $0x1d8] sm:$0xff]
    %v126 = vld [vmem:[%s0 + $0x1e0] sm:$0xff]
    %v127 = vld [vmem:[%s0 + $0x1e8] sm:$0xff]
    %v128 = vld [vmem:[%s0 + $0x1f0] sm:$0xff]
    %v129 = vld [vmem:[%s0 + $0x1f8] sm:$0xff]
    %v130 = vld [vmem:[%s0 + $0x200] sm:$0xff]
    %v131 = vld [vmem:[%s0 + $0x208] sm:$0xff]
    %v132 = vld [vmem:[%s0 + $0x210] sm:$0xff]
    %v133 = vld [vmem:[%s0 + $0x218] sm:$0xff]
    %v134 = vld [vmem:[%s0 + $0x220] sm:$0xff]
    %v135 = vld [vmem:[%s0 + $0x228] sm:$0xff]
    %v136 = vld [vmem:[%s0 + $0x230] sm:$0xff]
    %v137 = vld [vmem:[%s0 + $0x238] sm:$0xff]
    %v138 = vld [vmem:[%s0 + $0x240] sm:$0xff]
    %v139 = vld [vmem:[%s0 + $0x248] sm:$0xff]
    %v140 = vld [vmem:[%s0 + $0x250] sm:$0xff]
    %v141 = vld [vmem:[%s0 + $0x258] sm:$0xff]
    %v142 = vld [vmem:[%s0 + $0x260] sm:$0xff]
    %v143 = vld [vmem:[%s0 + $0x268] sm:$0xff]
    %v144 = vld [vmem:[%s0 + $0x270] sm:$0xff]
    %v145 = vld [vmem:[%s0 + $0x278] sm:$0xff]
    %v146 = vld [vmem:[%s0 + $0x280] sm:$0xff]
    %v147 = vld [vmem:[%s0 + $0x288] sm:$0xff]
    %v148 = vld [vmem:[%s0 + $0x290] sm:$0xff]
    %v149 = vld [vmem:[%s0 + $0x298] sm:$0xff]
    %v150 = vld [vmem:[%s0 + $0x2a0] sm:$0xff]
    %v151 = vld [vmem:[%s0 + $0x2a8] sm:$0xff]
    %v152 = vld [vmem:[%s0 + $0x2b0] sm:$0xff]
    %v153 = vld [vmem:[%s0 + $0x2b8] sm:$0xff]
    %v154 = vld [vmem:[%s0 + $0x2c0] sm:$0xff]
    %v155 = vld [vmem:[%s0 + $0x2c8] sm:$0xff]
    %v156 = vld [vmem:[%s0 + $0x2d0] sm:$0xff]
    %v157 = vld [vmem:[%s0 + $0x2d8] sm:$0xff]
    %v158 = vld [vmem:[%s0 + $0x2e0] sm:$0xff]
    %v159 = vld [vmem:[%s0 + $0x2e8] sm:$0xff]
    %v160 = vld [vmem:[%s0 + $0x2f0] sm:$0xff]
    %v161 = vld [vmem:[%s0 + $0x2f8] sm:$0xff]
    %v162 = vld [vmem:[%s0 + $0x300] sm:$0xff]
    %v163 = vld [vmem:[%s0 + $0x308] sm:$0xff]
    %v164 = vld [vmem:[%s0 + $0x310] sm:$0xff]
    %v165 = vld [vmem:[%s0 + $0x318] sm:$0xff]
    %v166 = vld [vmem:[%s0 + $0x320] sm:$0xff]
    %v167 = vld [vmem:[%s0 + $0x328] sm:$0xff]
    %v168 = vld [vmem:[%s0 + $0x330] sm:$0xff]
    %v169 = vld [vmem:[%s0 + $0x338] sm:$0xff]
    %v170 = vld [vmem:[%s0 + $0x340] sm:$0xff]
    %v171 = vld [vmem:[%s0 + $0x348] sm:$0xff]
    %v172 = vld [vmem:[%s0 + $0x350] sm:$0xff]
    %v173 = vld [vmem:[%s0 + $0x358] sm:$0xff]
    %v174 = vld [vmem:[%s0 + $0x360] sm:$0xff]
    %v175 = vld [vmem:[%s0 + $0x368] sm:$0xff]
    %v176 = vld [vmem:[%s0 + $0x370] sm:$0xff]
    %v177 = vld [vmem:[%s0 + $0x378] sm:$0xff]
    %178 = vmatpush.msra.mxu0 %v171
    %179 = vmatpush.msra.mxu0 %v164
    %180 = vmatpush.msra.mxu0 %v157
    %181 = vmatpush.msra.mxu0 %v150
    %182 = vmatpush.msra.mxu0 %v143
    %183 = vmatpush.msra.mxu0 %v136
    %184 = vmatpush.msra.mxu0 %v129
    %185 = vmatpush.msra.mxu0 %v122
    %186 = vmatpush.msra.mxu0 %v115
    %187 = vmatpush.msra.mxu0 %v108
    %188 = vmatpush.msra.mxu0 %v101
    %189 = vmatpush.msra.mxu0 %v94
    %190 = vmatpush.msra.mxu0 %v87
    %191 = vmatpush.msra.mxu0 %v80
    %192 = vmatpush.msra.mxu0 %v73
    %193 = vmatpush.msra.mxu0 %v66
    %194 = vmatmul.f32.gmra.mxu0 %v30
    %v195 = vpop.f32.mrf.mxu0
    %v196 = vadd.f32 0.0, %v195
    %197 = vmatmul.f32.gmra.mxu0 %v31
    %v198 = vpop.f32.mrf.mxu0
    %v199 = vadd.f32 0.0, %v198
    %200 = vmatmul.f32.gmra.mxu0 %v32
    %v201 = vpop.f32.mrf.mxu0
    %v202 = vadd.f32 0.0, %v201
    %203 = vmatmul.f32.gmra.mxu0 %v33
    %v204 = vpop.f32.mrf.mxu0
    %v205 = vadd.f32 0.0, %v204
    %206 = vmatmul.f32.gmra.mxu0 %v34
    %v207 = vpop.f32.mrf.mxu0
    %v208 = vadd.f32 0.0, %v207
    %209 = vmatmul.f32.gmra.mxu0 %v35
    %v210 = vpop.f32.mrf.mxu0
    %v211 = vadd.f32 0.0, %v210
    %212 = vmatmul.f32.gmra.mxu0 %v36
    %v213 = vpop.f32.mrf.mxu0
    %v214 = vadd.f32 0.0, %v213
    %215 = vmatmul.f32.gmra.mxu0 %v37
    %v216 = vpop.f32.mrf.mxu0
    %v217 = vadd.f32 0.0, %v216
    %218 = vmatmul.f32.gmra.mxu0 %v38
    %v219 = vpop.f32.mrf.mxu0
    %v220 = vadd.f32 0.0, %v219
    %221 = vmatmul.f32.gmra.mxu0 %v39
    %v222 = vpop.f32.mrf.mxu0
    %v223 = vadd.f32 0.0, %v222
    %224 = vmatmul.f32.gmra.mxu0 %v40
    %v225 = vpop.f32.mrf.mxu0
    %v226 = vadd.f32 0.0, %v225
    %227 = vmatmul.f32.gmra.mxu0 %v41
    %v228 = vpop.f32.mrf.mxu0
    %v229 = vadd.f32 0.0, %v228
    %230 = vmatmul.f32.gmra.mxu0 %v42
    %v231 = vpop.f32.mrf.mxu0
    %v232 = vadd.f32 0.0, %v231
    %233 = vmatmul.f32.gmra.mxu0 %v43
    %v234 = vpop.f32.mrf.mxu0
    %v235 = vadd.f32 0.0, %v234
    %236 = vmatmul.f32.gmra.mxu0 %v44
    %v237 = vpop.f32.mrf.mxu0
    %v238 = vadd.f32 0.0, %v237
    %239 = vmatmul.f32.gmra.mxu0 %v45
    %v240 = vpop.f32.mrf.mxu0
    %v241 = vadd.f32 0.0, %v240
    %242 = vmatmul.f32.gmra.mxu0 %v46
    %v243 = vpop.f32.mrf.mxu0
    %v244 = vadd.f32 0.0, %v243
    %245 = vmatmul.f32.gmra.mxu0 %v47
    %v246 = vpop.f32.mrf.mxu0
    %v247 = vadd.f32 0.0, %v246
    %248 = vmatmul.f32.gmra.mxu0 %v48
    %v249 = vpop.f32.mrf.mxu0
    %v250 = vadd.f32 0.0, %v249
    %251 = vmatmul.f32.gmra.mxu0 %v49
    %v252 = vpop.f32.mrf.mxu0
    %v253 = vadd.f32 0.0, %v252
    %254 = vmatmul.f32.gmra.mxu0 %v50
    %v255 = vpop.f32.mrf.mxu0
    %v256 = vadd.f32 0.0, %v255
    %257 = vmatmul.f32.gmra.mxu0 %v51
    %v258 = vpop.f32.mrf.mxu0
    %v259 = vadd.f32 0.0, %v258
    %260 = vmatmul.f32.gmra.mxu0 %v52
    %v261 = vpop.f32.mrf.mxu0
    %v262 = vadd.f32 0.0, %v261
    %263 = vmatmul.f32.gmra.mxu0 %v53
    %v264 = vpop.f32.mrf.mxu0
    %v265 = vadd.f32 0.0, %v264
    %266 = vmatmul.f32.gmra.mxu0 %v54
    %v267 = vpop.f32.mrf.mxu0
    %v268 = vadd.f32 0.0, %v267
    %269 = vmatmul.f32.gmra.mxu0 %v55
    %v270 = vpop.f32.mrf.mxu0
    %v271 = vadd.f32 0.0, %v270
    %272 = vmatmul.f32.gmra.mxu0 %v56
    %v273 = vpop.f32.mrf.mxu0
    %v274 = vadd.f32 0.0, %v273
    %275 = vmatmul.f32.gmra.mxu0 %v57
    %v276 = vpop.f32.mrf.mxu0
    %v277 = vadd.f32 0.0, %v276
    %278 = vmatmul.f32.gmra.mxu0 %v58
    %v279 = vpop.f32.mrf.mxu0
    %v280 = vadd.f32 0.0, %v279
    %281 = vmatmul.f32.gmra.mxu0 %v59
    %v282 = vpop.f32.mrf.mxu0
    %v283 = vadd.f32 0.0, %v282
    %284 = vmatmul.f32.gmra.mxu0 %v60
    %v285 = vpop.f32.mrf.mxu0
    %v286 = vadd.f32 0.0, %v285
    %287 = vmatmul.f32.gmra.mxu0 %v61
    %v288 = vpop.f32.mrf.mxu0
    %v289 = vadd.f32 0.0, %v288
    %290 = vmatmul.f32.gmra.mxu0 %v62
    %v291 = vpop.f32.mrf.mxu0
    %v292 = vadd.f32 0.0, %v291
    %293 = vmatmul.f32.gmra.mxu0 %v63
    %v294 = vpop.f32.mrf.mxu0
    %v295 = vadd.f32 0.0, %v294
    %296 = vmatmul.f32.gmra.mxu0 %v64
    %v297 = vpop.f32.mrf.mxu0
    %v298 = vadd.f32 0.0, %v297
    %299 = vmatmul.f32.gmra.mxu0 %v65
    %v300 = vpop.f32.mrf.mxu0
    %v301 = vadd.f32 0.0, %v300
    %302 = vdwg.mxu0
    %303 = vmatpush.msra.mxu0 %v172
    %304 = vmatpush.msra.mxu0 %v165
    %305 = vmatpush.msra.mxu0 %v158
    %306 = vmatpush.msra.mxu0 %v151
    %307 = vmatpush.msra.mxu0 %v144
    %308 = vmatpush.msra.mxu0 %v137
    %309 = vmatpush.msra.mxu0 %v130
    %310 = vmatpush.msra.mxu0 %v123
    %311 = vmatpush.msra.mxu0 %v116
    %312 = vmatpush.msra.mxu0 %v109
    %313 = vmatpush.msra.mxu0 %v102
    %314 = vmatpush.msra.mxu0 %v95
    %315 = vmatpush.msra.mxu0 %v88
    %316 = vmatpush.msra.mxu0 %v81
    %317 = vmatpush.msra.mxu0 %v74
    %318 = vmatpush.msra.mxu0 %v67
    %319 = vmatmul.f32.gmra.mxu0 %v30
    %v320 = vpop.f32.mrf.mxu0
    %v321 = vadd.f32 0.0, %v320
    %322 = vmatmul.f32.gmra.mxu0 %v31
    %v323 = vpop.f32.mrf.mxu0
    %v324 = vadd.f32 0.0, %v323
    %325 = vmatmul.f32.gmra.mxu0 %v32
    %v326 = vpop.f32.mrf.mxu0
    %v327 = vadd.f32 0.0, %v326
    %328 = vmatmul.f32.gmra.mxu0 %v33
    %v329 = vpop.f32.mrf.mxu0
    %v330 = vadd.f32 0.0, %v329
    %331 = vmatmul.f32.gmra.mxu0 %v34
    %v332 = vpop.f32.mrf.mxu0
    %v333 = vadd.f32 0.0, %v332
    %334 = vmatmul.f32.gmra.mxu0 %v35
    %v335 = vpop.f32.mrf.mxu0
    %v336 = vadd.f32 0.0, %v335
    %337 = vmatmul.f32.gmra.mxu0 %v36
    %v338 = vpop.f32.mrf.mxu0
    %v339 = vadd.f32 0.0, %v338
    %340 = vmatmul.f32.gmra.mxu0 %v37
    %v341 = vpop.f32.mrf.mxu0
    %v342 = vadd.f32 0.0, %v341
    %343 = vmatmul.f32.gmra.mxu0 %v38
    %v344 = vpop.f32.mrf.mxu0
    %v345 = vadd.f32 0.0, %v344
    %346 = vmatmul.f32.gmra.mxu0 %v39
    %v347 = vpop.f32.mrf.mxu0
    %v348 = vadd.f32 0.0, %v347
    %349 = vmatmul.f32.gmra.mxu0 %v40
    %v350 = vpop.f32.mrf.mxu0
    %v351 = vadd.f32 0.0, %v350
    %352 = vmatmul.f32.gmra.mxu0 %v41
    %v353 = vpop.f32.mrf.mxu0
    %v354 = vadd.f32 0.0, %v353
    %355 = vmatmul.f32.gmra.mxu0 %v42
    %v356 = vpop.f32.mrf.mxu0
    %v357 = vadd.f32 0.0, %v356
    %358 = vmatmul.f32.gmra.mxu0 %v43
    %v359 = vpop.f32.mrf.mxu0
    %v360 = vadd.f32 0.0, %v359
    %361 = vmatmul.f32.gmra.mxu0 %v44
    %v362 = vpop.f32.mrf.mxu0
    %v363 = vadd.f32 0.0, %v362
    %364 = vmatmul.f32.gmra.mxu0 %v45
    %v365 = vpop.f32.mrf.mxu0
    %v366 = vadd.f32 0.0, %v365
    %367 = vmatmul.f32.gmra.mxu0 %v46
    %v368 = vpop.f32.mrf.mxu0
    %v369 = vadd.f32 0.0, %v368
    %370 = vmatmul.f32.gmra.mxu0 %v47
    %v371 = vpop.f32.mrf.mxu0
    %v372 = vadd.f32 0.0, %v371
    %373 = vmatmul.f32.gmra.mxu0 %v48
    %v374 = vpop.f32.mrf.mxu0
    %v375 = vadd.f32 0.0, %v374
    %376 = vmatmul.f32.gmra.mxu0 %v49
    %v377 = vpop.f32.mrf.mxu0
    %v378 = vadd.f32 0.0, %v377
    %379 = vmatmul.f32.gmra.mxu0 %v50
    %v380 = vpop.f32.mrf.mxu0
    %v381 = vadd.f32 0.0, %v380
    %382 = vmatmul.f32.gmra.mxu0 %v51
    %v383 = vpop.f32.mrf.mxu0
    %v384 = vadd.f32 0.0, %v383
    %385 = vmatmul.f32.gmra.mxu0 %v52
    %v386 = vpop.f32.mrf.mxu0
    %v387 = vadd.f32 0.0, %v386
    %388 = vmatmul.f32.gmra.mxu0 %v53
    %v389 = vpop.f32.mrf.mxu0
    %v390 = vadd.f32 0.0, %v389
    %391 = vmatmul.f32.gmra.mxu0 %v54
    %v392 = vpop.f32.mrf.mxu0
    %v393 = vadd.f32 0.0, %v392
    %394 = vmatmul.f32.gmra.mxu0 %v55
    %v395 = vpop.f32.mrf.mxu0
    %v396 = vadd.f32 0.0, %v395
    %397 = vmatmul.f32.gmra.mxu0 %v56
    %v398 = vpop.f32.mrf.mxu0
    %v399 = vadd.f32 0.0, %v398
    %400 = vmatmul.f32.gmra.mxu0 %v57
    %v401 = vpop.f32.mrf.mxu0
    %v402 = vadd.f32 0.0, %v401
    %403 = vmatmul.f32.gmra.mxu0 %v58
    %v404 = vpop.f32.mrf.mxu0
    %v405 = vadd.f32 0.0, %v404
    %406 = vmatmul.f32.gmra.mxu0 %v59
    %v407 = vpop.f32.mrf.mxu0
    %v408 = vadd.f32 0.0, %v407
    %409 = vmatmul.f32.gmra.mxu0 %v60
    %v410 = vpop.f32.mrf.mxu0
    %v411 = vadd.f32 0.0, %v410
    %412 = vmatmul.f32.gmra.mxu0 %v61
    %v413 = vpop.f32.mrf.mxu0
    %v414 = vadd.f32 0.0, %v413
    %415 = vmatmul.f32.gmra.mxu0 %v62
    %v416 = vpop.f32.mrf.mxu0
    %v417 = vadd.f32 0.0, %v416
    %418 = vmatmul.f32.gmra.mxu0 %v63
    %v419 = vpop.f32.mrf.mxu0
    %v420 = vadd.f32 0.0, %v419
    %421 = vmatmul.f32.gmra.mxu0 %v64
    %v422 = vpop.f32.mrf.mxu0
    %v423 = vadd.f32 0.0, %v422
    %424 = vmatmul.f32.gmra.mxu0 %v65
    %v425 = vpop.f32.mrf.mxu0
    %v426 = vadd.f32 0.0, %v425
    %427 = vdwg.mxu0
    %428 = vmatpush.msra.mxu0 %v173
    %429 = vmatpush.msra.mxu0 %v166
    %430 = vmatpush.msra.mxu0 %v159
    %431 = vmatpush.msra.mxu0 %v152
    %432 = vmatpush.msra.mxu0 %v145
    %433 = vmatpush.msra.mxu0 %v138
    %434 = vmatpush.msra.mxu0 %v131
    %435 = vmatpush.msra.mxu0 %v124
    %436 = vmatpush.msra.mxu0 %v117
    %437 = vmatpush.msra.mxu0 %v110
    %438 = vmatpush.msra.mxu0 %v103
    %439 = vmatpush.msra.mxu0 %v96
    %440 = vmatpush.msra.mxu0 %v89
    %441 = vmatpush.msra.mxu0 %v82
    %442 = vmatpush.msra.mxu0 %v75
    %443 = vmatpush.msra.mxu0 %v68
    %444 = vmatmul.f32.gmra.mxu0 %v30
    %v445 = vpop.f32.mrf.mxu0
    %v446 = vadd.f32 0.0, %v445
    %447 = vmatmul.f32.gmra.mxu0 %v31
    %v448 = vpop.f32.mrf.mxu0
    %v449 = vadd.f32 0.0, %v448
    %450 = vmatmul.f32.gmra.mxu0 %v32
    %v451 = vpop.f32.mrf.mxu0
    %v452 = vadd.f32 0.0, %v451
    %453 = vmatmul.f32.gmra.mxu0 %v33
    %v454 = vpop.f32.mrf.mxu0
    %v455 = vadd.f32 0.0, %v454
    %456 = vmatmul.f32.gmra.mxu0 %v34
    %v457 = vpop.f32.mrf.mxu0
    %v458 = vadd.f32 0.0, %v457
    %459 = vmatmul.f32.gmra.mxu0 %v35
    %v460 = vpop.f32.mrf.mxu0
    %v461 = vadd.f32 0.0, %v460
    %462 = vmatmul.f32.gmra.mxu0 %v36
    %v463 = vpop.f32.mrf.mxu0
    %v464 = vadd.f32 0.0, %v463
    %465 = vmatmul.f32.gmra.mxu0 %v37
    %v466 = vpop.f32.mrf.mxu0
    %v467 = vadd.f32 0.0, %v466
    %468 = vmatmul.f32.gmra.mxu0 %v38
    %v469 = vpop.f32.mrf.mxu0
    %v470 = vadd.f32 0.0, %v469
    %471 = vmatmul.f32.gmra.mxu0 %v39
    %v472 = vpop.f32.mrf.mxu0
    %v473 = vadd.f32 0.0, %v472
    %474 = vmatmul.f32.gmra.mxu0 %v40
    %v475 = vpop.f32.mrf.mxu0
    %v476 = vadd.f32 0.0, %v475
    %477 = vmatmul.f32.gmra.mxu0 %v41
    %v478 = vpop.f32.mrf.mxu0
    %v479 = vadd.f32 0.0, %v478
    %480 = vmatmul.f32.gmra.mxu0 %v42
    %v481 = vpop.f32.mrf.mxu0
    %v482 = vadd.f32 0.0, %v481
    %483 = vmatmul.f32.gmra.mxu0 %v43
    %v484 = vpop.f32.mrf.mxu0
    %v485 = vadd.f32 0.0, %v484
    %486 = vmatmul.f32.gmra.mxu0 %v44
    %v487 = vpop.f32.mrf.mxu0
    %v488 = vadd.f32 0.0, %v487
    %489 = vmatmul.f32.gmra.mxu0 %v45
    %v490 = vpop.f32.mrf.mxu0
    %v491 = vadd.f32 0.0, %v490
    %492 = vmatmul.f32.gmra.mxu0 %v46
    %v493 = vpop.f32.mrf.mxu0
    %v494 = vadd.f32 0.0, %v493
    %495 = vmatmul.f32.gmra.mxu0 %v47
    %v496 = vpop.f32.mrf.mxu0
    %v497 = vadd.f32 0.0, %v496
    %498 = vmatmul.f32.gmra.mxu0 %v48
    %v499 = vpop.f32.mrf.mxu0
    %v500 = vadd.f32 0.0, %v499
    %501 = vmatmul.f32.gmra.mxu0 %v49
    %v502 = vpop.f32.mrf.mxu0
    %v503 = vadd.f32 0.0, %v502
    %504 = vmatmul.f32.gmra.mxu0 %v50
    %v505 = vpop.f32.mrf.mxu0
    %v506 = vadd.f32 0.0, %v505
    %507 = vmatmul.f32.gmra.mxu0 %v51
    %v508 = vpop.f32.mrf.mxu0
    %v509 = vadd.f32 0.0, %v508
    %510 = vmatmul.f32.gmra.mxu0 %v52
    %v511 = vpop.f32.mrf.mxu0
    %v512 = vadd.f32 0.0, %v511
    %513 = vmatmul.f32.gmra.mxu0 %v53
    %v514 = vpop.f32.mrf.mxu0
    %v515 = vadd.f32 0.0, %v514
    %516 = vmatmul.f32.gmra.mxu0 %v54
    %v517 = vpop.f32.mrf.mxu0
    %v518 = vadd.f32 0.0, %v517
    %519 = vmatmul.f32.gmra.mxu0 %v55
    %v520 = vpop.f32.mrf.mxu0
    %v521 = vadd.f32 0.0, %v520
    %522 = vmatmul.f32.gmra.mxu0 %v56
    %v523 = vpop.f32.mrf.mxu0
    %v524 = vadd.f32 0.0, %v523
    %525 = vmatmul.f32.gmra.mxu0 %v57
    %v526 = vpop.f32.mrf.mxu0
    %v527 = vadd.f32 0.0, %v526
    %528 = vmatmul.f32.gmra.mxu0 %v58
    %v529 = vpop.f32.mrf.mxu0
    %v530 = vadd.f32 0.0, %v529
    %531 = vmatmul.f32.gmra.mxu0 %v59
    %v532 = vpop.f32.mrf.mxu0
    %v533 = vadd.f32 0.0, %v532
    %534 = vmatmul.f32.gmra.mxu0 %v60
    %v535 = vpop.f32.mrf.mxu0
    %v536 = vadd.f32 0.0, %v535
    %537 = vmatmul.f32.gmra.mxu0 %v61
    %v538 = vpop.f32.mrf.mxu0
    %v539 = vadd.f32 0.0, %v538
    %540 = vmatmul.f32.gmra.mxu0 %v62
    %v541 = vpop.f32.mrf.mxu0
    %v542 = vadd.f32 0.0, %v541
    %543 = vmatmul.f32.gmra.mxu0 %v63
    %v544 = vpop.f32.mrf.mxu0
    %v545 = vadd.f32 0.0, %v544
    %546 = vmatmul.f32.gmra.mxu0 %v64
    %v547 = vpop.f32.mrf.mxu0
    %v548 = vadd.f32 0.0, %v547
    %549 = vmatmul.f32.gmra.mxu0 %v65
    %v550 = vpop.f32.mrf.mxu0
    %v551 = vadd.f32 0.0, %v550
    %552 = vdwg.mxu0
    %553 = vmatpush.msra.mxu0 %v174
    %554 = vmatpush.msra.mxu0 %v167
    %555 = vmatpush.msra.mxu0 %v160
    %556 = vmatpush.msra.mxu0 %v153
    %557 = vmatpush.msra.mxu0 %v146
    %558 = vmatpush.msra.mxu0 %v139
    %559 = vmatpush.msra.mxu0 %v132
    %560 = vmatpush.msra.mxu0 %v125
    %561 = vmatpush.msra.mxu0 %v118
    %562 = vmatpush.msra.mxu0 %v111
    %563 = vmatpush.msra.mxu0 %v104
    %564 = vmatpush.msra.mxu0 %v97
    %565 = vmatpush.msra.mxu0 %v90
    %566 = vmatpush.msra.mxu0 %v83
    %567 = vmatpush.msra.mxu0 %v76
    %568 = vmatpush.msra.mxu0 %v69
    %569 = vmatmul.f32.gmra.mxu0 %v30
    %v570 = vpop.f32.mrf.mxu0
    %v571 = vadd.f32 0.0, %v570
    %572 = vmatmul.f32.gmra.mxu0 %v31
    %v573 = vpop.f32.mrf.mxu0
    %v574 = vadd.f32 0.0, %v573
    %575 = vmatmul.f32.gmra.mxu0 %v32
    %v576 = vpop.f32.mrf.mxu0
    %v577 = vadd.f32 0.0, %v576
    %578 = vmatmul.f32.gmra.mxu0 %v33
    %v579 = vpop.f32.mrf.mxu0
    %v580 = vadd.f32 0.0, %v579
    %581 = vmatmul.f32.gmra.mxu0 %v34
    %v582 = vpop.f32.mrf.mxu0
    %v583 = vadd.f32 0.0, %v582
    %584 = vmatmul.f32.gmra.mxu0 %v35
    %v585 = vpop.f32.mrf.mxu0
    %v586 = vadd.f32 0.0, %v585
    %587 = vmatmul.f32.gmra.mxu0 %v36
    %v588 = vpop.f32.mrf.mxu0
    %v589 = vadd.f32 0.0, %v588
    %590 = vmatmul.f32.gmra.mxu0 %v37
    %v591 = vpop.f32.mrf.mxu0
    %v592 = vadd.f32 0.0, %v591
    %593 = vmatmul.f32.gmra.mxu0 %v38
    %v594 = vpop.f32.mrf.mxu0
    %v595 = vadd.f32 0.0, %v594
    %596 = vmatmul.f32.gmra.mxu0 %v39
    %v597 = vpop.f32.mrf.mxu0
    %v598 = vadd.f32 0.0, %v597
    %599 = vmatmul.f32.gmra.mxu0 %v40
    %v600 = vpop.f32.mrf.mxu0
    %v601 = vadd.f32 0.0, %v600
    %602 = vmatmul.f32.gmra.mxu0 %v41
    %v603 = vpop.f32.mrf.mxu0
    %v604 = vadd.f32 0.0, %v603
    %605 = vmatmul.f32.gmra.mxu0 %v42
    %v606 = vpop.f32.mrf.mxu0
    %v607 = vadd.f32 0.0, %v606
    %608 = vmatmul.f32.gmra.mxu0 %v43
    %v609 = vpop.f32.mrf.mxu0
    %v610 = vadd.f32 0.0, %v609
    %611 = vmatmul.f32.gmra.mxu0 %v44
    %v612 = vpop.f32.mrf.mxu0
    %v613 = vadd.f32 0.0, %v612
    %614 = vmatmul.f32.gmra.mxu0 %v45
    %v615 = vpop.f32.mrf.mxu0
    %v616 = vadd.f32 0.0, %v615
    %617 = vmatmul.f32.gmra.mxu0 %v46
    %v618 = vpop.f32.mrf.mxu0
    %v619 = vadd.f32 0.0, %v618
    %620 = vmatmul.f32.gmra.mxu0 %v47
    %v621 = vpop.f32.mrf.mxu0
    %v622 = vadd.f32 0.0, %v621
    %623 = vmatmul.f32.gmra.mxu0 %v48
    %v624 = vpop.f32.mrf.mxu0
    %v625 = vadd.f32 0.0, %v624
    %626 = vmatmul.f32.gmra.mxu0 %v49
    %v627 = vpop.f32.mrf.mxu0
    %v628 = vadd.f32 0.0, %v627
    %629 = vmatmul.f32.gmra.mxu0 %v50
    %v630 = vpop.f32.mrf.mxu0
    %v631 = vadd.f32 0.0, %v630
    %632 = vmatmul.f32.gmra.mxu0 %v51
    %v633 = vpop.f32.mrf.mxu0
    %v634 = vadd.f32 0.0, %v633
    %635 = vmatmul.f32.gmra.mxu0 %v52
    %v636 = vpop.f32.mrf.mxu0
    %v637 = vadd.f32 0.0, %v636
    %638 = vmatmul.f32.gmra.mxu0 %v53
    %v639 = vpop.f32.mrf.mxu0
    %v640 = vadd.f32 0.0, %v639
    %641 = vmatmul.f32.gmra.mxu0 %v54
    %v642 = vpop.f32.mrf.mxu0
    %v643 = vadd.f32 0.0, %v642
    %644 = vmatmul.f32.gmra.mxu0 %v55
    %v645 = vpop.f32.mrf.mxu0
    %v646 = vadd.f32 0.0, %v645
    %647 = vmatmul.f32.gmra.mxu0 %v56
    %v648 = vpop.f32.mrf.mxu0
    %v649 = vadd.f32 0.0, %v648
    %650 = vmatmul.f32.gmra.mxu0 %v57
    %v651 = vpop.f32.mrf.mxu0
    %v652 = vadd.f32 0.0, %v651
    %653 = vmatmul.f32.gmra.mxu0 %v58
    %v654 = vpop.f32.mrf.mxu0
    %v655 = vadd.f32 0.0, %v654
    %656 = vmatmul.f32.gmra.mxu0 %v59
    %v657 = vpop.f32.mrf.mxu0
    %v658 = vadd.f32 0.0, %v657
    %659 = vmatmul.f32.gmra.mxu0 %v60
    %v660 = vpop.f32.mrf.mxu0
    %v661 = vadd.f32 0.0, %v660
    %662 = vmatmul.f32.gmra.mxu0 %v61
    %v663 = vpop.f32.mrf.mxu0
    %v664 = vadd.f32 0.0, %v663
    %665 = vmatmul.f32.gmra.mxu0 %v62
    %v666 = vpop.f32.mrf.mxu0
    %v667 = vadd.f32 0.0, %v666
    %668 = vmatmul.f32.gmra.mxu0 %v63
    %v669 = vpop.f32.mrf.mxu0
    %v670 = vadd.f32 0.0, %v669
    %671 = vmatmul.f32.gmra.mxu0 %v64
    %v672 = vpop.f32.mrf.mxu0
    %v673 = vadd.f32 0.0, %v672
    %674 = vmatmul.f32.gmra.mxu0 %v65
    %v675 = vpop.f32.mrf.mxu0
    %v676 = vadd.f32 0.0, %v675
    %677 = vdwg.mxu0
    %678 = vmatpush.msra.mxu0 %v175
    %679 = vmatpush.msra.mxu0 %v168
    %680 = vmatpush.msra.mxu0 %v161
    %681 = vmatpush.msra.mxu0 %v154
    %682 = vmatpush.msra.mxu0 %v147
    %683 = vmatpush.msra.mxu0 %v140
    %684 = vmatpush.msra.mxu0 %v133
    %685 = vmatpush.msra.mxu0 %v126
    %686 = vmatpush.msra.mxu0 %v119
    %687 = vmatpush.msra.mxu0 %v112
    %688 = vmatpush.msra.mxu0 %v105
    %689 = vmatpush.msra.mxu0 %v98
    %690 = vmatpush.msra.mxu0 %v91
    %691 = vmatpush.msra.mxu0 %v84
    %692 = vmatpush.msra.mxu0 %v77
    %693 = vmatpush.msra.mxu0 %v70
    %694 = vmatmul.f32.gmra.mxu0 %v30
    %v695 = vpop.f32.mrf.mxu0
    %v696 = vadd.f32 0.0, %v695
    %697 = vmatmul.f32.gmra.mxu0 %v31
    %v698 = vpop.f32.mrf.mxu0
    %v699 = vadd.f32 0.0, %v698
    %700 = vmatmul.f32.gmra.mxu0 %v32
    %v701 = vpop.f32.mrf.mxu0
    %v702 = vadd.f32 0.0, %v701
    %703 = vmatmul.f32.gmra.mxu0 %v33
    %v704 = vpop.f32.mrf.mxu0
    %v705 = vadd.f32 0.0, %v704
    %706 = vmatmul.f32.gmra.mxu0 %v34
    %v707 = vpop.f32.mrf.mxu0
    %v708 = vadd.f32 0.0, %v707
    %709 = vmatmul.f32.gmra.mxu0 %v35
    %v710 = vpop.f32.mrf.mxu0
    %v711 = vadd.f32 0.0, %v710
    %712 = vmatmul.f32.gmra.mxu0 %v36
    %v713 = vpop.f32.mrf.mxu0
    %v714 = vadd.f32 0.0, %v713
    %715 = vmatmul.f32.gmra.mxu0 %v37
    %v716 = vpop.f32.mrf.mxu0
    %v717 = vadd.f32 0.0, %v716
    %718 = vmatmul.f32.gmra.mxu0 %v38
    %v719 = vpop.f32.mrf.mxu0
    %v720 = vadd.f32 0.0, %v719
    %721 = vmatmul.f32.gmra.mxu0 %v39
    %v722 = vpop.f32.mrf.mxu0
    %v723 = vadd.f32 0.0, %v722
    %724 = vmatmul.f32.gmra.mxu0 %v40
    %v725 = vpop.f32.mrf.mxu0
    %v726 = vadd.f32 0.0, %v725
    %727 = vmatmul.f32.gmra.mxu0 %v41
    %v728 = vpop.f32.mrf.mxu0
    %v729 = vadd.f32 0.0, %v728
    %730 = vmatmul.f32.gmra.mxu0 %v42
    %v731 = vpop.f32.mrf.mxu0
    %v732 = vadd.f32 0.0, %v731
    %733 = vmatmul.f32.gmra.mxu0 %v43
    %v734 = vpop.f32.mrf.mxu0
    %v735 = vadd.f32 0.0, %v734
    %736 = vmatmul.f32.gmra.mxu0 %v44
    %v737 = vpop.f32.mrf.mxu0
    %v738 = vadd.f32 0.0, %v737
    %739 = vmatmul.f32.gmra.mxu0 %v45
    %v740 = vpop.f32.mrf.mxu0
    %v741 = vadd.f32 0.0, %v740
    %742 = vmatmul.f32.gmra.mxu0 %v46
    %v743 = vpop.f32.mrf.mxu0
    %v744 = vadd.f32 0.0, %v743
    %745 = vmatmul.f32.gmra.mxu0 %v47
    %v746 = vpop.f32.mrf.mxu0
    %v747 = vadd.f32 0.0, %v746
    %748 = vmatmul.f32.gmra.mxu0 %v48
    %v749 = vpop.f32.mrf.mxu0
    %v750 = vadd.f32 0.0, %v749
    %751 = vmatmul.f32.gmra.mxu0 %v49
    %v752 = vpop.f32.mrf.mxu0
    %v753 = vadd.f32 0.0, %v752
    %754 = vmatmul.f32.gmra.mxu0 %v50
    %v755 = vpop.f32.mrf.mxu0
    %v756 = vadd.f32 0.0, %v755
    %757 = vmatmul.f32.gmra.mxu0 %v51
    %v758 = vpop.f32.mrf.mxu0
    %v759 = vadd.f32 0.0, %v758
    %760 = vmatmul.f32.gmra.mxu0 %v52
    %v761 = vpop.f32.mrf.mxu0
    %v762 = vadd.f32 0.0, %v761
    %763 = vmatmul.f32.gmra.mxu0 %v53
    %v764 = vpop.f32.mrf.mxu0
    %v765 = vadd.f32 0.0, %v764
    %766 = vmatmul.f32.gmra.mxu0 %v54
    %v767 = vpop.f32.mrf.mxu0
    %v768 = vadd.f32 0.0, %v767
    %769 = vmatmul.f32.gmra.mxu0 %v55
    %v770 = vpop.f32.mrf.mxu0
    %v771 = vadd.f32 0.0, %v770
    %772 = vmatmul.f32.gmra.mxu0 %v56
    %v773 = vpop.f32.mrf.mxu0
    %v774 = vadd.f32 0.0, %v773
    %775 = vmatmul.f32.gmra.mxu0 %v57
    %v776 = vpop.f32.mrf.mxu0
    %v777 = vadd.f32 0.0, %v776
    %778 = vmatmul.f32.gmra.mxu0 %v58
    %v779 = vpop.f32.mrf.mxu0
    %v780 = vadd.f32 0.0, %v779
    %781 = vmatmul.f32.gmra.mxu0 %v59
    %v782 = vpop.f32.mrf.mxu0
    %v783 = vadd.f32 0.0, %v782
    %784 = vmatmul.f32.gmra.mxu0 %v60
    %v785 = vpop.f32.mrf.mxu0
    %v786 = vadd.f32 0.0, %v785
    %787 = vmatmul.f32.gmra.mxu0 %v61
    %v788 = vpop.f32.mrf.mxu0
    %v789 = vadd.f32 0.0, %v788
    %790 = vmatmul.f32.gmra.mxu0 %v62
    %v791 = vpop.f32.mrf.mxu0
    %v792 = vadd.f32 0.0, %v791
    %793 = vmatmul.f32.gmra.mxu0 %v63
    %v794 = vpop.f32.mrf.mxu0
    %v795 = vadd.f32 0.0, %v794
    %796 = vmatmul.f32.gmra.mxu0 %v64
    %v797 = vpop.f32.mrf.mxu0
    %v798 = vadd.f32 0.0, %v797
    %799 = vmatmul.f32.gmra.mxu0 %v65
    %v800 = vpop.f32.mrf.mxu0
    %v801 = vadd.f32 0.0, %v800
    %802 = vdwg.mxu0
    %803 = vmatpush.msra.mxu0 %v176
    %804 = vmatpush.msra.mxu0 %v169
    %805 = vmatpush.msra.mxu0 %v162
    %806 = vmatpush.msra.mxu0 %v155
    %807 = vmatpush.msra.mxu0 %v148
    %808 = vmatpush.msra.mxu0 %v141
    %809 = vmatpush.msra.mxu0 %v134
    %810 = vmatpush.msra.mxu0 %v127
    %811 = vmatpush.msra.mxu0 %v120
    %812 = vmatpush.msra.mxu0 %v113
    %813 = vmatpush.msra.mxu0 %v106
    %814 = vmatpush.msra.mxu0 %v99
    %815 = vmatpush.msra.mxu0 %v92
    %816 = vmatpush.msra.mxu0 %v85
    %817 = vmatpush.msra.mxu0 %v78
    %818 = vmatpush.msra.mxu0 %v71
    %819 = vmatmul.f32.gmra.mxu0 %v30
    %v820 = vpop.f32.mrf.mxu0
    %v821 = vadd.f32 0.0, %v820
    %822 = vmatmul.f32.gmra.mxu0 %v31
    %v823 = vpop.f32.mrf.mxu0
    %v824 = vadd.f32 0.0, %v823
    %825 = vmatmul.f32.gmra.mxu0 %v32
    %v826 = vpop.f32.mrf.mxu0
    %v827 = vadd.f32 0.0, %v826
    %828 = vmatmul.f32.gmra.mxu0 %v33
    %v829 = vpop.f32.mrf.mxu0
    %v830 = vadd.f32 0.0, %v829
    %831 = vmatmul.f32.gmra.mxu0 %v34
    %v832 = vpop.f32.mrf.mxu0
    %v833 = vadd.f32 0.0, %v832
    %834 = vmatmul.f32.gmra.mxu0 %v35
    %v835 = vpop.f32.mrf.mxu0
    %v836 = vadd.f32 0.0, %v835
    %837 = vmatmul.f32.gmra.mxu0 %v36
    %v838 = vpop.f32.mrf.mxu0
    %v839 = vadd.f32 0.0, %v838
    %840 = vmatmul.f32.gmra.mxu0 %v37
    %v841 = vpop.f32.mrf.mxu0
    %v842 = vadd.f32 0.0, %v841
    %843 = vmatmul.f32.gmra.mxu0 %v38
    %v844 = vpop.f32.mrf.mxu0
    %v845 = vadd.f32 0.0, %v844
    %846 = vmatmul.f32.gmra.mxu0 %v39
    %v847 = vpop.f32.mrf.mxu0
    %v848 = vadd.f32 0.0, %v847
    %849 = vmatmul.f32.gmra.mxu0 %v40
    %v850 = vpop.f32.mrf.mxu0
    %v851 = vadd.f32 0.0, %v850
    %852 = vmatmul.f32.gmra.mxu0 %v41
    %v853 = vpop.f32.mrf.mxu0
    %v854 = vadd.f32 0.0, %v853
    %855 = vmatmul.f32.gmra.mxu0 %v42
    %v856 = vpop.f32.mrf.mxu0
    %v857 = vadd.f32 0.0, %v856
    %858 = vmatmul.f32.gmra.mxu0 %v43
    %v859 = vpop.f32.mrf.mxu0
    %v860 = vadd.f32 0.0, %v859
    %861 = vmatmul.f32.gmra.mxu0 %v44
    %v862 = vpop.f32.mrf.mxu0
    %v863 = vadd.f32 0.0, %v862
    %864 = vmatmul.f32.gmra.mxu0 %v45
    %v865 = vpop.f32.mrf.mxu0
    %v866 = vadd.f32 0.0, %v865
    %867 = vmatmul.f32.gmra.mxu0 %v46
    %v868 = vpop.f32.mrf.mxu0
    %v869 = vadd.f32 0.0, %v868
    %870 = vmatmul.f32.gmra.mxu0 %v47
    %v871 = vpop.f32.mrf.mxu0
    %v872 = vadd.f32 0.0, %v871
    %873 = vmatmul.f32.gmra.mxu0 %v48
    %v874 = vpop.f32.mrf.mxu0
    %v875 = vadd.f32 0.0, %v874
    %876 = vmatmul.f32.gmra.mxu0 %v49
    %v877 = vpop.f32.mrf.mxu0
    %v878 = vadd.f32 0.0, %v877
    %879 = vmatmul.f32.gmra.mxu0 %v50
    %v880 = vpop.f32.mrf.mxu0
    %v881 = vadd.f32 0.0, %v880
    %882 = vmatmul.f32.gmra.mxu0 %v51
    %v883 = vpop.f32.mrf.mxu0
    %v884 = vadd.f32 0.0, %v883
    %885 = vmatmul.f32.gmra.mxu0 %v52
    %v886 = vpop.f32.mrf.mxu0
    %v887 = vadd.f32 0.0, %v886
    %888 = vmatmul.f32.gmra.mxu0 %v53
    %v889 = vpop.f32.mrf.mxu0
    %v890 = vadd.f32 0.0, %v889
    %891 = vmatmul.f32.gmra.mxu0 %v54
    %v892 = vpop.f32.mrf.mxu0
    %v893 = vadd.f32 0.0, %v892
    %894 = vmatmul.f32.gmra.mxu0 %v55
    %v895 = vpop.f32.mrf.mxu0
    %v896 = vadd.f32 0.0, %v895
    %897 = vmatmul.f32.gmra.mxu0 %v56
    %v898 = vpop.f32.mrf.mxu0
    %v899 = vadd.f32 0.0, %v898
    %900 = vmatmul.f32.gmra.mxu0 %v57
    %v901 = vpop.f32.mrf.mxu0
    %v902 = vadd.f32 0.0, %v901
    %903 = vmatmul.f32.gmra.mxu0 %v58
    %v904 = vpop.f32.mrf.mxu0
    %v905 = vadd.f32 0.0, %v904
    %906 = vmatmul.f32.gmra.mxu0 %v59
    %v907 = vpop.f32.mrf.mxu0
    %v908 = vadd.f32 0.0, %v907
    %909 = vmatmul.f32.gmra.mxu0 %v60
    %v910 = vpop.f32.mrf.mxu0
    %v911 = vadd.f32 0.0, %v910
    %912 = vmatmul.f32.gmra.mxu0 %v61
    %v913 = vpop.f32.mrf.mxu0
    %v914 = vadd.f32 0.0, %v913
    %915 = vmatmul.f32.gmra.mxu0 %v62
    %v916 = vpop.f32.mrf.mxu0
    %v917 = vadd.f32 0.0, %v916
    %918 = vmatmul.f32.gmra.mxu0 %v63
    %v919 = vpop.f32.mrf.mxu0
    %v920 = vadd.f32 0.0, %v919
    %921 = vmatmul.f32.gmra.mxu0 %v64
    %v922 = vpop.f32.mrf.mxu0
    %v923 = vadd.f32 0.0, %v922
    %924 = vmatmul.f32.gmra.mxu0 %v65
    %v925 = vpop.f32.mrf.mxu0
    %v926 = vadd.f32 0.0, %v925
    %927 = vdwg.mxu0
    %928 = vmatpush.msra.mxu0 %v177
    %929 = vmatpush.msra.mxu0 %v170
    %930 = vmatpush.msra.mxu0 %v163
    %931 = vmatpush.msra.mxu0 %v156
    %932 = vmatpush.msra.mxu0 %v149
    %933 = vmatpush.msra.mxu0 %v142
    %934 = vmatpush.msra.mxu0 %v135
    %935 = vmatpush.msra.mxu0 %v128
    %936 = vmatpush.msra.mxu0 %v121
    %937 = vmatpush.msra.mxu0 %v114
    %938 = vmatpush.msra.mxu0 %v107
    %939 = vmatpush.msra.mxu0 %v100
    %940 = vmatpush.msra.mxu0 %v93
    %941 = vmatpush.msra.mxu0 %v86
    %942 = vmatpush.msra.mxu0 %v79
    %943 = vmatpush.msra.mxu0 %v72
    %944 = vmatmul.f32.gmra.mxu0 %v30
    %v945 = vpop.f32.mrf.mxu0
    %v946 = vadd.f32 0.0, %v945
    %947 = vmatmul.f32.gmra.mxu0 %v31
    %v948 = vpop.f32.mrf.mxu0
    %v949 = vadd.f32 0.0, %v948
    %950 = vmatmul.f32.gmra.mxu0 %v32
    %v951 = vpop.f32.mrf.mxu0
    %v952 = vadd.f32 0.0, %v951
    %953 = vmatmul.f32.gmra.mxu0 %v33
    %v954 = vpop.f32.mrf.mxu0
    %v955 = vadd.f32 0.0, %v954
    %956 = vmatmul.f32.gmra.mxu0 %v34
    %v957 = vpop.f32.mrf.mxu0
    %v958 = vadd.f32 0.0, %v957
    %959 = vmatmul.f32.gmra.mxu0 %v35
    %v960 = vpop.f32.mrf.mxu0
    %v961 = vadd.f32 0.0, %v960
    %962 = vmatmul.f32.gmra.mxu0 %v36
    %v963 = vpop.f32.mrf.mxu0
    %v964 = vadd.f32 0.0, %v963
    %965 = vmatmul.f32.gmra.mxu0 %v37
    %v966 = vpop.f32.mrf.mxu0
    %v967 = vadd.f32 0.0, %v966
    %968 = vmatmul.f32.gmra.mxu0 %v38
    %v969 = vpop.f32.mrf.mxu0
    %v970 = vadd.f32 0.0, %v969
    %971 = vmatmul.f32.gmra.mxu0 %v39
    %v972 = vpop.f32.mrf.mxu0
    %v973 = vadd.f32 0.0, %v972
    %974 = vmatmul.f32.gmra.mxu0 %v40
    %v975 = vpop.f32.mrf.mxu0
    %v976 = vadd.f32 0.0, %v975
    %977 = vmatmul.f32.gmra.mxu0 %v41
    %v978 = vpop.f32.mrf.mxu0
    %v979 = vadd.f32 0.0, %v978
    %980 = vmatmul.f32.gmra.mxu0 %v42
    %v981 = vpop.f32.mrf.mxu0
    %v982 = vadd.f32 0.0, %v981
    %983 = vmatmul.f32.gmra.mxu0 %v43
    %v984 = vpop.f32.mrf.mxu0
    %v985 = vadd.f32 0.0, %v984
    %986 = vmatmul.f32.gmra.mxu0 %v44
    %v987 = vpop.f32.mrf.mxu0
    %v988 = vadd.f32 0.0, %v987
    %989 = vmatmul.f32.gmra.mxu0 %v45
    %v990 = vpop.f32.mrf.mxu0
    %v991 = vadd.f32 0.0, %v990
    %992 = vmatmul.f32.gmra.mxu0 %v46
    %v993 = vpop.f32.mrf.mxu0
    %v994 = vadd.f32 0.0, %v993
    %995 = vmatmul.f32.gmra.mxu0 %v47
    %v996 = vpop.f32.mrf.mxu0
    %v997 = vadd.f32 0.0, %v996
    %998 = vmatmul.f32.gmra.mxu0 %v48
    %v999 = vpop.f32.mrf.mxu0
    %v1000 = vadd.f32 0.0, %v999
    %1001 = vmatmul.f32.gmra.mxu0 %v49
    %v1002 = vpop.f32.mrf.mxu0
    %v1003 = vadd.f32 0.0, %v1002
    %1004 = vmatmul.f32.gmra.mxu0 %v50
    %v1005 = vpop.f32.mrf.mxu0
    %v1006 = vadd.f32 0.0, %v1005
    %1007 = vmatmul.f32.gmra.mxu0 %v51
    %v1008 = vpop.f32.mrf.mxu0
    %v1009 = vadd.f32 0.0, %v1008
    %1010 = vmatmul.f32.gmra.mxu0 %v52
    %v1011 = vpop.f32.mrf.mxu0
    %v1012 = vadd.f32 0.0, %v1011
    %1013 = vmatmul.f32.gmra.mxu0 %v53
    %v1014 = vpop.f32.mrf.mxu0
    %v1015 = vadd.f32 0.0, %v1014
    %1016 = vmatmul.f32.gmra.mxu0 %v54
    %v1017 = vpop.f32.mrf.mxu0
    %v1018 = vadd.f32 0.0, %v1017
    %1019 = vmatmul.f32.gmra.mxu0 %v55
    %v1020 = vpop.f32.mrf.mxu0
    %v1021 = vadd.f32 0.0, %v1020
    %1022 = vmatmul.f32.gmra.mxu0 %v56
    %v1023 = vpop.f32.mrf.mxu0
    %v1024 = vadd.f32 0.0, %v1023
    %1025 = vmatmul.f32.gmra.mxu0 %v57
    %v1026 = vpop.f32.mrf.mxu0
    %v1027 = vadd.f32 0.0, %v1026
    %1028 = vmatmul.f32.gmra.mxu0 %v58
    %v1029 = vpop.f32.mrf.mxu0
    %v1030 = vadd.f32 0.0, %v1029
    %1031 = vmatmul.f32.gmra.mxu0 %v59
    %v1032 = vpop.f32.mrf.mxu0
    %v1033 = vadd.f32 0.0, %v1032
    %1034 = vmatmul.f32.gmra.mxu0 %v60
    %v1035 = vpop.f32.mrf.mxu0
    %v1036 = vadd.f32 0.0, %v1035
    %1037 = vmatmul.f32.gmra.mxu0 %v61
    %v1038 = vpop.f32.mrf.mxu0
    %v1039 = vadd.f32 0.0, %v1038
    %1040 = vmatmul.f32.gmra.mxu0 %v62
    %v1041 = vpop.f32.mrf.mxu0
    %v1042 = vadd.f32 0.0, %v1041
    %1043 = vmatmul.f32.gmra.mxu0 %v63
    %v1044 = vpop.f32.mrf.mxu0
    %v1045 = vadd.f32 0.0, %v1044
    %1046 = vmatmul.f32.gmra.mxu0 %v64
    %v1047 = vpop.f32.mrf.mxu0
    %v1048 = vadd.f32 0.0, %v1047
    %1049 = vmatmul.f32.gmra.mxu0 %v65
    %v1050 = vpop.f32.mrf.mxu0
    %v1051 = vadd.f32 0.0, %v1050
    %1052 = vdwg.mxu0
    %1053 = vst [vmem:[#allocation2] sm:$0xff] %v196
    %1054 = vst [vmem:[#allocation2 + $0x8] sm:$0xff] %v321
    %1055 = vst [vmem:[#allocation2 + $0x10] sm:$0xff] %v446
    %1056 = vst [vmem:[#allocation2 + $0x18] sm:$0xff] %v571
    %1057 = vst [vmem:[#allocation2 + $0x20] sm:$0xff] %v696
    %1058 = vst [vmem:[#allocation2 + $0x28] sm:$0xff] %v821
    %vm1059 = vcmask 130048
    %1060 = vst.msk [vmem:[#allocation2 + $0x30] sm:$0xff] %vm1059, %v946
    %1061 = vst [vmem:[#allocation2 + $0x38] sm:$0xff] %v199
    %1062 = vst [vmem:[#allocation2 + $0x40] sm:$0xff] %v324
    %1063 = vst [vmem:[#allocation2 + $0x48] sm:$0xff] %v449
    %1064 = vst [vmem:[#allocation2 + $0x50] sm:$0xff] %v574
    %1065 = vst [vmem:[#allocation2 + $0x58] sm:$0xff] %v699
    %1066 = vst [vmem:[#allocation2 + $0x60] sm:$0xff] %v824
    %1067 = vst.msk [vmem:[#allocation2 + $0x68] sm:$0xff] %vm1059, %v949
    %1068 = vst [vmem:[#allocation2 + $0x70] sm:$0xff] %v202
    %1069 = vst [vmem:[#allocation2 + $0x78] sm:$0xff] %v327
    %1070 = vst [vmem:[#allocation2 + $0x80] sm:$0xff] %v452
    %1071 = vst [vmem:[#allocation2 + $0x88] sm:$0xff] %v577
    %1072 = vst [vmem:[#allocation2 + $0x90] sm:$0xff] %v702
    %1073 = vst [vmem:[#allocation2 + $0x98] sm:$0xff] %v827
    %1074 = vst.msk [vmem:[#allocation2 + $0xa0] sm:$0xff] %vm1059, %v952
    %1075 = vst [vmem:[#allocation2 + $0xa8] sm:$0xff] %v205
    %1076 = vst [vmem:[#allocation2 + $0xb0] sm:$0xff] %v330
    %1077 = vst [vmem:[#allocation2 + $0xb8] sm:$0xff] %v455
    %1078 = vst [vmem:[#allocation2 + $0xc0] sm:$0xff] %v580
    %1079 = vst [vmem:[#allocation2 + $0xc8] sm:$0xff] %v705
    %1080 = vst [vmem:[#allocation2 + $0xd0] sm:$0xff] %v830
    %1081 = vst.msk [vmem:[#allocation2 + $0xd8] sm:$0xff] %vm1059, %v955
    %1082 = vst [vmem:[#allocation2 + $0xe0] sm:$0xff] %v208
    %1083 = vst [vmem:[#allocation2 + $0xe8] sm:$0xff] %v333
    %1084 = vst [vmem:[#allocation2 + $0xf0] sm:$0xff] %v458
    %1085 = vst [vmem:[#allocation2 + $0xf8] sm:$0xff] %v583
    %1086 = vst [vmem:[#allocation2 + $0x100] sm:$0xff] %v708
    %1087 = vst [vmem:[#allocation2 + $0x108] sm:$0xff] %v833
    %1088 = vst.msk [vmem:[#allocation2 + $0x110] sm:$0xff] %vm1059, %v958
    %1089 = vst [vmem:[#allocation2 + $0x118] sm:$0xff] %v211
    %1090 = vst [vmem:[#allocation2 + $0x120] sm:$0xff] %v336
    %1091 = vst [vmem:[#allocation2 + $0x128] sm:$0xff] %v461
    %1092 = vst [vmem:[#allocation2 + $0x130] sm:$0xff] %v586
    %1093 = vst [vmem:[#allocation2 + $0x138] sm:$0xff] %v711
    %1094 = vst [vmem:[#allocation2 + $0x140] sm:$0xff] %v836
    %1095 = vst.msk [vmem:[#allocation2 + $0x148] sm:$0xff] %vm1059, %v961
    %1096 = vst [vmem:[#allocation2 + $0x150] sm:$0xff] %v214
    %1097 = vst [vmem:[#allocation2 + $0x158] sm:$0xff] %v339
    %1098 = vst [vmem:[#allocation2 + $0x160] sm:$0xff] %v464
    %1099 = vst [vmem:[#allocation2 + $0x168] sm:$0xff] %v589
    %1100 = vst [vmem:[#allocation2 + $0x170] sm:$0xff] %v714
    %1101 = vst [vmem:[#allocation2 + $0x178] sm:$0xff] %v839
    %1102 = vst.msk [vmem:[#allocation2 + $0x180] sm:$0xff] %vm1059, %v964
    %1103 = vst [vmem:[#allocation2 + $0x188] sm:$0xff] %v217
    %1104 = vst [vmem:[#allocation2 + $0x190] sm:$0xff] %v342
    %1105 = vst [vmem:[#allocation2 + $0x198] sm:$0xff] %v467
    %1106 = vst [vmem:[#allocation2 + $0x1a0] sm:$0xff] %v592
    %1107 = vst [vmem:[#allocation2 + $0x1a8] sm:$0xff] %v717
    %1108 = vst [vmem:[#allocation2 + $0x1b0] sm:$0xff] %v842
    %1109 = vst.msk [vmem:[#allocation2 + $0x1b8] sm:$0xff] %vm1059, %v967
    %1110 = vst [vmem:[#allocation2 + $0x1c0] sm:$0xff] %v220
    %1111 = vst [vmem:[#allocation2 + $0x1c8] sm:$0xff] %v345
    %1112 = vst [vmem:[#allocation2 + $0x1d0] sm:$0xff] %v470
    %1113 = vst [vmem:[#allocation2 + $0x1d8] sm:$0xff] %v595
    %1114 = vst [vmem:[#allocation2 + $0x1e0] sm:$0xff] %v720
    %1115 = vst [vmem:[#allocation2 + $0x1e8] sm:$0xff] %v845
    %1116 = vst.msk [vmem:[#allocation2 + $0x1f0] sm:$0xff] %vm1059, %v970
    %1117 = vst [vmem:[#allocation2 + $0x1f8] sm:$0xff] %v223
    %1118 = vst [vmem:[#allocation2 + $0x200] sm:$0xff] %v348
    %1119 = vst [vmem:[#allocation2 + $0x208] sm:$0xff] %v473
    %1120 = vst [vmem:[#allocation2 + $0x210] sm:$0xff] %v598
    %1121 = vst [vmem:[#allocation2 + $0x218] sm:$0xff] %v723
    %1122 = vst [vmem:[#allocation2 + $0x220] sm:$0xff] %v848
    %1123 = vst.msk [vmem:[#allocation2 + $0x228] sm:$0xff] %vm1059, %v973
    %1124 = vst [vmem:[#allocation2 + $0x230] sm:$0xff] %v226
    %1125 = vst [vmem:[#allocation2 + $0x238] sm:$0xff] %v351
    %1126 = vst [vmem:[#allocation2 + $0x240] sm:$0xff] %v476
    %1127 = vst [vmem:[#allocation2 + $0x248] sm:$0xff] %v601
    %1128 = vst [vmem:[#allocation2 + $0x250] sm:$0xff] %v726
    %1129 = vst [vmem:[#allocation2 + $0x258] sm:$0xff] %v851
    %1130 = vst.msk [vmem:[#allocation2 + $0x260] sm:$0xff] %vm1059, %v976
    %1131 = vst [vmem:[#allocation2 + $0x268] sm:$0xff] %v229
    %1132 = vst [vmem:[#allocation2 + $0x270] sm:$0xff] %v354
    %1133 = vst [vmem:[#allocation2 + $0x278] sm:$0xff] %v479
    %1134 = vst [vmem:[#allocation2 + $0x280] sm:$0xff] %v604
    %1135 = vst [vmem:[#allocation2 + $0x288] sm:$0xff] %v729
    %1136 = vst [vmem:[#allocation2 + $0x290] sm:$0xff] %v854
    %1137 = vst.msk [vmem:[#allocation2 + $0x298] sm:$0xff] %vm1059, %v979
    %1138 = vst [vmem:[#allocation2 + $0x2a0] sm:$0xff] %v232
    %1139 = vst [vmem:[#allocation2 + $0x2a8] sm:$0xff] %v357
    %1140 = vst [vmem:[#allocation2 + $0x2b0] sm:$0xff] %v482
    %1141 = vst [vmem:[#allocation2 + $0x2b8] sm:$0xff] %v607
    %1142 = vst [vmem:[#allocation2 + $0x2c0] sm:$0xff] %v732
    %1143 = vst [vmem:[#allocation2 + $0x2c8] sm:$0xff] %v857
    %1144 = vst.msk [vmem:[#allocation2 + $0x2d0] sm:$0xff] %vm1059, %v982
    %1145 = vst [vmem:[#allocation2 + $0x2d8] sm:$0xff] %v235
    %1146 = vst [vmem:[#allocation2 + $0x2e0] sm:$0xff] %v360
    %1147 = vst [vmem:[#allocation2 + $0x2e8] sm:$0xff] %v485
    %1148 = vst [vmem:[#allocation2 + $0x2f0] sm:$0xff] %v610
    %1149 = vst [vmem:[#allocation2 + $0x2f8] sm:$0xff] %v735
    %1150 = vst [vmem:[#allocation2 + $0x300] sm:$0xff] %v860
    %1151 = vst.msk [vmem:[#allocation2 + $0x308] sm:$0xff] %vm1059, %v985
    %1152 = vst [vmem:[#allocation2 + $0x310] sm:$0xff] %v238
    %1153 = vst [vmem:[#allocation2 + $0x318] sm:$0xff] %v363
    %1154 = vst [vmem:[#allocation2 + $0x320] sm:$0xff] %v488
    %1155 = vst [vmem:[#allocation2 + $0x328] sm:$0xff] %v613
    %1156 = vst [vmem:[#allocation2 + $0x330] sm:$0xff] %v738
    %1157 = vst [vmem:[#allocation2 + $0x338] sm:$0xff] %v863
    %1158 = vst.msk [vmem:[#allocation2 + $0x340] sm:$0xff] %vm1059, %v988
    %1159 = vst [vmem:[#allocation2 + $0x348] sm:$0xff] %v241
    %1160 = vst [vmem:[#allocation2 + $0x350] sm:$0xff] %v366
    %1161 = vst [vmem:[#allocation2 + $0x358] sm:$0xff] %v491
    %1162 = vst [vmem:[#allocation2 + $0x360] sm:$0xff] %v616
    %1163 = vst [vmem:[#allocation2 + $0x368] sm:$0xff] %v741
    %1164 = vst [vmem:[#allocation2 + $0x370] sm:$0xff] %v866
    %1165 = vst.msk [vmem:[#allocation2 + $0x378] sm:$0xff] %vm1059, %v991
    %1166 = vst [vmem:[#allocation2 + $0x380] sm:$0xff] %v244
    %1167 = vst [vmem:[#allocation2 + $0x388] sm:$0xff] %v369
    %1168 = vst [vmem:[#allocation2 + $0x390] sm:$0xff] %v494
    %1169 = vst [vmem:[#allocation2 + $0x398] sm:$0xff] %v619
    %1170 = vst [vmem:[#allocation2 + $0x3a0] sm:$0xff] %v744
    %1171 = vst [vmem:[#allocation2 + $0x3a8] sm:$0xff] %v869
    %1172 = vst.msk [vmem:[#allocation2 + $0x3b0] sm:$0xff] %vm1059, %v994
    %1173 = vst [vmem:[#allocation2 + $0x3b8] sm:$0xff] %v247
    %1174 = vst [vmem:[#allocation2 + $0x3c0] sm:$0xff] %v372
    %1175 = vst [vmem:[#allocation2 + $0x3c8] sm:$0xff] %v497
    %1176 = vst [vmem:[#allocation2 + $0x3d0] sm:$0xff] %v622
    %1177 = vst [vmem:[#allocation2 + $0x3d8] sm:$0xff] %v747
    %1178 = vst [vmem:[#allocation2 + $0x3e0] sm:$0xff] %v872
    %1179 = vst.msk [vmem:[#allocation2 + $0x3e8] sm:$0xff] %vm1059, %v997
    %1180 = vst [vmem:[#allocation2 + $0x3f0] sm:$0xff] %v250
    %1181 = vst [vmem:[#allocation2 + $0x3f8] sm:$0xff] %v375
    %1182 = vst [vmem:[#allocation2 + $0x400] sm:$0xff] %v500
    %1183 = vst [vmem:[#allocation2 + $0x408] sm:$0xff] %v625
    %1184 = vst [vmem:[#allocation2 + $0x410] sm:$0xff] %v750
    %1185 = vst [vmem:[#allocation2 + $0x418] sm:$0xff] %v875
    %1186 = vst.msk [vmem:[#allocation2 + $0x420] sm:$0xff] %vm1059, %v1000
    %1187 = vst [vmem:[#allocation2 + $0x428] sm:$0xff] %v253
    %1188 = vst [vmem:[#allocation2 + $0x430] sm:$0xff] %v378
    %1189 = vst [vmem:[#allocation2 + $0x438] sm:$0xff] %v503
    %1190 = vst [vmem:[#allocation2 + $0x440] sm:$0xff] %v628
    %1191 = vst [vmem:[#allocation2 + $0x448] sm:$0xff] %v753
    %1192 = vst [vmem:[#allocation2 + $0x450] sm:$0xff] %v878
    %1193 = vst.msk [vmem:[#allocation2 + $0x458] sm:$0xff] %vm1059, %v1003
    %1194 = vst [vmem:[#allocation2 + $0x460] sm:$0xff] %v256
    %1195 = vst [vmem:[#allocation2 + $0x468] sm:$0xff] %v381
    %1196 = vst [vmem:[#allocation2 + $0x470] sm:$0xff] %v506
    %1197 = vst [vmem:[#allocation2 + $0x478] sm:$0xff] %v631
    %1198 = vst [vmem:[#allocation2 + $0x480] sm:$0xff] %v756
    %1199 = vst [vmem:[#allocation2 + $0x488] sm:$0xff] %v881
    %1200 = vst.msk [vmem:[#allocation2 + $0x490] sm:$0xff] %vm1059, %v1006
    %1201 = vst [vmem:[#allocation2 + $0x498] sm:$0xff] %v259
    %1202 = vst [vmem:[#allocation2 + $0x4a0] sm:$0xff] %v384
    %1203 = vst [vmem:[#allocation2 + $0x4a8] sm:$0xff] %v509
    %1204 = vst [vmem:[#allocation2 + $0x4b0] sm:$0xff] %v634
    %1205 = vst [vmem:[#allocation2 + $0x4b8] sm:$0xff] %v759
    %1206 = vst [vmem:[#allocation2 + $0x4c0] sm:$0xff] %v884
    %1207 = vst.msk [vmem:[#allocation2 + $0x4c8] sm:$0xff] %vm1059, %v1009
    %1208 = vst [vmem:[#allocation2 + $0x4d0] sm:$0xff] %v262
    %1209 = vst [vmem:[#allocation2 + $0x4d8] sm:$0xff] %v387
    %1210 = vst [vmem:[#allocation2 + $0x4e0] sm:$0xff] %v512
    %1211 = vst [vmem:[#allocation2 + $0x4e8] sm:$0xff] %v637
    %1212 = vst [vmem:[#allocation2 + $0x4f0] sm:$0xff] %v762
    %1213 = vst [vmem:[#allocation2 + $0x4f8] sm:$0xff] %v887
    %1214 = vst.msk [vmem:[#allocation2 + $0x500] sm:$0xff] %vm1059, %v1012
    %1215 = vst [vmem:[#allocation2 + $0x508] sm:$0xff] %v265
    %1216 = vst [vmem:[#allocation2 + $0x510] sm:$0xff] %v390
    %1217 = vst [vmem:[#allocation2 + $0x518] sm:$0xff] %v515
    %1218 = vst [vmem:[#allocation2 + $0x520] sm:$0xff] %v640
    %1219 = vst [vmem:[#allocation2 + $0x528] sm:$0xff] %v765
    %1220 = vst [vmem:[#allocation2 + $0x530] sm:$0xff] %v890
    %1221 = vst.msk [vmem:[#allocation2 + $0x538] sm:$0xff] %vm1059, %v1015
    %1222 = vst [vmem:[#allocation2 + $0x540] sm:$0xff] %v268
    %1223 = vst [vmem:[#allocation2 + $0x548] sm:$0xff] %v393
    %1224 = vst [vmem:[#allocation2 + $0x550] sm:$0xff] %v518
    %1225 = vst [vmem:[#allocation2 + $0x558] sm:$0xff] %v643
    %1226 = vst [vmem:[#allocation2 + $0x560] sm:$0xff] %v768
    %1227 = vst [vmem:[#allocation2 + $0x568] sm:$0xff] %v893
    %1228 = vst.msk [vmem:[#allocation2 + $0x570] sm:$0xff] %vm1059, %v1018
    %1229 = vst [vmem:[#allocation2 + $0x578] sm:$0xff] %v271
    %1230 = vst [vmem:[#allocation2 + $0x580] sm:$0xff] %v396
    %1231 = vst [vmem:[#allocation2 + $0x588] sm:$0xff] %v521
    %1232 = vst [vmem:[#allocation2 + $0x590] sm:$0xff] %v646
    %1233 = vst [vmem:[#allocation2 + $0x598] sm:$0xff] %v771
    %1234 = vst [vmem:[#allocation2 + $0x5a0] sm:$0xff] %v896
    %1235 = vst.msk [vmem:[#allocation2 + $0x5a8] sm:$0xff] %vm1059, %v1021
    %1236 = vst [vmem:[#allocation2 + $0x5b0] sm:$0xff] %v274
    %1237 = vst [vmem:[#allocation2 + $0x5b8] sm:$0xff] %v399
    %1238 = vst [vmem:[#allocation2 + $0x5c0] sm:$0xff] %v524
    %1239 = vst [vmem:[#allocation2 + $0x5c8] sm:$0xff] %v649
    %1240 = vst [vmem:[#allocation2 + $0x5d0] sm:$0xff] %v774
    %1241 = vst [vmem:[#allocation2 + $0x5d8] sm:$0xff] %v899
    %1242 = vst.msk [vmem:[#allocation2 + $0x5e0] sm:$0xff] %vm1059, %v1024
    %1243 = vst [vmem:[#allocation2 + $0x5e8] sm:$0xff] %v277
    %1244 = vst [vmem:[#allocation2 + $0x5f0] sm:$0xff] %v402
    %1245 = vst [vmem:[#allocation2 + $0x5f8] sm:$0xff] %v527
    %1246 = vst [vmem:[#allocation2 + $0x600] sm:$0xff] %v652
    %1247 = vst [vmem:[#allocation2 + $0x608] sm:$0xff] %v777
    %1248 = vst [vmem:[#allocation2 + $0x610] sm:$0xff] %v902
    %1249 = vst.msk [vmem:[#allocation2 + $0x618] sm:$0xff] %vm1059, %v1027
    %1250 = vst [vmem:[#allocation2 + $0x620] sm:$0xff] %v280
    %1251 = vst [vmem:[#allocation2 + $0x628] sm:$0xff] %v405
    %1252 = vst [vmem:[#allocation2 + $0x630] sm:$0xff] %v530
    %1253 = vst [vmem:[#allocation2 + $0x638] sm:$0xff] %v655
    %1254 = vst [vmem:[#allocation2 + $0x640] sm:$0xff] %v780
    %1255 = vst [vmem:[#allocation2 + $0x648] sm:$0xff] %v905
    %1256 = vst.msk [vmem:[#allocation2 + $0x650] sm:$0xff] %vm1059, %v1030
    %1257 = vst [vmem:[#allocation2 + $0x658] sm:$0xff] %v283
    %1258 = vst [vmem:[#allocation2 + $0x660] sm:$0xff] %v408
    %1259 = vst [vmem:[#allocation2 + $0x668] sm:$0xff] %v533
    %1260 = vst [vmem:[#allocation2 + $0x670] sm:$0xff] %v658
    %1261 = vst [vmem:[#allocation2 + $0x678] sm:$0xff] %v783
    %1262 = vst [vmem:[#allocation2 + $0x680] sm:$0xff] %v908
    %1263 = vst.msk [vmem:[#allocation2 + $0x688] sm:$0xff] %vm1059, %v1033
    %1264 = vst [vmem:[#allocation2 + $0x690] sm:$0xff] %v286
    %1265 = vst [vmem:[#allocation2 + $0x698] sm:$0xff] %v411
    %1266 = vst [vmem:[#allocation2 + $0x6a0] sm:$0xff] %v536
    %1267 = vst [vmem:[#allocation2 + $0x6a8] sm:$0xff] %v661
    %1268 = vst [vmem:[#allocation2 + $0x6b0] sm:$0xff] %v786
    %1269 = vst [vmem:[#allocation2 + $0x6b8] sm:$0xff] %v911
    %1270 = vst.msk [vmem:[#allocation2 + $0x6c0] sm:$0xff] %vm1059, %v1036
    %1271 = vst [vmem:[#allocation2 + $0x6c8] sm:$0xff] %v289
    %1272 = vst [vmem:[#allocation2 + $0x6d0] sm:$0xff] %v414
    %1273 = vst [vmem:[#allocation2 + $0x6d8] sm:$0xff] %v539
    %1274 = vst [vmem:[#allocation2 + $0x6e0] sm:$0xff] %v664
    %1275 = vst [vmem:[#allocation2 + $0x6e8] sm:$0xff] %v789
    %1276 = vst [vmem:[#allocation2 + $0x6f0] sm:$0xff] %v914
    %1277 = vst.msk [vmem:[#allocation2 + $0x6f8] sm:$0xff] %vm1059, %v1039
    %1278 = vst [vmem:[#allocation2 + $0x700] sm:$0xff] %v292
    %1279 = vst [vmem:[#allocation2 + $0x708] sm:$0xff] %v417
    %1280 = vst [vmem:[#allocation2 + $0x710] sm:$0xff] %v542
    %1281 = vst [vmem:[#allocation2 + $0x718] sm:$0xff] %v667
    %1282 = vst [vmem:[#allocation2 + $0x720] sm:$0xff] %v792
    %1283 = vst [vmem:[#allocation2 + $0x728] sm:$0xff] %v917
    %1284 = vst.msk [vmem:[#allocation2 + $0x730] sm:$0xff] %vm1059, %v1042
    %1285 = vst [vmem:[#allocation2 + $0x738] sm:$0xff] %v295
    %1286 = vst [vmem:[#allocation2 + $0x740] sm:$0xff] %v420
    %1287 = vst [vmem:[#allocation2 + $0x748] sm:$0xff] %v545
    %1288 = vst [vmem:[#allocation2 + $0x750] sm:$0xff] %v670
    %1289 = vst [vmem:[#allocation2 + $0x758] sm:$0xff] %v795
    %1290 = vst [vmem:[#allocation2 + $0x760] sm:$0xff] %v920
    %1291 = vst.msk [vmem:[#allocation2 + $0x768] sm:$0xff] %vm1059, %v1045
    %1292 = vst [vmem:[#allocation2 + $0x770] sm:$0xff] %v298
    %1293 = vst [vmem:[#allocation2 + $0x778] sm:$0xff] %v423
    %1294 = vst [vmem:[#allocation2 + $0x780] sm:$0xff] %v548
    %1295 = vst [vmem:[#allocation2 + $0x788] sm:$0xff] %v673
    %1296 = vst [vmem:[#allocation2 + $0x790] sm:$0xff] %v798
    %1297 = vst [vmem:[#allocation2 + $0x798] sm:$0xff] %v923
    %1298 = vst.msk [vmem:[#allocation2 + $0x7a0] sm:$0xff] %vm1059, %v1048
    %1299 = vst [vmem:[#allocation2 + $0x7a8] sm:$0xff] %v301
    %1300 = vst [vmem:[#allocation2 + $0x7b0] sm:$0xff] %v426
    %1301 = vst [vmem:[#allocation2 + $0x7b8] sm:$0xff] %v551
    %1302 = vst [vmem:[#allocation2 + $0x7c0] sm:$0xff] %v676
    %1303 = vst [vmem:[#allocation2 + $0x7c8] sm:$0xff] %v801
    %1304 = vst [vmem:[#allocation2 + $0x7d0] sm:$0xff] %v926
    %1305 = vst.msk [vmem:[#allocation2 + $0x7d8] sm:$0xff] %vm1059, %v1051
    %1306 = vst [vmem:[#allocation3] sm:$0xff] 0.0
    %1307 = vst [vmem:[#allocation3 + $0x8] sm:$0xff] 0.0
    %1308 = vst [vmem:[#allocation3 + $0x10] sm:$0xff] 0.0
    %1309 = vst [vmem:[#allocation3 + $0x18] sm:$0xff] 0.0
    %1310 = vst [vmem:[#allocation3 + $0x20] sm:$0xff] 0.0
    %1311 = vst [vmem:[#allocation3 + $0x28] sm:$0xff] 0.0
    %1312 = vst [vmem:[#allocation3 + $0x30] sm:$0xff] 0.0
    %1313 = vst [vmem:[#allocation3 + $0x38] sm:$0xff] 0.0
    %1314 = vst [vmem:[#allocation3 + $0x40] sm:$0xff] 0.0
    %1315 = vst [vmem:[#allocation3 + $0x48] sm:$0xff] 0.0
    %1316 = vst [vmem:[#allocation3 + $0x50] sm:$0xff] 0.0
    %1317 = vst [vmem:[#allocation3 + $0x58] sm:$0xff] 0.0
    %1318 = vst [vmem:[#allocation3 + $0x60] sm:$0xff] 0.0
    %1319 = vst [vmem:[#allocation3 + $0x68] sm:$0xff] 0.0
    %1320 = vst [vmem:[#allocation3 + $0x70] sm:$0xff] 0.0
    %1321 = vst [vmem:[#allocation3 + $0x78] sm:$0xff] 0.0
    %1322 = vst [vmem:[#allocation3 + $0x80] sm:$0xff] 0.0
    %1323 = vst [vmem:[#allocation3 + $0x88] sm:$0xff] 0.0
    %1324 = vst [vmem:[#allocation3 + $0x90] sm:$0xff] 0.0
    %1325 = vst [vmem:[#allocation3 + $0x98] sm:$0xff] 0.0
    %1326 = vst [vmem:[#allocation3 + $0xa0] sm:$0xff] 0.0
    %1327 = vst [vmem:[#allocation3 + $0xa8] sm:$0xff] 0.0
    %1328 = vst [vmem:[#allocation3 + $0xb0] sm:$0xff] 0.0
    %1329 = vst [vmem:[#allocation3 + $0xb8] sm:$0xff] 0.0
    %1330 = vst [vmem:[#allocation3 + $0xc0] sm:$0xff] 0.0
    %1331 = vst [vmem:[#allocation3 + $0xc8] sm:$0xff] 0.0
    %1332 = vst [vmem:[#allocation3 + $0xd0] sm:$0xff] 0.0
    %1333 = vst [vmem:[#allocation3 + $0xd8] sm:$0xff] 0.0
    %1334 = vst [vmem:[#allocation3 + $0xe0] sm:$0xff] 0.0
    %1335 = vst [vmem:[#allocation3 + $0xe8] sm:$0xff] 0.0
    %1336 = vst [vmem:[#allocation3 + $0xf0] sm:$0xff] 0.0
    %1337 = vst [vmem:[#allocation3 + $0xf8] sm:$0xff] 0.0
    %v1338 = vld [vmem:[#allocation2] sm:$0xff]
    %v1339 = vld [vmem:[#allocation2 + $0x8] sm:$0xff]
    %v1340 = vld [vmem:[#allocation2 + $0x10] sm:$0xff]
    %v1341 = vld [vmem:[#allocation2 + $0x18] sm:$0xff]
    %v1342 = vld [vmem:[#allocation2 + $0x20] sm:$0xff]
    %v1343 = vld [vmem:[#allocation2 + $0x28] sm:$0xff]
    %v1344 = vld [vmem:[#allocation2 + $0x30] sm:$0xff]
    %v1345 = vld [vmem:[#allocation2 + $0x38] sm:$0xff]
    %v1346 = vld [vmem:[#allocation2 + $0x40] sm:$0xff]
    %v1347 = vld [vmem:[#allocation2 + $0x48] sm:$0xff]
    %v1348 = vld [vmem:[#allocation2 + $0x50] sm:$0xff]
    %v1349 = vld [vmem:[#allocation2 + $0x58] sm:$0xff]
    %v1350 = vld [vmem:[#allocation2 + $0x60] sm:$0xff]
    %v1351 = vld [vmem:[#allocation2 + $0x68] sm:$0xff]
    %v1352 = vld [vmem:[#allocation2 + $0x70] sm:$0xff]
    %v1353 = vld [vmem:[#allocation2 + $0x78] sm:$0xff]
    %v1354 = vld [vmem:[#allocation2 + $0x80] sm:$0xff]
    %v1355 = vld [vmem:[#allocation2 + $0x88] sm:$0xff]
    %v1356 = vld [vmem:[#allocation2 + $0x90] sm:$0xff]
    %v1357 = vld [vmem:[#allocation2 + $0x98] sm:$0xff]
    %v1358 = vld [vmem:[#allocation2 + $0xa0] sm:$0xff]
    %v1359 = vld [vmem:[#allocation2 + $0xa8] sm:$0xff]
    %v1360 = vld [vmem:[#allocation2 + $0xb0] sm:$0xff]
    %v1361 = vld [vmem:[#allocation2 + $0xb8] sm:$0xff]
    %v1362 = vld [vmem:[#allocation2 + $0xc0] sm:$0xff]
    %v1363 = vld [vmem:[#allocation2 + $0xc8] sm:$0xff]
    %v1364 = vld [vmem:[#allocation2 + $0xd0] sm:$0xff]
    %v1365 = vld [vmem:[#allocation2 + $0xd8] sm:$0xff]
    %v1366 = vld [vmem:[%s2] ss:$2 sm:$0x7f]
    %v1368 = vperm.slane %v1366, 0
    %v1369 = vperm.slane %v1366, 1
    %v1370 = vperm.slane %v1366, 2
    %v1371 = vperm.slane %v1366, 3
    %v1372 = vperm.slane %v1366, 4
    %v1373 = vperm.slane %v1366, 5
    %v1374 = vperm.slane %v1366, 6
    %v1382 = vmul.f32 %v1338, %v1368
    %v1383 = vmul.f32 %v1339, %v1369
    %v1384 = vmul.f32 %v1340, %v1370
    %v1385 = vmul.f32 %v1341, %v1371
    %v1386 = vmul.f32 %v1342, %v1372
    %v1387 = vmul.f32 %v1343, %v1373
    %v1388 = vmul.f32 %v1344, %v1374
    %v1389 = vmul.f32 %v1345, %v1368
    %v1390 = vmul.f32 %v1346, %v1369
    %v1391 = vmul.f32 %v1347, %v1370
    %v1392 = vmul.f32 %v1348, %v1371
    %v1393 = vmul.f32 %v1349, %v1372
    %v1394 = vmul.f32 %v1350, %v1373
    %v1395 = vmul.f32 %v1351, %v1374
    %v1396 = vmul.f32 %v1352, %v1368
    %v1397 = vmul.f32 %v1353, %v1369
    %v1398 = vmul.f32 %v1354, %v1370
    %v1399 = vmul.f32 %v1355, %v1371
    %v1400 = vmul.f32 %v1356, %v1372
    %v1401 = vmul.f32 %v1357, %v1373
    %v1402 = vmul.f32 %v1358, %v1374
    %v1403 = vmul.f32 %v1359, %v1368
    %v1404 = vmul.f32 %v1360, %v1369
    %v1405 = vmul.f32 %v1361, %v1370
    %v1406 = vmul.f32 %v1362, %v1371
    %v1407 = vmul.f32 %v1363, %v1372
    %v1408 = vmul.f32 %v1364, %v1373
    %v1409 = vmul.f32 %v1365, %v1374
    %v1410 = vld [vmem:[#allocation3 + $0x8] sm:$0xff]
    %v1411 = vld [vmem:[#allocation3 + $0x10] sm:$0xff]
    %v1412 = vld [vmem:[#allocation3 + $0x18] sm:$0xff]
    %v1413 = vld [vmem:[#allocation3 + $0x20] sm:$0xff]
    %v1414 = vld [vmem:[#allocation3 + $0x28] sm:$0xff]
    %v1415 = vld [vmem:[#allocation3 + $0x30] sm:$0xff]
    %v1416 = vld [vmem:[#allocation3 + $0x38] sm:$0xff]
    %v1417 = vld [vmem:[#allocation3 + $0x48] sm:$0xff]
    %v1418 = vld [vmem:[#allocation3 + $0x50] sm:$0xff]
    %v1419 = vld [vmem:[#allocation3 + $0x58] sm:$0xff]
    %v1420 = vld [vmem:[#allocation3 + $0x60] sm:$0xff]
    %v1421 = vld [vmem:[#allocation3 + $0x68] sm:$0xff]
    %v1422 = vld [vmem:[#allocation3 + $0x70] sm:$0xff]
    %v1423 = vld [vmem:[#allocation3 + $0x78] sm:$0xff]
    %v1424 = vld [vmem:[#allocation3 + $0x88] sm:$0xff]
    %v1425 = vld [vmem:[#allocation3 + $0x90] sm:$0xff]
    %v1426 = vld [vmem:[#allocation3 + $0x98] sm:$0xff]
    %v1427 = vld [vmem:[#allocation3 + $0xa0] sm:$0xff]
    %v1428 = vld [vmem:[#allocation3 + $0xa8] sm:$0xff]
    %v1429 = vld [vmem:[#allocation3 + $0xb0] sm:$0xff]
    %v1430 = vld [vmem:[#allocation3 + $0xb8] sm:$0xff]
    %v1431 = vld [vmem:[#allocation3 + $0xc8] sm:$0xff]
    %v1432 = vld [vmem:[#allocation3 + $0xd0] sm:$0xff]
    %v1433 = vld [vmem:[#allocation3 + $0xd8] sm:$0xff]
    %v1434 = vld [vmem:[#allocation3 + $0xe0] sm:$0xff]
    %v1435 = vld [vmem:[#allocation3 + $0xe8] sm:$0xff]
    %v1436 = vld [vmem:[#allocation3 + $0xf0] sm:$0xff]
    %v1437 = vld [vmem:[#allocation3 + $0xf8] sm:$0xff]
    %1466 = vrot.lane.b32.xlu0 %v1382, 29
    %v1467 = vpop.permute.xlu0 %1466
    %1468 = vrot.lane.b32.xlu0 %v1383, 29
    %v1469 = vpop.permute.xlu0 %1468
    %1470 = vrot.lane.b32.xlu0 %v1384, 29
    %v1471 = vpop.permute.xlu0 %1470
    %1472 = vrot.lane.b32.xlu0 %v1385, 29
    %v1473 = vpop.permute.xlu0 %1472
    %1474 = vrot.lane.b32.xlu0 %v1386, 29
    %v1475 = vpop.permute.xlu0 %1474
    %1476 = vrot.lane.b32.xlu0 %v1387, 29
    %v1477 = vpop.permute.xlu0 %1476
    %1478 = vrot.lane.b32.xlu0 %v1388, 29
    %v1479 = vpop.permute.xlu0 %1478
    %1480 = vrot.lane.b32.xlu0 %v1389, 29
    %v1481 = vpop.permute.xlu0 %1480
    %1482 = vrot.lane.b32.xlu0 %v1390, 29
    %v1483 = vpop.permute.xlu0 %1482
    %1484 = vrot.lane.b32.xlu0 %v1391, 29
    %v1485 = vpop.permute.xlu0 %1484
    %1486 = vrot.lane.b32.xlu0 %v1392, 29
    %v1487 = vpop.permute.xlu0 %1486
    %1488 = vrot.lane.b32.xlu0 %v1393, 29
    %v1489 = vpop.permute.xlu0 %1488
    %1490 = vrot.lane.b32.xlu0 %v1394, 29
    %v1491 = vpop.permute.xlu0 %1490
    %1492 = vrot.lane.b32.xlu0 %v1395, 29
    %v1493 = vpop.permute.xlu0 %1492
    %1494 = vrot.lane.b32.xlu0 %v1396, 29
    %v1495 = vpop.permute.xlu0 %1494
    %1496 = vrot.lane.b32.xlu0 %v1397, 29
    %v1497 = vpop.permute.xlu0 %1496
    %1498 = vrot.lane.b32.xlu0 %v1398, 29
    %v1499 = vpop.permute.xlu0 %1498
    %1500 = vrot.lane.b32.xlu0 %v1399, 29
    %v1501 = vpop.permute.xlu0 %1500
    %1502 = vrot.lane.b32.xlu0 %v1400, 29
    %v1503 = vpop.permute.xlu0 %1502
    %1504 = vrot.lane.b32.xlu0 %v1401, 29
    %v1505 = vpop.permute.xlu0 %1504
    %1506 = vrot.lane.b32.xlu0 %v1402, 29
    %v1507 = vpop.permute.xlu0 %1506
    %1508 = vrot.lane.b32.xlu0 %v1403, 29
    %v1509 = vpop.permute.xlu0 %1508
    %1510 = vrot.lane.b32.xlu0 %v1404, 29
    %v1511 = vpop.permute.xlu0 %1510
    %1512 = vrot.lane.b32.xlu0 %v1405, 29
    %v1513 = vpop.permute.xlu0 %1512
    %1514 = vrot.lane.b32.xlu0 %v1406, 29
    %v1515 = vpop.permute.xlu0 %1514
    %1516 = vrot.lane.b32.xlu0 %v1407, 29
    %v1517 = vpop.permute.xlu0 %1516
    %1518 = vrot.lane.b32.xlu0 %v1408, 29
    %v1519 = vpop.permute.xlu0 %1518
    %1520 = vrot.lane.b32.xlu0 %v1409, 29
    %v1521 = vpop.permute.xlu0 %1520
    %vm1522 = vcmask 236544
    %v1523 = vsel %vm1522, %v1467, %v1469
    %v1524 = vsel %vm1522, %v1469, %v1471
    %v1525 = vsel %vm1522, %v1471, %v1473
    %v1526 = vsel %vm1522, %v1473, %v1475
    %v1527 = vsel %vm1522, %v1475, %v1477
    %v1528 = vsel %vm1522, %v1477, %v1479
    %v1529 = vsel %vm1522, %v1481, %v1483
    %v1530 = vsel %vm1522, %v1483, %v1485
    %v1531 = vsel %vm1522, %v1485, %v1487
    %v1532 = vsel %vm1522, %v1487, %v1489
    %v1533 = vsel %vm1522, %v1489, %v1491
    %v1534 = vsel %vm1522, %v1491, %v1493
    %v1535 = vsel %vm1522, %v1495, %v1497
    %v1536 = vsel %vm1522, %v1497, %v1499
    %v1537 = vsel %vm1522, %v1499, %v1501
    %v1538 = vsel %vm1522, %v1501, %v1503
    %v1539 = vsel %vm1522, %v1503, %v1505
    %v1540 = vsel %vm1522, %v1505, %v1507
    %v1541 = vsel %vm1522, %v1509, %v1511
    %v1542 = vsel %vm1522, %v1511, %v1513
    %v1543 = vsel %vm1522, %v1513, %v1515
    %v1544 = vsel %vm1522, %v1515, %v1517
    %v1545 = vsel %vm1522, %v1517, %v1519
    %v1546 = vsel %vm1522, %v1519, %v1521
    %v1575 = vadd.f32 %v1410, %v1467
    %v1576 = vadd.f32 %v1411, %v1523
    %v1577 = vadd.f32 %v1412, %v1524
    %v1578 = vadd.f32 %v1413, %v1525
    %v1579 = vadd.f32 %v1414, %v1526
    %v1580 = vadd.f32 %v1415, %v1527
    %v1581 = vadd.f32 %v1416, %v1528
    %v1582 = vadd.f32 %v1417, %v1481
    %v1583 = vadd.f32 %v1418, %v1529
    %v1584 = vadd.f32 %v1419, %v1530
    %v1585 = vadd.f32 %v1420, %v1531
    %v1586 = vadd.f32 %v1421, %v1532
    %v1587 = vadd.f32 %v1422, %v1533
    %v1588 = vadd.f32 %v1423, %v1534
    %v1589 = vadd.f32 %v1424, %v1495
    %v1590 = vadd.f32 %v1425, %v1535
    %v1591 = vadd.f32 %v1426, %v1536
    %v1592 = vadd.f32 %v1427, %v1537
    %v1593 = vadd.f32 %v1428, %v1538
    %v1594 = vadd.f32 %v1429, %v1539
    %v1595 = vadd.f32 %v1430, %v1540
    %v1596 = vadd.f32 %v1431, %v1509
    %v1597 = vadd.f32 %v1432, %v1541
    %v1598 = vadd.f32 %v1433, %v1542
    %v1599 = vadd.f32 %v1434, %v1543
    %v1600 = vadd.f32 %v1435, %v1544
    %v1601 = vadd.f32 %v1436, %v1545
    %v1602 = vadd.f32 %v1437, %v1546
    %vm1603 = vcmask 1047784
    %1604 = vst.msk [vmem:[#allocation3 + $0x8] sm:$0xff] %vm1603, %v1575
    %1605 = vst [vmem:[#allocation3 + $0x10] sm:$0xff] %v1576
    %1606 = vst [vmem:[#allocation3 + $0x18] sm:$0xff] %v1577
    %1607 = vst [vmem:[#allocation3 + $0x20] sm:$0xff] %v1578
    %1608 = vst [vmem:[#allocation3 + $0x28] sm:$0xff] %v1579
    %1609 = vst [vmem:[#allocation3 + $0x30] sm:$0xff] %v1580
    %vm1610 = vcmask 367616
    %1611 = vst.msk [vmem:[#allocation3 + $0x38] sm:$0xff] %vm1610, %v1581
    %1612 = vst.msk [vmem:[#allocation3 + $0x48] sm:$0xff] %vm1603, %v1582
    %1613 = vst [vmem:[#allocation3 + $0x50] sm:$0xff] %v1583
    %1614 = vst [vmem:[#allocation3 + $0x58] sm:$0xff] %v1584
    %1615 = vst [vmem:[#allocation3 + $0x60] sm:$0xff] %v1585
    %1616 = vst [vmem:[#allocation3 + $0x68] sm:$0xff] %v1586
    %1617 = vst [vmem:[#allocation3 + $0x70] sm:$0xff] %v1587
    %1618 = vst.msk [vmem:[#allocation3 + $0x78] sm:$0xff] %vm1610, %v1588
    %1619 = vst.msk [vmem:[#allocation3 + $0x88] sm:$0xff] %vm1603, %v1589
    %1620 = vst [vmem:[#allocation3 + $0x90] sm:$0xff] %v1590
    %1621 = vst [vmem:[#allocation3 + $0x98] sm:$0xff] %v1591
    %1622 = vst [vmem:[#allocation3 + $0xa0] sm:$0xff] %v1592
    %1623 = vst [vmem:[#allocation3 + $0xa8] sm:$0xff] %v1593
    %1624 = vst [vmem:[#allocation3 + $0xb0] sm:$0xff] %v1594
    %1625 = vst.msk [vmem:[#allocation3 + $0xb8] sm:$0xff] %vm1610, %v1595
    %1626 = vst.msk [vmem:[#allocation3 + $0xc8] sm:$0xff] %vm1603, %v1596
    %1627 = vst [vmem:[#allocation3 + $0xd0] sm:$0xff] %v1597
    %1628 = vst [vmem:[#allocation3 + $0xd8] sm:$0xff] %v1598
    %1629 = vst [vmem:[#allocation3 + $0xe0] sm:$0xff] %v1599
    %1630 = vst [vmem:[#allocation3 + $0xe8] sm:$0xff] %v1600
    %1631 = vst [vmem:[#allocation3 + $0xf0] sm:$0xff] %v1601
    %1632 = vst.msk [vmem:[#allocation3 + $0xf8] sm:$0xff] %vm1610, %v1602
    %v1633 = vld [vmem:[#allocation2 + $0xe0] sm:$0xff]
    %v1634 = vld [vmem:[#allocation2 + $0xe8] sm:$0xff]
    %v1635 = vld [vmem:[#allocation2 + $0xf0] sm:$0xff]
    %v1636 = vld [vmem:[#allocation2 + $0xf8] sm:$0xff]
    %v1637 = vld [vmem:[#allocation2 + $0x100] sm:$0xff]
    %v1638 = vld [vmem:[#allocation2 + $0x108] sm:$0xff]
    %v1639 = vld [vmem:[#allocation2 + $0x110] sm:$0xff]
    %v1640 = vld [vmem:[#allocation2 + $0x118] sm:$0xff]
    %v1641 = vld [vmem:[#allocation2 + $0x120] sm:$0xff]
    %v1642 = vld [vmem:[#allocation2 + $0x128] sm:$0xff]
    %v1643 = vld [vmem:[#allocation2 + $0x130] sm:$0xff]
    %v1644 = vld [vmem:[#allocation2 + $0x138] sm:$0xff]
    %v1645 = vld [vmem:[#allocation2 + $0x140] sm:$0xff]
    %v1646 = vld [vmem:[#allocation2 + $0x148] sm:$0xff]
    %v1647 = vld [vmem:[#allocation2 + $0x150] sm:$0xff]
    %v1648 = vld [vmem:[#allocation2 + $0x158] sm:$0xff]
    %v1649 = vld [vmem:[#allocation2 + $0x160] sm:$0xff]
    %v1650 = vld [vmem:[#allocation2 + $0x168] sm:$0xff]
    %v1651 = vld [vmem:[#allocation2 + $0x170] sm:$0xff]
    %v1652 = vld [vmem:[#allocation2 + $0x178] sm:$0xff]
    %v1653 = vld [vmem:[#allocation2 + $0x180] sm:$0xff]
    %v1654 = vld [vmem:[#allocation2 + $0x188] sm:$0xff]
    %v1655 = vld [vmem:[#allocation2 + $0x190] sm:$0xff]
    %v1656 = vld [vmem:[#allocation2 + $0x198] sm:$0xff]
    %v1657 = vld [vmem:[#allocation2 + $0x1a0] sm:$0xff]
    %v1658 = vld [vmem:[#allocation2 + $0x1a8] sm:$0xff]
    %v1659 = vld [vmem:[#allocation2 + $0x1b0] sm:$0xff]
    %v1660 = vld [vmem:[#allocation2 + $0x1b8] sm:$0xff]
    %v1661 = vld [vmem:[#allocation3 + $0x8] sm:$0xff]
    %v1662 = vld [vmem:[#allocation3 + $0x10] sm:$0xff]
    %v1663 = vld [vmem:[#allocation3 + $0x18] sm:$0xff]
    %v1664 = vld [vmem:[#allocation3 + $0x20] sm:$0xff]
    %v1665 = vld [vmem:[#allocation3 + $0x28] sm:$0xff]
    %v1666 = vld [vmem:[#allocation3 + $0x30] sm:$0xff]
    %v1667 = vld [vmem:[#allocation3 + $0x38] sm:$0xff]
    %v1668 = vld [vmem:[#allocation3 + $0x48] sm:$0xff]
    %v1669 = vld [vmem:[#allocation3 + $0x50] sm:$0xff]
    %v1670 = vld [vmem:[#allocation3 + $0x58] sm:$0xff]
    %v1671 = vld [vmem:[#allocation3 + $0x60] sm:$0xff]
    %v1672 = vld [vmem:[#allocation3 + $0x68] sm:$0xff]
    %v1673 = vld [vmem:[#allocation3 + $0x70] sm:$0xff]
    %v1674 = vld [vmem:[#allocation3 + $0x78] sm:$0xff]
    %v1675 = vld [vmem:[#allocation3 + $0x88] sm:$0xff]
    %v1676 = vld [vmem:[#allocation3 + $0x90] sm:$0xff]
    %v1677 = vld [vmem:[#allocation3 + $0x98] sm:$0xff]
    %v1678 = vld [vmem:[#allocation3 + $0xa0] sm:$0xff]
    %v1679 = vld [vmem:[#allocation3 + $0xa8] sm:$0xff]
    %v1680 = vld [vmem:[#allocation3 + $0xb0] sm:$0xff]
    %v1681 = vld [vmem:[#allocation3 + $0xb8] sm:$0xff]
    %v1682 = vld [vmem:[#allocation3 + $0xc8] sm:$0xff]
    %v1683 = vld [vmem:[#allocation3 + $0xd0] sm:$0xff]
    %v1684 = vld [vmem:[#allocation3 + $0xd8] sm:$0xff]
    %v1685 = vld [vmem:[#allocation3 + $0xe0] sm:$0xff]
    %v1686 = vld [vmem:[#allocation3 + $0xe8] sm:$0xff]
    %v1687 = vld [vmem:[#allocation3 + $0xf0] sm:$0xff]
    %v1688 = vld [vmem:[#allocation3 + $0xf8] sm:$0xff]
    %1717 = vrot.lane.b32.xlu0 %v1633, 28
    %v1718 = vpop.permute.xlu0 %1717
    %1719 = vrot.lane.b32.xlu0 %v1634, 28
    %v1720 = vpop.permute.xlu0 %1719
    %1721 = vrot.lane.b32.xlu0 %v1635, 28
    %v1722 = vpop.permute.xlu0 %1721
    %1723 = vrot.lane.b32.xlu0 %v1636, 28
    %v1724 = vpop.permute.xlu0 %1723
    %1725 = vrot.lane.b32.xlu0 %v1637, 28
    %v1726 = vpop.permute.xlu0 %1725
    %1727 = vrot.lane.b32.xlu0 %v1638, 28
    %v1728 = vpop.permute.xlu0 %1727
    %1729 = vrot.lane.b32.xlu0 %v1639, 28
    %v1730 = vpop.permute.xlu0 %1729
    %1731 = vrot.lane.b32.xlu0 %v1640, 28
    %v1732 = vpop.permute.xlu0 %1731
    %1733 = vrot.lane.b32.xlu0 %v1641, 28
    %v1734 = vpop.permute.xlu0 %1733
    %1735 = vrot.lane.b32.xlu0 %v1642, 28
    %v1736 = vpop.permute.xlu0 %1735
    %1737 = vrot.lane.b32.xlu0 %v1643, 28
    %v1738 = vpop.permute.xlu0 %1737
    %1739 = vrot.lane.b32.xlu0 %v1644, 28
    %v1740 = vpop.permute.xlu0 %1739
    %1741 = vrot.lane.b32.xlu0 %v1645, 28
    %v1742 = vpop.permute.xlu0 %1741
    %1743 = vrot.lane.b32.xlu0 %v1646, 28
    %v1744 = vpop.permute.xlu0 %1743
    %1745 = vrot.lane.b32.xlu0 %v1647, 28
    %v1746 = vpop.permute.xlu0 %1745
    %1747 = vrot.lane.b32.xlu0 %v1648, 28
    %v1748 = vpop.permute.xlu0 %1747
    %1749 = vrot.lane.b32.xlu0 %v1649, 28
    %v1750 = vpop.permute.xlu0 %1749
    %1751 = vrot.lane.b32.xlu0 %v1650, 28
    %v1752 = vpop.permute.xlu0 %1751
    %1753 = vrot.lane.b32.xlu0 %v1651, 28
    %v1754 = vpop.permute.xlu0 %1753
    %1755 = vrot.lane.b32.xlu0 %v1652, 28
    %v1756 = vpop.permute.xlu0 %1755
    %1757 = vrot.lane.b32.xlu0 %v1653, 28
    %v1758 = vpop.permute.xlu0 %1757
    %1759 = vrot.lane.b32.xlu0 %v1654, 28
    %v1760 = vpop.permute.xlu0 %1759
    %1761 = vrot.lane.b32.xlu0 %v1655, 28
    %v1762 = vpop.permute.xlu0 %1761
    %1763 = vrot.lane.b32.xlu0 %v1656, 28
    %v1764 = vpop.permute.xlu0 %1763
    %1765 = vrot.lane.b32.xlu0 %v1657, 28
    %v1766 = vpop.permute.xlu0 %1765
    %1767 = vrot.lane.b32.xlu0 %v1658, 28
    %v1768 = vpop.permute.xlu0 %1767
    %1769 = vrot.lane.b32.xlu0 %v1659, 28
    %v1770 = vpop.permute.xlu0 %1769
    %1771 = vrot.lane.b32.xlu0 %v1660, 28
    %v1772 = vpop.permute.xlu0 %1771
    %vm1773 = vcmask 228352
    %v1774 = vsel %vm1773, %v1718, %v1720
    %v1775 = vsel %vm1773, %v1720, %v1722
    %v1776 = vsel %vm1773, %v1722, %v1724
    %v1777 = vsel %vm1773, %v1724, %v1726
    %v1778 = vsel %vm1773, %v1726, %v1728
    %v1779 = vsel %vm1773, %v1728, %v1730
    %v1780 = vsel %vm1773, %v1732, %v1734
    %v1781 = vsel %vm1773, %v1734, %v1736
    %v1782 = vsel %vm1773, %v1736, %v1738
    %v1783 = vsel %vm1773, %v1738, %v1740
    %v1784 = vsel %vm1773, %v1740, %v1742
    %v1785 = vsel %vm1773, %v1742, %v1744
    %v1786 = vsel %vm1773, %v1746, %v1748
    %v1787 = vsel %vm1773, %v1748, %v1750
    %v1788 = vsel %vm1773, %v1750, %v1752
    %v1789 = vsel %vm1773, %v1752, %v1754
    %v1790 = vsel %vm1773, %v1754, %v1756
    %v1791 = vsel %vm1773, %v1756, %v1758
    %v1792 = vsel %vm1773, %v1760, %v1762
    %v1793 = vsel %vm1773, %v1762, %v1764
    %v1794 = vsel %vm1773, %v1764, %v1766
    %v1795 = vsel %vm1773, %v1766, %v1768
    %v1796 = vsel %vm1773, %v1768, %v1770
    %v1797 = vsel %vm1773, %v1770, %v1772
    %v1826 = vadd.f32 %v1661, %v1718
    %v1827 = vadd.f32 %v1662, %v1774
    %v1828 = vadd.f32 %v1663, %v1775
    %v1829 = vadd.f32 %v1664, %v1776
    %v1830 = vadd.f32 %v1665, %v1777
    %v1831 = vadd.f32 %v1666, %v1778
    %v1832 = vadd.f32 %v1667, %v1779
    %v1833 = vadd.f32 %v1668, %v1732
    %v1834 = vadd.f32 %v1669, %v1780
    %v1835 = vadd.f32 %v1670, %v1781
    %v1836 = vadd.f32 %v1671, %v1782
    %v1837 = vadd.f32 %v1672, %v1783
    %v1838 = vadd.f32 %v1673, %v1784
    %v1839 = vadd.f32 %v1674, %v1785
    %v1840 = vadd.f32 %v1675, %v1746
    %v1841 = vadd.f32 %v1676, %v1786
    %v1842 = vadd.f32 %v1677, %v1787
    %v1843 = vadd.f32 %v1678, %v1788
    %v1844 = vadd.f32 %v1679, %v1789
    %v1845 = vadd.f32 %v1680, %v1790
    %v1846 = vadd.f32 %v1681, %v1791
    %v1847 = vadd.f32 %v1682, %v1760
    %v1848 = vadd.f32 %v1683, %v1792
    %v1849 = vadd.f32 %v1684, %v1793
    %v1850 = vadd.f32 %v1685, %v1794
    %v1851 = vadd.f32 %v1686, %v1795
    %v1852 = vadd.f32 %v1687, %v1796
    %v1853 = vadd.f32 %v1688, %v1797
    %vm1854 = vcmask 1047776
    %1855 = vst.msk [vmem:[#allocation3 + $0x8] sm:$0xff] %vm1854, %v1826
    %1856 = vst [vmem:[#allocation3 + $0x10] sm:$0xff] %v1827
    %1857 = vst [vmem:[#allocation3 + $0x18] sm:$0xff] %v1828
    %1858 = vst [vmem:[#allocation3 + $0x20] sm:$0xff] %v1829
    %1859 = vst [vmem:[#allocation3 + $0x28] sm:$0xff] %v1830
    %1860 = vst [vmem:[#allocation3 + $0x30] sm:$0xff] %v1831
    %vm1861 = vcmask 359424
    %1862 = vst.msk [vmem:[#allocation3 + $0x38] sm:$0xff] %vm1861, %v1832
    %1863 = vst.msk [vmem:[#allocation3 + $0x48] sm:$0xff] %vm1854, %v1833
    %1864 = vst [vmem:[#allocation3 + $0x50] sm:$0xff] %v1834
    %1865 = vst [vmem:[#allocation3 + $0x58] sm:$0xff] %v1835
    %1866 = vst [vmem:[#allocation3 + $0x60] sm:$0xff] %v1836
    %1867 = vst [vmem:[#allocation3 + $0x68] sm:$0xff] %v1837
    %1868 = vst [vmem:[#allocation3 + $0x70] sm:$0xff] %v1838
    %1869 = vst.msk [vmem:[#allocation3 + $0x78] sm:$0xff] %vm1861, %v1839
    %1870 = vst.msk [vmem:[#allocation3 + $0x88] sm:$0xff] %vm1854, %v1840
    %1871 = vst [vmem:[#allocation3 + $0x90] sm:$0xff] %v1841
    %1872 = vst [vmem:[#allocation3 + $0x98] sm:$0xff] %v1842
    %1873 = vst [vmem:[#allocation3 + $0xa0] sm:$0xff] %v1843
    %1874 = vst [vmem:[#allocation3 + $0xa8] sm:$0xff] %v1844
    %1875 = vst [vmem:[#allocation3 + $0xb0] sm:$0xff] %v1845
    %1876 = vst.msk [vmem:[#allocation3 + $0xb8] sm:$0xff] %vm1861, %v1846
    %1877 = vst.msk [vmem:[#allocation3 + $0xc8] sm:$0xff] %vm1854, %v1847
    %1878 = vst [vmem:[#allocation3 + $0xd0] sm:$0xff] %v1848
    %1879 = vst [vmem:[#allocation3 + $0xd8] sm:$0xff] %v1849
    %1880 = vst [vmem:[#allocation3 + $0xe0] sm:$0xff] %v1850
    %1881 = vst [vmem:[#allocation3 + $0xe8] sm:$0xff] %v1851
    %1882 = vst [vmem:[#allocation3 + $0xf0] sm:$0xff] %v1852
    %1883 = vst.msk [vmem:[#allocation3 + $0xf8] sm:$0xff] %vm1861, %v1853
    %v1884 = vld [vmem:[#allocation2 + $0x1c0] sm:$0xff]
    %v1885 = vld [vmem:[#allocation2 + $0x1c8] sm:$0xff]
    %v1886 = vld [vmem:[#allocation2 + $0x1d0] sm:$0xff]
    %v1887 = vld [vmem:[#allocation2 + $0x1d8] sm:$0xff]
    %v1888 = vld [vmem:[#allocation2 + $0x1e0] sm:$0xff]
    %v1889 = vld [vmem:[#allocation2 + $0x1e8] sm:$0xff]
    %v1890 = vld [vmem:[#allocation2 + $0x1f0] sm:$0xff]
    %v1891 = vld [vmem:[#allocation2 + $0x1f8] sm:$0xff]
    %v1892 = vld [vmem:[#allocation2 + $0x200] sm:$0xff]
    %v1893 = vld [vmem:[#allocation2 + $0x208] sm:$0xff]
    %v1894 = vld [vmem:[#allocation2 + $0x210] sm:$0xff]
    %v1895 = vld [vmem:[#allocation2 + $0x218] sm:$0xff]
    %v1896 = vld [vmem:[#allocation2 + $0x220] sm:$0xff]
    %v1897 = vld [vmem:[#allocation2 + $0x228] sm:$0xff]
    %v1898 = vld [vmem:[#allocation2 + $0x230] sm:$0xff]
    %v1899 = vld [vmem:[#allocation2 + $0x238] sm:$0xff]
    %v1900 = vld [vmem:[#allocation2 + $0x240] sm:$0xff]
    %v1901 = vld [vmem:[#allocation2 + $0x248] sm:$0xff]
    %v1902 = vld [vmem:[#allocation2 + $0x250] sm:$0xff]
    %v1903 = vld [vmem:[#allocation2 + $0x258] sm:$0xff]
    %v1904 = vld [vmem:[#allocation2 + $0x260] sm:$0xff]
    %v1905 = vld [vmem:[#allocation2 + $0x268] sm:$0xff]
    %v1906 = vld [vmem:[#allocation2 + $0x270] sm:$0xff]
    %v1907 = vld [vmem:[#allocation2 + $0x278] sm:$0xff]
    %v1908 = vld [vmem:[#allocation2 + $0x280] sm:$0xff]
    %v1909 = vld [vmem:[#allocation2 + $0x288] sm:$0xff]
    %v1910 = vld [vmem:[#allocation2 + $0x290] sm:$0xff]
    %v1911 = vld [vmem:[#allocation2 + $0x298] sm:$0xff]
    %s1912 = scalar_lea.vmem %s2, 1
    %v1913 = vld [vmem:[%s1912] ss:$2 sm:$0x7f]
    %v1915 = vperm.slane %v1913, 0
    %v1916 = vperm.slane %v1913, 1
    %v1917 = vperm.slane %v1913, 2
    %v1918 = vperm.slane %v1913, 3
    %v1919 = vperm.slane %v1913, 4
    %v1920 = vperm.slane %v1913, 5
    %v1921 = vperm.slane %v1913, 6
    %v1929 = vmul.f32 %v1884, %v1915
    %v1930 = vmul.f32 %v1885, %v1916
    %v1931 = vmul.f32 %v1886, %v1917
    %v1932 = vmul.f32 %v1887, %v1918
    %v1933 = vmul.f32 %v1888, %v1919
    %v1934 = vmul.f32 %v1889, %v1920
    %v1935 = vmul.f32 %v1890, %v1921
    %v1936 = vmul.f32 %v1891, %v1915
    %v1937 = vmul.f32 %v1892, %v1916
    %v1938 = vmul.f32 %v1893, %v1917
    %v1939 = vmul.f32 %v1894, %v1918
    %v1940 = vmul.f32 %v1895, %v1919
    %v1941 = vmul.f32 %v1896, %v1920
    %v1942 = vmul.f32 %v1897, %v1921
    %v1943 = vmul.f32 %v1898, %v1915
    %v1944 = vmul.f32 %v1899, %v1916
    %v1945 = vmul.f32 %v1900, %v1917
    %v1946 = vmul.f32 %v1901, %v1918
    %v1947 = vmul.f32 %v1902, %v1919
    %v1948 = vmul.f32 %v1903, %v1920
    %v1949 = vmul.f32 %v1904, %v1921
    %v1950 = vmul.f32 %v1905, %v1915
    %v1951 = vmul.f32 %v1906, %v1916
    %v1952 = vmul.f32 %v1907, %v1917
    %v1953 = vmul.f32 %v1908, %v1918
    %v1954 = vmul.f32 %v1909, %v1919
    %v1955 = vmul.f32 %v1910, %v1920
    %v1956 = vmul.f32 %v1911, %v1921
    %v1957 = vld [vmem:[#allocation3 + $0x8] sm:$0xff]
    %v1958 = vld [vmem:[#allocation3 + $0x10] sm:$0xff]
    %v1959 = vld [vmem:[#allocation3 + $0x18] sm:$0xff]
    %v1960 = vld [vmem:[#allocation3 + $0x20] sm:$0xff]
    %v1961 = vld [vmem:[#allocation3 + $0x28] sm:$0xff]
    %v1962 = vld [vmem:[#allocation3 + $0x30] sm:$0xff]
    %v1963 = vld [vmem:[#allocation3 + $0x38] sm:$0xff]
    %v1964 = vld [vmem:[#allocation3 + $0x48] sm:$0xff]
    %v1965 = vld [vmem:[#allocation3 + $0x50] sm:$0xff]
    %v1966 = vld [vmem:[#allocation3 + $0x58] sm:$0xff]
    %v1967 = vld [vmem:[#allocation3 + $0x60] sm:$0xff]
    %v1968 = vld [vmem:[#allocation3 + $0x68] sm:$0xff]
    %v1969 = vld [vmem:[#allocation3 + $0x70] sm:$0xff]
    %v1970 = vld [vmem:[#allocation3 + $0x78] sm:$0xff]
    %v1971 = vld [vmem:[#allocation3 + $0x88] sm:$0xff]
    %v1972 = vld [vmem:[#allocation3 + $0x90] sm:$0xff]
    %v1973 = vld [vmem:[#allocation3 + $0x98] sm:$0xff]
    %v1974 = vld [vmem:[#allocation3 + $0xa0] sm:$0xff]
    %v1975 = vld [vmem:[#allocation3 + $0xa8] sm:$0xff]
    %v1976 = vld [vmem:[#allocation3 + $0xb0] sm:$0xff]
    %v1977 = vld [vmem:[#allocation3 + $0xb8] sm:$0xff]
    %v1978 = vld [vmem:[#allocation3 + $0xc8] sm:$0xff]
    %v1979 = vld [vmem:[#allocation3 + $0xd0] sm:$0xff]
    %v1980 = vld [vmem:[#allocation3 + $0xd8] sm:$0xff]
    %v1981 = vld [vmem:[#allocation3 + $0xe0] sm:$0xff]
    %v1982 = vld [vmem:[#allocation3 + $0xe8] sm:$0xff]
    %v1983 = vld [vmem:[#allocation3 + $0xf0] sm:$0xff]
    %v1984 = vld [vmem:[#allocation3 + $0xf8] sm:$0xff]
    %2013 = vrot.lane.b32.xlu0 %v1929, 27
    %v2014 = vpop.permute.xlu0 %2013
    %2015 = vrot.lane.b32.xlu0 %v1930, 27
    %v2016 = vpop.permute.xlu0 %2015
    %2017 = vrot.lane.b32.xlu0 %v1931, 27
    %v2018 = vpop.permute.xlu0 %2017
    %2019 = vrot.lane.b32.xlu0 %v1932, 27
    %v2020 = vpop.permute.xlu0 %2019
    %2021 = vrot.lane.b32.xlu0 %v1933, 27
    %v2022 = vpop.permute.xlu0 %2021
    %2023 = vrot.lane.b32.xlu0 %v1934, 27
    %v2024 = vpop.permute.xlu0 %2023
    %2025 = vrot.lane.b32.xlu0 %v1935, 27
    %v2026 = vpop.permute.xlu0 %2025
    %2027 = vrot.lane.b32.xlu0 %v1936, 27
    %v2028 = vpop.permute.xlu0 %2027
    %2029 = vrot.lane.b32.xlu0 %v1937, 27
    %v2030 = vpop.permute.xlu0 %2029
    %2031 = vrot.lane.b32.xlu0 %v1938, 27
    %v2032 = vpop.permute.xlu0 %2031
    %2033 = vrot.lane.b32.xlu0 %v1939, 27
    %v2034 = vpop.permute.xlu0 %2033
    %2035 = vrot.lane.b32.xlu0 %v1940, 27
    %v2036 = vpop.permute.xlu0 %2035
    %2037 = vrot.lane.b32.xlu0 %v1941, 27
    %v2038 = vpop.permute.xlu0 %2037
    %2039 = vrot.lane.b32.xlu0 %v1942, 27
    %v2040 = vpop.permute.xlu0 %2039
    %2041 = vrot.lane.b32.xlu0 %v1943, 27
    %v2042 = vpop.permute.xlu0 %2041
    %2043 = vrot.lane.b32.xlu0 %v1944, 27
    %v2044 = vpop.permute.xlu0 %2043
    %2045 = vrot.lane.b32.xlu0 %v1945, 27
    %v2046 = vpop.permute.xlu0 %2045
    %2047 = vrot.lane.b32.xlu0 %v1946, 27
    %v2048 = vpop.permute.xlu0 %2047
    %2049 = vrot.lane.b32.xlu0 %v1947, 27
    %v2050 = vpop.permute.xlu0 %2049
    %2051 = vrot.lane.b32.xlu0 %v1948, 27
    %v2052 = vpop.permute.xlu0 %2051
    %2053 = vrot.lane.b32.xlu0 %v1949, 27
    %v2054 = vpop.permute.xlu0 %2053
    %2055 = vrot.lane.b32.xlu0 %v1950, 27
    %v2056 = vpop.permute.xlu0 %2055
    %2057 = vrot.lane.b32.xlu0 %v1951, 27
    %v2058 = vpop.permute.xlu0 %2057
    %2059 = vrot.lane.b32.xlu0 %v1952, 27
    %v2060 = vpop.permute.xlu0 %2059
    %2061 = vrot.lane.b32.xlu0 %v1953, 27
    %v2062 = vpop.permute.xlu0 %2061
    %2063 = vrot.lane.b32.xlu0 %v1954, 27
    %v2064 = vpop.permute.xlu0 %2063
    %2065 = vrot.lane.b32.xlu0 %v1955, 27
    %v2066 = vpop.permute.xlu0 %2065
    %2067 = vrot.lane.b32.xlu0 %v1956, 27
    %v2068 = vpop.permute.xlu0 %2067
    %vm2069 = vcmask 220160
    %v2070 = vsel %vm2069, %v2014, %v2016
    %v2071 = vsel %vm2069, %v2016, %v2018
    %v2072 = vsel %vm2069, %v2018, %v2020
    %v2073 = vsel %vm2069, %v2020, %v2022
    %v2074 = vsel %vm2069, %v2022, %v2024
    %v2075 = vsel %vm2069, %v2024, %v2026
    %v2076 = vsel %vm2069, %v2028, %v2030
    %v2077 = vsel %vm2069, %v2030, %v2032
    %v2078 = vsel %vm2069, %v2032, %v2034
    %v2079 = vsel %vm2069, %v2034, %v2036
    %v2080 = vsel %vm2069, %v2036, %v2038
    %v2081 = vsel %vm2069, %v2038, %v2040
    %v2082 = vsel %vm2069, %v2042, %v2044
    %v2083 = vsel %vm2069, %v2044, %v2046
    %v2084 = vsel %vm2069, %v2046, %v2048
    %v2085 = vsel %vm2069, %v2048, %v2050
    %v2086 = vsel %vm2069, %v2050, %v2052
    %v2087 = vsel %vm2069, %v2052, %v2054
    %v2088 = vsel %vm2069, %v2056, %v2058
    %v2089 = vsel %vm2069, %v2058, %v2060
    %v2090 = vsel %vm2069, %v2060, %v2062
    %v2091 = vsel %vm2069, %v2062, %v2064
    %v2092 = vsel %vm2069, %v2064, %v2066
    %v2093 = vsel %vm2069, %v2066, %v2068
    %v2122 = vadd.f32 %v1957, %v2014
    %v2123 = vadd.f32 %v1958, %v2070
    %v2124 = vadd.f32 %v1959, %v2071
    %v2125 = vadd.f32 %v1960, %v2072
    %v2126 = vadd.f32 %v1961, %v2073
    %v2127 = vadd.f32 %v1962, %v2074
    %v2128 = vadd.f32 %v1963, %v2075
    %v2129 = vadd.f32 %v1964, %v2028
    %v2130 = vadd.f32 %v1965, %v2076
    %v2131 = vadd.f32 %v1966, %v2077
    %v2132 = vadd.f32 %v1967, %v2078
    %v2133 = vadd.f32 %v1968, %v2079
    %v2134 = vadd.f32 %v1969, %v2080
    %v2135 = vadd.f32 %v1970, %v2081
    %v2136 = vadd.f32 %v1971, %v2042
    %v2137 = vadd.f32 %v1972, %v2082
    %v2138 = vadd.f32 %v1973, %v2083
    %v2139 = vadd.f32 %v1974, %v2084
    %v2140 = vadd.f32 %v1975, %v2085
    %v2141 = vadd.f32 %v1976, %v2086
    %v2142 = vadd.f32 %v1977, %v2087
    %v2143 = vadd.f32 %v1978, %v2056
    %v2144 = vadd.f32 %v1979, %v2088
    %v2145 = vadd.f32 %v1980, %v2089
    %v2146 = vadd.f32 %v1981, %v2090
    %v2147 = vadd.f32 %v1982, %v2091
    %v2148 = vadd.f32 %v1983, %v2092
    %v2149 = vadd.f32 %v1984, %v2093
    %vm2150 = vcmask 1047768
    %2151 = vst.msk [vmem:[#allocation3 + $0x8] sm:$0xff] %vm2150, %v2122
    %2152 = vst [vmem:[#allocation3 + $0x10] sm:$0xff] %v2123
    %2153 = vst [vmem:[#allocation3 + $0x18] sm:$0xff] %v2124
    %2154 = vst [vmem:[#allocation3 + $0x20] sm:$0xff] %v2125
    %2155 = vst [vmem:[#allocation3 + $0x28] sm:$0xff] %v2126
    %2156 = vst [vmem:[#allocation3 + $0x30] sm:$0xff] %v2127
    %vm2157 = vcmask 351232
    %2158 = vst.msk [vmem:[#allocation3 + $0x38] sm:$0xff] %vm2157, %v2128
    %2159 = vst.msk [vmem:[#allocation3 + $0x48] sm:$0xff] %vm2150, %v2129
    %2160 = vst [vmem:[#allocation3 + $0x50] sm:$0xff] %v2130
    %2161 = vst [vmem:[#allocation3 + $0x58] sm:$0xff] %v2131
    %2162 = vst [vmem:[#allocation3 + $0x60] sm:$0xff] %v2132
    %2163 = vst [vmem:[#allocation3 + $0x68] sm:$0xff] %v2133
    %2164 = vst [vmem:[#allocation3 + $0x70] sm:$0xff] %v2134
    %2165 = vst.msk [vmem:[#allocation3 + $0x78] sm:$0xff] %vm2157, %v2135
    %2166 = vst.msk [vmem:[#allocation3 + $0x88] sm:$0xff] %vm2150, %v2136
    %2167 = vst [vmem:[#allocation3 + $0x90] sm:$0xff] %v2137
    %2168 = vst [vmem:[#allocation3 + $0x98] sm:$0xff] %v2138
    %2169 = vst [vmem:[#allocation3 + $0xa0] sm:$0xff] %v2139
    %2170 = vst [vmem:[#allocation3 + $0xa8] sm:$0xff] %v2140
    %2171 = vst [vmem:[#allocation3 + $0xb0] sm:$0xff] %v2141
    %2172 = vst.msk [vmem:[#allocation3 + $0xb8] sm:$0xff] %vm2157, %v2142
    %2173 = vst.msk [vmem:[#allocation3 + $0xc8] sm:$0xff] %vm2150, %v2143
    %2174 = vst [vmem:[#allocation3 + $0xd0] sm:$0xff] %v2144
    %2175 = vst [vmem:[#allocation3 + $0xd8] sm:$0xff] %v2145
    %2176 = vst [vmem:[#allocation3 + $0xe0] sm:$0xff] %v2146
    %2177 = vst [vmem:[#allocation3 + $0xe8] sm:$0xff] %v2147
    %2178 = vst [vmem:[#allocation3 + $0xf0] sm:$0xff] %v2148
    %2179 = vst.msk [vmem:[#allocation3 + $0xf8] sm:$0xff] %vm2157, %v2149
    %v2180 = vld [vmem:[#allocation2 + $0x2a0] sm:$0xff]
    %v2181 = vld [vmem:[#allocation2 + $0x2a8] sm:$0xff]
    %v2182 = vld [vmem:[#allocation2 + $0x2b0] sm:$0xff]
    %v2183 = vld [vmem:[#allocation2 + $0x2b8] sm:$0xff]
    %v2184 = vld [vmem:[#allocation2 + $0x2c0] sm:$0xff]
    %v2185 = vld [vmem:[#allocation2 + $0x2c8] sm:$0xff]
    %v2186 = vld [vmem:[#allocation2 + $0x2d0] sm:$0xff]
    %v2187 = vld [vmem:[#allocation2 + $0x2d8] sm:$0xff]
    %v2188 = vld [vmem:[#allocation2 + $0x2e0] sm:$0xff]
    %v2189 = vld [vmem:[#allocation2 + $0x2e8] sm:$0xff]
    %v2190 = vld [vmem:[#allocation2 + $0x2f0] sm:$0xff]
    %v2191 = vld [vmem:[#allocation2 + $0x2f8] sm:$0xff]
    %v2192 = vld [vmem:[#allocation2 + $0x300] sm:$0xff]
    %v2193 = vld [vmem:[#allocation2 + $0x308] sm:$0xff]
    %v2194 = vld [vmem:[#allocation2 + $0x310] sm:$0xff]
    %v2195 = vld [vmem:[#allocation2 + $0x318] sm:$0xff]
    %v2196 = vld [vmem:[#allocation2 + $0x320] sm:$0xff]
    %v2197 = vld [vmem:[#allocation2 + $0x328] sm:$0xff]
    %v2198 = vld [vmem:[#allocation2 + $0x330] sm:$0xff]
    %v2199 = vld [vmem:[#allocation2 + $0x338] sm:$0xff]
    %v2200 = vld [vmem:[#allocation2 + $0x340] sm:$0xff]
    %v2201 = vld [vmem:[#allocation2 + $0x348] sm:$0xff]
    %v2202 = vld [vmem:[#allocation2 + $0x350] sm:$0xff]
    %v2203 = vld [vmem:[#allocation2 + $0x358] sm:$0xff]
    %v2204 = vld [vmem:[#allocation2 + $0x360] sm:$0xff]
    %v2205 = vld [vmem:[#allocation2 + $0x368] sm:$0xff]
    %v2206 = vld [vmem:[#allocation2 + $0x370] sm:$0xff]
    %v2207 = vld [vmem:[#allocation2 + $0x378] sm:$0xff]
    %v2208 = vld [vmem:[%s2] ss:$2 sm:$0x7f]
    %v2210 = vperm.slane %v2208, 0
    %v2211 = vperm.slane %v2208, 1
    %v2212 = vperm.slane %v2208, 2
    %v2213 = vperm.slane %v2208, 3
    %v2214 = vperm.slane %v2208, 4
    %v2215 = vperm.slane %v2208, 5
    %v2216 = vperm.slane %v2208, 6
    %v2224 = vmul.f32 %v2180, %v2210
    %v2225 = vmul.f32 %v2181, %v2211
    %v2226 = vmul.f32 %v2182, %v2212
    %v2227 = vmul.f32 %v2183, %v2213
    %v2228 = vmul.f32 %v2184, %v2214
    %v2229 = vmul.f32 %v2185, %v2215
    %v2230 = vmul.f32 %v2186, %v2216
    %v2231 = vmul.f32 %v2187, %v2210
    %v2232 = vmul.f32 %v2188, %v2211
    %v2233 = vmul.f32 %v2189, %v2212
    %v2234 = vmul.f32 %v2190, %v2213
    %v2235 = vmul.f32 %v2191, %v2214
    %v2236 = vmul.f32 %v2192, %v2215
    %v2237 = vmul.f32 %v2193, %v2216
    %v2238 = vmul.f32 %v2194, %v2210
    %v2239 = vmul.f32 %v2195, %v2211
    %v2240 = vmul.f32 %v2196, %v2212
    %v2241 = vmul.f32 %v2197, %v2213
    %v2242 = vmul.f32 %v2198, %v2214
    %v2243 = vmul.f32 %v2199, %v2215
    %v2244 = vmul.f32 %v2200, %v2216
    %v2245 = vmul.f32 %v2201, %v2210
    %v2246 = vmul.f32 %v2202, %v2211
    %v2247 = vmul.f32 %v2203, %v2212
    %v2248 = vmul.f32 %v2204, %v2213
    %v2249 = vmul.f32 %v2205, %v2214
    %v2250 = vmul.f32 %v2206, %v2215
    %v2251 = vmul.f32 %v2207, %v2216
    %v2252 = vld [vmem:[#allocation3 + $0x8] sm:$0xff]
    %v2253 = vld [vmem:[#allocation3 + $0x10] sm:$0xff]
    %v2254 = vld [vmem:[#allocation3 + $0x18] sm:$0xff]
    %v2255 = vld [vmem:[#allocation3 + $0x20] sm:$0xff]
    %v2256 = vld [vmem:[#allocation3 + $0x28] sm:$0xff]
    %v2257 = vld [vmem:[#allocation3 + $0x30] sm:$0xff]
    %v2258 = vld [vmem:[#allocation3 + $0x38] sm:$0xff]
    %v2259 = vld [vmem:[#allocation3 + $0x48] sm:$0xff]
    %v2260 = vld [vmem:[#allocation3 + $0x50] sm:$0xff]
    %v2261 = vld [vmem:[#allocation3 + $0x58] sm:$0xff]
    %v2262 = vld [vmem:[#allocation3 + $0x60] sm:$0xff]
    %v2263 = vld [vmem:[#allocation3 + $0x68] sm:$0xff]
    %v2264 = vld [vmem:[#allocation3 + $0x70] sm:$0xff]
    %v2265 = vld [vmem:[#allocation3 + $0x78] sm:$0xff]
    %v2266 = vld [vmem:[#allocation3 + $0x88] sm:$0xff]
    %v2267 = vld [vmem:[#allocation3 + $0x90] sm:$0xff]
    %v2268 = vld [vmem:[#allocation3 + $0x98] sm:$0xff]
    %v2269 = vld [vmem:[#allocation3 + $0xa0] sm:$0xff]
    %v2270 = vld [vmem:[#allocation3 + $0xa8] sm:$0xff]
    %v2271 = vld [vmem:[#allocation3 + $0xb0] sm:$0xff]
    %v2272 = vld [vmem:[#allocation3 + $0xb8] sm:$0xff]
    %v2273 = vld [vmem:[#allocation3 + $0xc8] sm:$0xff]
    %v2274 = vld [vmem:[#allocation3 + $0xd0] sm:$0xff]
    %v2275 = vld [vmem:[#allocation3 + $0xd8] sm:$0xff]
    %v2276 = vld [vmem:[#allocation3 + $0xe0] sm:$0xff]
    %v2277 = vld [vmem:[#allocation3 + $0xe8] sm:$0xff]
    %v2278 = vld [vmem:[#allocation3 + $0xf0] sm:$0xff]
    %v2279 = vld [vmem:[#allocation3 + $0xf8] sm:$0xff]
    %2308 = vrot.lane.b32.xlu0 %v2224, 1
    %v2309 = vpop.permute.xlu0 %2308
    %2310 = vrot.lane.b32.xlu0 %v2225, 1
    %v2311 = vpop.permute.xlu0 %2310
    %2312 = vrot.lane.b32.xlu0 %v2226, 1
    %v2313 = vpop.permute.xlu0 %2312
    %2314 = vrot.lane.b32.xlu0 %v2227, 1
    %v2315 = vpop.permute.xlu0 %2314
    %2316 = vrot.lane.b32.xlu0 %v2228, 1
    %v2317 = vpop.permute.xlu0 %2316
    %2318 = vrot.lane.b32.xlu0 %v2229, 1
    %v2319 = vpop.permute.xlu0 %2318
    %2320 = vrot.lane.b32.xlu0 %v2230, 1
    %v2321 = vpop.permute.xlu0 %2320
    %2322 = vrot.lane.b32.xlu0 %v2231, 1
    %v2323 = vpop.permute.xlu0 %2322
    %2324 = vrot.lane.b32.xlu0 %v2232, 1
    %v2325 = vpop.permute.xlu0 %2324
    %2326 = vrot.lane.b32.xlu0 %v2233, 1
    %v2327 = vpop.permute.xlu0 %2326
    %2328 = vrot.lane.b32.xlu0 %v2234, 1
    %v2329 = vpop.permute.xlu0 %2328
    %2330 = vrot.lane.b32.xlu0 %v2235, 1
    %v2331 = vpop.permute.xlu0 %2330
    %2332 = vrot.lane.b32.xlu0 %v2236, 1
    %v2333 = vpop.permute.xlu0 %2332
    %2334 = vrot.lane.b32.xlu0 %v2237, 1
    %v2335 = vpop.permute.xlu0 %2334
    %2336 = vrot.lane.b32.xlu0 %v2238, 1
    %v2337 = vpop.permute.xlu0 %2336
    %2338 = vrot.lane.b32.xlu0 %v2239, 1
    %v2339 = vpop.permute.xlu0 %2338
    %2340 = vrot.lane.b32.xlu0 %v2240, 1
    %v2341 = vpop.permute.xlu0 %2340
    %2342 = vrot.lane.b32.xlu0 %v2241, 1
    %v2343 = vpop.permute.xlu0 %2342
    %2344 = vrot.lane.b32.xlu0 %v2242, 1
    %v2345 = vpop.permute.xlu0 %2344
    %2346 = vrot.lane.b32.xlu0 %v2243, 1
    %v2347 = vpop.permute.xlu0 %2346
    %2348 = vrot.lane.b32.xlu0 %v2244, 1
    %v2349 = vpop.permute.xlu0 %2348
    %2350 = vrot.lane.b32.xlu0 %v2245, 1
    %v2351 = vpop.permute.xlu0 %2350
    %2352 = vrot.lane.b32.xlu0 %v2246, 1
    %v2353 = vpop.permute.xlu0 %2352
    %2354 = vrot.lane.b32.xlu0 %v2247, 1
    %v2355 = vpop.permute.xlu0 %2354
    %2356 = vrot.lane.b32.xlu0 %v2248, 1
    %v2357 = vpop.permute.xlu0 %2356
    %2358 = vrot.lane.b32.xlu0 %v2249, 1
    %v2359 = vpop.permute.xlu0 %2358
    %2360 = vrot.lane.b32.xlu0 %v2250, 1
    %v2361 = vpop.permute.xlu0 %2360
    %2362 = vrot.lane.b32.xlu0 %v2251, 1
    %v2363 = vpop.permute.xlu0 %2362
    %vm2364 = vcmask 7168
    %v2365 = vsel %vm2364, %v2309, %v2311
    %v2366 = vsel %vm2364, %v2311, %v2313
    %v2367 = vsel %vm2364, %v2313, %v2315
    %v2368 = vsel %vm2364, %v2315, %v2317
    %v2369 = vsel %vm2364, %v2317, %v2319
    %v2370 = vsel %vm2364, %v2319, %v2321
    %v2371 = vsel %vm2364, %v2323, %v2325
    %v2372 = vsel %vm2364, %v2325, %v2327
    %v2373 = vsel %vm2364, %v2327, %v2329
    %v2374 = vsel %vm2364, %v2329, %v2331
    %v2375 = vsel %vm2364, %v2331, %v2333
    %v2376 = vsel %vm2364, %v2333, %v2335
    %v2377 = vsel %vm2364, %v2337, %v2339
    %v2378 = vsel %vm2364, %v2339, %v2341
    %v2379 = vsel %vm2364, %v2341, %v2343
    %v2380 = vsel %vm2364, %v2343, %v2345
    %v2381 = vsel %vm2364, %v2345, %v2347
    %v2382 = vsel %vm2364, %v2347, %v2349
    %v2383 = vsel %vm2364, %v2351, %v2353
    %v2384 = vsel %vm2364, %v2353, %v2355
    %v2385 = vsel %vm2364, %v2355, %v2357
    %v2386 = vsel %vm2364, %v2357, %v2359
    %v2387 = vsel %vm2364, %v2359, %v2361
    %v2388 = vsel %vm2364, %v2361, %v2363
    %v2417 = vadd.f32 %v2252, %v2309
    %v2418 = vadd.f32 %v2253, %v2365
    %v2419 = vadd.f32 %v2254, %v2366
    %v2420 = vadd.f32 %v2255, %v2367
    %v2421 = vadd.f32 %v2256, %v2368
    %v2422 = vadd.f32 %v2257, %v2369
    %v2423 = vadd.f32 %v2258, %v2370
    %v2424 = vadd.f32 %v2259, %v2323
    %v2425 = vadd.f32 %v2260, %v2371
    %v2426 = vadd.f32 %v2261, %v2372
    %v2427 = vadd.f32 %v2262, %v2373
    %v2428 = vadd.f32 %v2263, %v2374
    %v2429 = vadd.f32 %v2264, %v2375
    %v2430 = vadd.f32 %v2265, %v2376
    %v2431 = vadd.f32 %v2266, %v2337
    %v2432 = vadd.f32 %v2267, %v2377
    %v2433 = vadd.f32 %v2268, %v2378
    %v2434 = vadd.f32 %v2269, %v2379
    %v2435 = vadd.f32 %v2270, %v2380
    %v2436 = vadd.f32 %v2271, %v2381
    %v2437 = vadd.f32 %v2272, %v2382
    %v2438 = vadd.f32 %v2273, %v2351
    %v2439 = vadd.f32 %v2274, %v2383
    %v2440 = vadd.f32 %v2275, %v2384
    %v2441 = vadd.f32 %v2276, %v2385
    %v2442 = vadd.f32 %v2277, %v2386
    %v2443 = vadd.f32 %v2278, %v2387
    %v2444 = vadd.f32 %v2279, %v2388
    %vm2445 = vcmask 1047560
    %2446 = vst.msk [vmem:[#allocation3 + $0x8] sm:$0xff] %vm2445, %v2417
    %2447 = vst [vmem:[#allocation3 + $0x10] sm:$0xff] %v2418
    %2448 = vst [vmem:[#allocation3 + $0x18] sm:$0xff] %v2419
    %2449 = vst [vmem:[#allocation3 + $0x20] sm:$0xff] %v2420
    %2450 = vst [vmem:[#allocation3 + $0x28] sm:$0xff] %v2421
    %2451 = vst [vmem:[#allocation3 + $0x30] sm:$0xff] %v2422
    %vm2452 = vcmask 138240
    %2453 = vst.msk [vmem:[#allocation3 + $0x38] sm:$0xff] %vm2452, %v2423
    %2454 = vst.msk [vmem:[#allocation3 + $0x48] sm:$0xff] %vm2445, %v2424
    %2455 = vst [vmem:[#allocation3 + $0x50] sm:$0xff] %v2425
    %2456 = vst [vmem:[#allocation3 + $0x58] sm:$0xff] %v2426
    %2457 = vst [vmem:[#allocation3 + $0x60] sm:$0xff] %v2427
    %2458 = vst [vmem:[#allocation3 + $0x68] sm:$0xff] %v2428
    %2459 = vst [vmem:[#allocation3 + $0x70] sm:$0xff] %v2429
    %2460 = vst.msk [vmem:[#allocation3 + $0x78] sm:$0xff] %vm2452, %v2430
    %2461 = vst.msk [vmem:[#allocation3 + $0x88] sm:$0xff] %vm2445, %v2431
    %2462 = vst [vmem:[#allocation3 + $0x90] sm:$0xff] %v2432
    %2463 = vst [vmem:[#allocation3 + $0x98] sm:$0xff] %v2433
    %2464 = vst [vmem:[#allocation3 + $0xa0] sm:$0xff] %v2434
    %2465 = vst [vmem:[#allocation3 + $0xa8] sm:$0xff] %v2435
    %2466 = vst [vmem:[#allocation3 + $0xb0] sm:$0xff] %v2436
    %2467 = vst.msk [vmem:[#allocation3 + $0xb8] sm:$0xff] %vm2452, %v2437
    %2468 = vst.msk [vmem:[#allocation3 + $0xc8] sm:$0xff] %vm2445, %v2438
    %2469 = vst [vmem:[#allocation3 + $0xd0] sm:$0xff] %v2439
    %2470 = vst [vmem:[#allocation3 + $0xd8] sm:$0xff] %v2440
    %2471 = vst [vmem:[#allocation3 + $0xe0] sm:$0xff] %v2441
    %2472 = vst [vmem:[#allocation3 + $0xe8] sm:$0xff] %v2442
    %2473 = vst [vmem:[#allocation3 + $0xf0] sm:$0xff] %v2443
    %2474 = vst.msk [vmem:[#allocation3 + $0xf8] sm:$0xff] %vm2452, %v2444
    %v2475 = vld [vmem:[#allocation2 + $0x380] sm:$0xff]
    %v2476 = vld [vmem:[#allocation2 + $0x388] sm:$0xff]
    %v2477 = vld [vmem:[#allocation2 + $0x390] sm:$0xff]
    %v2478 = vld [vmem:[#allocation2 + $0x398] sm:$0xff]
    %v2479 = vld [vmem:[#allocation2 + $0x3a0] sm:$0xff]
    %v2480 = vld [vmem:[#allocation2 + $0x3a8] sm:$0xff]
    %v2481 = vld [vmem:[#allocation2 + $0x3b0] sm:$0xff]
    %v2482 = vld [vmem:[#allocation2 + $0x3b8] sm:$0xff]
    %v2483 = vld [vmem:[#allocation2 + $0x3c0] sm:$0xff]
    %v2484 = vld [vmem:[#allocation2 + $0x3c8] sm:$0xff]
    %v2485 = vld [vmem:[#allocation2 + $0x3d0] sm:$0xff]
    %v2486 = vld [vmem:[#allocation2 + $0x3d8] sm:$0xff]
    %v2487 = vld [vmem:[#allocation2 + $0x3e0] sm:$0xff]
    %v2488 = vld [vmem:[#allocation2 + $0x3e8] sm:$0xff]
    %v2489 = vld [vmem:[#allocation2 + $0x3f0] sm:$0xff]
    %v2490 = vld [vmem:[#allocation2 + $0x3f8] sm:$0xff]
    %v2491 = vld [vmem:[#allocation2 + $0x400] sm:$0xff]
    %v2492 = vld [vmem:[#allocation2 + $0x408] sm:$0xff]
    %v2493 = vld [vmem:[#allocation2 + $0x410] sm:$0xff]
    %v2494 = vld [vmem:[#allocation2 + $0x418] sm:$0xff]
    %v2495 = vld [vmem:[#allocation2 + $0x420] sm:$0xff]
    %v2496 = vld [vmem:[#allocation2 + $0x428] sm:$0xff]
    %v2497 = vld [vmem:[#allocation2 + $0x430] sm:$0xff]
    %v2498 = vld [vmem:[#allocation2 + $0x438] sm:$0xff]
    %v2499 = vld [vmem:[#allocation2 + $0x440] sm:$0xff]
    %v2500 = vld [vmem:[#allocation2 + $0x448] sm:$0xff]
    %v2501 = vld [vmem:[#allocation2 + $0x450] sm:$0xff]
    %v2502 = vld [vmem:[#allocation2 + $0x458] sm:$0xff]
    %v2503 = vld [vmem:[#allocation3 + $0x8] sm:$0xff]
    %v2504 = vld [vmem:[#allocation3 + $0x10] sm:$0xff]
    %v2505 = vld [vmem:[#allocation3 + $0x18] sm:$0xff]
    %v2506 = vld [vmem:[#allocation3 + $0x20] sm:$0xff]
    %v2507 = vld [vmem:[#allocation3 + $0x28] sm:$0xff]
    %v2508 = vld [vmem:[#allocation3 + $0x30] sm:$0xff]
    %v2509 = vld [vmem:[#allocation3 + $0x38] sm:$0xff]
    %v2510 = vld [vmem:[#allocation3 + $0x48] sm:$0xff]
    %v2511 = vld [vmem:[#allocation3 + $0x50] sm:$0xff]
    %v2512 = vld [vmem:[#allocation3 + $0x58] sm:$0xff]
    %v2513 = vld [vmem:[#allocation3 + $0x60] sm:$0xff]
    %v2514 = vld [vmem:[#allocation3 + $0x68] sm:$0xff]
    %v2515 = vld [vmem:[#allocation3 + $0x70] sm:$0xff]
    %v2516 = vld [vmem:[#allocation3 + $0x78] sm:$0xff]
    %v2517 = vld [vmem:[#allocation3 + $0x88] sm:$0xff]
    %v2518 = vld [vmem:[#allocation3 + $0x90] sm:$0xff]
    %v2519 = vld [vmem:[#allocation3 + $0x98] sm:$0xff]
    %v2520 = vld [vmem:[#allocation3 + $0xa0] sm:$0xff]
    %v2521 = vld [vmem:[#allocation3 + $0xa8] sm:$0xff]
    %v2522 = vld [vmem:[#allocation3 + $0xb0] sm:$0xff]
    %v2523 = vld [vmem:[#allocation3 + $0xb8] sm:$0xff]
    %v2524 = vld [vmem:[#allocation3 + $0xc8] sm:$0xff]
    %v2525 = vld [vmem:[#allocation3 + $0xd0] sm:$0xff]
    %v2526 = vld [vmem:[#allocation3 + $0xd8] sm:$0xff]
    %v2527 = vld [vmem:[#allocation3 + $0xe0] sm:$0xff]
    %v2528 = vld [vmem:[#allocation3 + $0xe8] sm:$0xff]
    %v2529 = vld [vmem:[#allocation3 + $0xf0] sm:$0xff]
    %v2530 = vld [vmem:[#allocation3 + $0xf8] sm:$0xff]
    %v2531 = vadd.f32 %v2503, %v2475
    %v2532 = vadd.f32 %v2504, %v2476
    %v2533 = vadd.f32 %v2505, %v2477
    %v2534 = vadd.f32 %v2506, %v2478
    %v2535 = vadd.f32 %v2507, %v2479
    %v2536 = vadd.f32 %v2508, %v2480
    %v2537 = vadd.f32 %v2509, %v2481
    %v2538 = vadd.f32 %v2510, %v2482
    %v2539 = vadd.f32 %v2511, %v2483
    %v2540 = vadd.f32 %v2512, %v2484
    %v2541 = vadd.f32 %v2513, %v2485
    %v2542 = vadd.f32 %v2514, %v2486
    %v2543 = vadd.f32 %v2515, %v2487
    %v2544 = vadd.f32 %v2516, %v2488
    %v2545 = vadd.f32 %v2517, %v2489
    %v2546 = vadd.f32 %v2518, %v2490
    %v2547 = vadd.f32 %v2519, %v2491
    %v2548 = vadd.f32 %v2520, %v2492
    %v2549 = vadd.f32 %v2521, %v2493
    %v2550 = vadd.f32 %v2522, %v2494
    %v2551 = vadd.f32 %v2523, %v2495
    %v2552 = vadd.f32 %v2524, %v2496
    %v2553 = vadd.f32 %v2525, %v2497
    %v2554 = vadd.f32 %v2526, %v2498
    %v2555 = vadd.f32 %v2527, %v2499
    %v2556 = vadd.f32 %v2528, %v2500
    %v2557 = vadd.f32 %v2529, %v2501
    %v2558 = vadd.f32 %v2530, %v2502
    %2559 = vst [vmem:[#allocation3 + $0x8] sm:$0xff] %v2531
    %2560 = vst [vmem:[#allocation3 + $0x10] sm:$0xff] %v2532
    %2561 = vst [vmem:[#allocation3 + $0x18] sm:$0xff] %v2533
    %2562 = vst [vmem:[#allocation3 + $0x20] sm:$0xff] %v2534
    %2563 = vst [vmem:[#allocation3 + $0x28] sm:$0xff] %v2535
    %2564 = vst [vmem:[#allocation3 + $0x30] sm:$0xff] %v2536
    %2565 = vst.msk [vmem:[#allocation3 + $0x38] sm:$0xff] %vm1059, %v2537
    %2566 = vst [vmem:[#allocation3 + $0x48] sm:$0xff] %v2538
    %2567 = vst [vmem:[#allocation3 + $0x50] sm:$0xff] %v2539
    %2568 = vst [vmem:[#allocation3 + $0x58] sm:$0xff] %v2540
    %2569 = vst [vmem:[#allocation3 + $0x60] sm:$0xff] %v2541
    %2570 = vst [vmem:[#allocation3 + $0x68] sm:$0xff] %v2542
    %2571 = vst [vmem:[#allocation3 + $0x70] sm:$0xff] %v2543
    %2572 = vst.msk [vmem:[#allocation3 + $0x78] sm:$0xff] %vm1059, %v2544
    %2573 = vst [vmem:[#allocation3 + $0x88] sm:$0xff] %v2545
    %2574 = vst [vmem:[#allocation3 + $0x90] sm:$0xff] %v2546
    %2575 = vst [vmem:[#allocation3 + $0x98] sm:$0xff] %v2547
    %2576 = vst [vmem:[#allocation3 + $0xa0] sm:$0xff] %v2548
    %2577 = vst [vmem:[#allocation3 + $0xa8] sm:$0xff] %v2549
    %2578 = vst [vmem:[#allocation3 + $0xb0] sm:$0xff] %v2550
    %2579 = vst.msk [vmem:[#allocation3 + $0xb8] sm:$0xff] %vm1059, %v2551
    %2580 = vst [vmem:[#allocation3 + $0xc8] sm:$0xff] %v2552
    %2581 = vst [vmem:[#allocation3 + $0xd0] sm:$0xff] %v2553
    %2582 = vst [vmem:[#allocation3 + $0xd8] sm:$0xff] %v2554
    %2583 = vst [vmem:[#allocation3 + $0xe0] sm:$0xff] %v2555
    %2584 = vst [vmem:[#allocation3 + $0xe8] sm:$0xff] %v2556
    %2585 = vst [vmem:[#allocation3 + $0xf0] sm:$0xff] %v2557
    %2586 = vst.msk [vmem:[#allocation3 + $0xf8] sm:$0xff] %vm1059, %v2558
    %v2587 = vld [vmem:[#allocation2 + $0x460] sm:$0xff]
    %v2588 = vld [vmem:[#allocation2 + $0x468] sm:$0xff]
    %v2589 = vld [vmem:[#allocation2 + $0x470] sm:$0xff]
    %v2590 = vld [vmem:[#allocation2 + $0x478] sm:$0xff]
    %v2591 = vld [vmem:[#allocation2 + $0x480] sm:$0xff]
    %v2592 = vld [vmem:[#allocation2 + $0x488] sm:$0xff]
    %v2593 = vld [vmem:[#allocation2 + $0x490] sm:$0xff]
    %v2594 = vld [vmem:[#allocation2 + $0x498] sm:$0xff]
    %v2595 = vld [vmem:[#allocation2 + $0x4a0] sm:$0xff]
    %v2596 = vld [vmem:[#allocation2 + $0x4a8] sm:$0xff]
    %v2597 = vld [vmem:[#allocation2 + $0x4b0] sm:$0xff]
    %v2598 = vld [vmem:[#allocation2 + $0x4b8] sm:$0xff]
    %v2599 = vld [vmem:[#allocation2 + $0x4c0] sm:$0xff]
    %v2600 = vld [vmem:[#allocation2 + $0x4c8] sm:$0xff]
    %v2601 = vld [vmem:[#allocation2 + $0x4d0] sm:$0xff]
    %v2602 = vld [vmem:[#allocation2 + $0x4d8] sm:$0xff]
    %v2603 = vld [vmem:[#allocation2 + $0x4e0] sm:$0xff]
    %v2604 = vld [vmem:[#allocation2 + $0x4e8] sm:$0xff]
    %v2605 = vld [vmem:[#allocation2 + $0x4f0] sm:$0xff]
    %v2606 = vld [vmem:[#allocation2 + $0x4f8] sm:$0xff]
    %v2607 = vld [vmem:[#allocation2 + $0x500] sm:$0xff]
    %v2608 = vld [vmem:[#allocation2 + $0x508] sm:$0xff]
    %v2609 = vld [vmem:[#allocation2 + $0x510] sm:$0xff]
    %v2610 = vld [vmem:[#allocation2 + $0x518] sm:$0xff]
    %v2611 = vld [vmem:[#allocation2 + $0x520] sm:$0xff]
    %v2612 = vld [vmem:[#allocation2 + $0x528] sm:$0xff]
    %v2613 = vld [vmem:[#allocation2 + $0x530] sm:$0xff]
    %v2614 = vld [vmem:[#allocation2 + $0x538] sm:$0xff]
    %v2615 = vld [vmem:[%s1912] ss:$2 sm:$0x7f]
    %v2617 = vperm.slane %v2615, 0
    %v2618 = vperm.slane %v2615, 1
    %v2619 = vperm.slane %v2615, 2
    %v2620 = vperm.slane %v2615, 3
    %v2621 = vperm.slane %v2615, 4
    %v2622 = vperm.slane %v2615, 5
    %v2623 = vperm.slane %v2615, 6
    %v2631 = vmul.f32 %v2587, %v2617
    %v2632 = vmul.f32 %v2588, %v2618
    %v2633 = vmul.f32 %v2589, %v2619
    %v2634 = vmul.f32 %v2590, %v2620
    %v2635 = vmul.f32 %v2591, %v2621
    %v2636 = vmul.f32 %v2592, %v2622
    %v2637 = vmul.f32 %v2593, %v2623
    %v2638 = vmul.f32 %v2594, %v2617
    %v2639 = vmul.f32 %v2595, %v2618
    %v2640 = vmul.f32 %v2596, %v2619
    %v2641 = vmul.f32 %v2597, %v2620
    %v2642 = vmul.f32 %v2598, %v2621
    %v2643 = vmul.f32 %v2599, %v2622
    %v2644 = vmul.f32 %v2600, %v2623
    %v2645 = vmul.f32 %v2601, %v2617
    %v2646 = vmul.f32 %v2602, %v2618
    %v2647 = vmul.f32 %v2603, %v2619
    %v2648 = vmul.f32 %v2604, %v2620
    %v2649 = vmul.f32 %v2605, %v2621
    %v2650 = vmul.f32 %v2606, %v2622
    %v2651 = vmul.f32 %v2607, %v2623
    %v2652 = vmul.f32 %v2608, %v2617
    %v2653 = vmul.f32 %v2609, %v2618
    %v2654 = vmul.f32 %v2610, %v2619
    %v2655 = vmul.f32 %v2611, %v2620
    %v2656 = vmul.f32 %v2612, %v2621
    %v2657 = vmul.f32 %v2613, %v2622
    %v2658 = vmul.f32 %v2614, %v2623
    %v2659 = vld [vmem:[#allocation3] sm:$0xff]
    %v2660 = vld [vmem:[#allocation3 + $0x8] sm:$0xff]
    %v2661 = vld [vmem:[#allocation3 + $0x10] sm:$0xff]
    %v2662 = vld [vmem:[#allocation3 + $0x18] sm:$0xff]
    %v2663 = vld [vmem:[#allocation3 + $0x20] sm:$0xff]
    %v2664 = vld [vmem:[#allocation3 + $0x28] sm:$0xff]
    %v2665 = vld [vmem:[#allocation3 + $0x30] sm:$0xff]
    %v2666 = vld [vmem:[#allocation3 + $0x38] sm:$0xff]
    %v2667 = vld [vmem:[#allocation3 + $0x40] sm:$0xff]
    %v2668 = vld [vmem:[#allocation3 + $0x48] sm:$0xff]
    %v2669 = vld [vmem:[#allocation3 + $0x50] sm:$0xff]
    %v2670 = vld [vmem:[#allocation3 + $0x58] sm:$0xff]
    %v2671 = vld [vmem:[#allocation3 + $0x60] sm:$0xff]
    %v2672 = vld [vmem:[#allocation3 + $0x68] sm:$0xff]
    %v2673 = vld [vmem:[#allocation3 + $0x70] sm:$0xff]
    %v2674 = vld [vmem:[#allocation3 + $0x78] sm:$0xff]
    %v2675 = vld [vmem:[#allocation3 + $0x80] sm:$0xff]
    %v2676 = vld [vmem:[#allocation3 + $0x88] sm:$0xff]
    %v2677 = vld [vmem:[#allocation3 + $0x90] sm:$0xff]
    %v2678 = vld [vmem:[#allocation3 + $0x98] sm:$0xff]
    %v2679 = vld [vmem:[#allocation3 + $0xa0] sm:$0xff]
    %v2680 = vld [vmem:[#allocation3 + $0xa8] sm:$0xff]
    %v2681 = vld [vmem:[#allocation3 + $0xb0] sm:$0xff]
    %v2682 = vld [vmem:[#allocation3 + $0xb8] sm:$0xff]
    %v2683 = vld [vmem:[#allocation3 + $0xc0] sm:$0xff]
    %v2684 = vld [vmem:[#allocation3 + $0xc8] sm:$0xff]
    %v2685 = vld [vmem:[#allocation3 + $0xd0] sm:$0xff]
    %v2686 = vld [vmem:[#allocation3 + $0xd8] sm:$0xff]
    %v2687 = vld [vmem:[#allocation3 + $0xe0] sm:$0xff]
    %v2688 = vld [vmem:[#allocation3 + $0xe8] sm:$0xff]
    %v2689 = vld [vmem:[#allocation3 + $0xf0] sm:$0xff]
    %v2690 = vld [vmem:[#allocation3 + $0xf8] sm:$0xff]
    %2719 = vrot.lane.b32.xlu0 %v2631, 127
    %v2720 = vpop.permute.xlu0 %2719
    %2721 = vrot.lane.b32.xlu0 %v2632, 127
    %v2722 = vpop.permute.xlu0 %2721
    %2723 = vrot.lane.b32.xlu0 %v2633, 127
    %v2724 = vpop.permute.xlu0 %2723
    %2725 = vrot.lane.b32.xlu0 %v2634, 127
    %v2726 = vpop.permute.xlu0 %2725
    %2727 = vrot.lane.b32.xlu0 %v2635, 127
    %v2728 = vpop.permute.xlu0 %2727
    %2729 = vrot.lane.b32.xlu0 %v2636, 127
    %v2730 = vpop.permute.xlu0 %2729
    %2731 = vrot.lane.b32.xlu0 %v2637, 127
    %v2732 = vpop.permute.xlu0 %2731
    %2733 = vrot.lane.b32.xlu0 %v2638, 127
    %v2734 = vpop.permute.xlu0 %2733
    %2735 = vrot.lane.b32.xlu0 %v2639, 127
    %v2736 = vpop.permute.xlu0 %2735
    %2737 = vrot.lane.b32.xlu0 %v2640, 127
    %v2738 = vpop.permute.xlu0 %2737
    %2739 = vrot.lane.b32.xlu0 %v2641, 127
    %v2740 = vpop.permute.xlu0 %2739
    %2741 = vrot.lane.b32.xlu0 %v2642, 127
    %v2742 = vpop.permute.xlu0 %2741
    %2743 = vrot.lane.b32.xlu0 %v2643, 127
    %v2744 = vpop.permute.xlu0 %2743
    %2745 = vrot.lane.b32.xlu0 %v2644, 127
    %v2746 = vpop.permute.xlu0 %2745
    %2747 = vrot.lane.b32.xlu0 %v2645, 127
    %v2748 = vpop.permute.xlu0 %2747
    %2749 = vrot.lane.b32.xlu0 %v2646, 127
    %v2750 = vpop.permute.xlu0 %2749
    %2751 = vrot.lane.b32.xlu0 %v2647, 127
    %v2752 = vpop.permute.xlu0 %2751
    %2753 = vrot.lane.b32.xlu0 %v2648, 127
    %v2754 = vpop.permute.xlu0 %2753
    %2755 = vrot.lane.b32.xlu0 %v2649, 127
    %v2756 = vpop.permute.xlu0 %2755
    %2757 = vrot.lane.b32.xlu0 %v2650, 127
    %v2758 = vpop.permute.xlu0 %2757
    %2759 = vrot.lane.b32.xlu0 %v2651, 127
    %v2760 = vpop.permute.xlu0 %2759
    %2761 = vrot.lane.b32.xlu0 %v2652, 127
    %v2762 = vpop.permute.xlu0 %2761
    %2763 = vrot.lane.b32.xlu0 %v2653, 127
    %v2764 = vpop.permute.xlu0 %2763
    %2765 = vrot.lane.b32.xlu0 %v2654, 127
    %v2766 = vpop.permute.xlu0 %2765
    %2767 = vrot.lane.b32.xlu0 %v2655, 127
    %v2768 = vpop.permute.xlu0 %2767
    %2769 = vrot.lane.b32.xlu0 %v2656, 127
    %v2770 = vpop.permute.xlu0 %2769
    %2771 = vrot.lane.b32.xlu0 %v2657, 127
    %v2772 = vpop.permute.xlu0 %2771
    %2773 = vrot.lane.b32.xlu0 %v2658, 127
    %v2774 = vpop.permute.xlu0 %2773
    %vm2775 = vcmask 1039360
    %v2776 = vsel %vm2775, %v2720, %v2722
    %v2777 = vsel %vm2775, %v2722, %v2724
    %v2778 = vsel %vm2775, %v2724, %v2726
    %v2779 = vsel %vm2775, %v2726, %v2728
    %v2780 = vsel %vm2775, %v2728, %v2730
    %v2781 = vsel %vm2775, %v2730, %v2732
    %v2782 = vsel %vm2775, %v2734, %v2736
    %v2783 = vsel %vm2775, %v2736, %v2738
    %v2784 = vsel %vm2775, %v2738, %v2740
    %v2785 = vsel %vm2775, %v2740, %v2742
    %v2786 = vsel %vm2775, %v2742, %v2744
    %v2787 = vsel %vm2775, %v2744, %v2746
    %v2788 = vsel %vm2775, %v2748, %v2750
    %v2789 = vsel %vm2775, %v2750, %v2752
    %v2790 = vsel %vm2775, %v2752, %v2754
    %v2791 = vsel %vm2775, %v2754, %v2756
    %v2792 = vsel %vm2775, %v2756, %v2758
    %v2793 = vsel %vm2775, %v2758, %v2760
    %v2794 = vsel %vm2775, %v2762, %v2764
    %v2795 = vsel %vm2775, %v2764, %v2766
    %v2796 = vsel %vm2775, %v2766, %v2768
    %v2797 = vsel %vm2775, %v2768, %v2770
    %v2798 = vsel %vm2775, %v2770, %v2772
    %v2799 = vsel %vm2775, %v2772, %v2774
    %v2832 = vadd.f32 %v2659, %v2720
    %v2833 = vadd.f32 %v2660, %v2776
    %v2834 = vadd.f32 %v2661, %v2777
    %v2835 = vadd.f32 %v2662, %v2778
    %v2836 = vadd.f32 %v2663, %v2779
    %v2837 = vadd.f32 %v2664, %v2780
    %v2838 = vadd.f32 %v2665, %v2781
    %v2839 = vadd.f32 %v2666, %v2732
    %v2840 = vadd.f32 %v2667, %v2734
    %v2841 = vadd.f32 %v2668, %v2782
    %v2842 = vadd.f32 %v2669, %v2783
    %v2843 = vadd.f32 %v2670, %v2784
    %v2844 = vadd.f32 %v2671, %v2785
    %v2845 = vadd.f32 %v2672, %v2786
    %v2846 = vadd.f32 %v2673, %v2787
    %v2847 = vadd.f32 %v2674, %v2746
    %v2848 = vadd.f32 %v2675, %v2748
    %v2849 = vadd.f32 %v2676, %v2788
    %v2850 = vadd.f32 %v2677, %v2789
    %v2851 = vadd.f32 %v2678, %v2790
    %v2852 = vadd.f32 %v2679, %v2791
    %v2853 = vadd.f32 %v2680, %v2792
    %v2854 = vadd.f32 %v2681, %v2793
    %v2855 = vadd.f32 %v2682, %v2760
    %v2856 = vadd.f32 %v2683, %v2762
    %v2857 = vadd.f32 %v2684, %v2794
    %v2858 = vadd.f32 %v2685, %v2795
    %v2859 = vadd.f32 %v2686, %v2796
    %v2860 = vadd.f32 %v2687, %v2797
    %v2861 = vadd.f32 %v2688, %v2798
    %v2862 = vadd.f32 %v2689, %v2799
    %v2863 = vadd.f32 %v2690, %v2774
    %vm2864 = vcmask 1048568
    %2865 = vst.msk [vmem:[#allocation3] sm:$0xff] %vm2864, %v2832
    %2866 = vst [vmem:[#allocation3 + $0x8] sm:$0xff] %v2833
    %2867 = vst [vmem:[#allocation3 + $0x10] sm:$0xff] %v2834
    %2868 = vst [vmem:[#allocation3 + $0x18] sm:$0xff] %v2835
    %2869 = vst [vmem:[#allocation3 + $0x20] sm:$0xff] %v2836
    %2870 = vst [vmem:[#allocation3 + $0x28] sm:$0xff] %v2837
    %2871 = vst [vmem:[#allocation3 + $0x30] sm:$0xff] %v2838
    %vm2872 = vcmask 121856
    %2873 = vst.msk [vmem:[#allocation3 + $0x38] sm:$0xff] %vm2872, %v2839
    %2874 = vst.msk [vmem:[#allocation3 + $0x40] sm:$0xff] %vm2864, %v2840
    %2875 = vst [vmem:[#allocation3 + $0x48] sm:$0xff] %v2841
    %2876 = vst [vmem:[#allocation3 + $0x50] sm:$0xff] %v2842
    %2877 = vst [vmem:[#allocation3 + $0x58] sm:$0xff] %v2843
    %2878 = vst [vmem:[#allocation3 + $0x60] sm:$0xff] %v2844
    %2879 = vst [vmem:[#allocation3 + $0x68] sm:$0xff] %v2845
    %2880 = vst [vmem:[#allocation3 + $0x70] sm:$0xff] %v2846
    %2881 = vst.msk [vmem:[#allocation3 + $0x78] sm:$0xff] %vm2872, %v2847
    %2882 = vst.msk [vmem:[#allocation3 + $0x80] sm:$0xff] %vm2864, %v2848
    %2883 = vst [vmem:[#allocation3 + $0x88] sm:$0xff] %v2849
    %2884 = vst [vmem:[#allocation3 + $0x90] sm:$0xff] %v2850
    %2885 = vst [vmem:[#allocation3 + $0x98] sm:$0xff] %v2851
    %2886 = vst [vmem:[#allocation3 + $0xa0] sm:$0xff] %v2852
    %2887 = vst [vmem:[#allocation3 + $0xa8] sm:$0xff] %v2853
    %2888 = vst [vmem:[#allocation3 + $0xb0] sm:$0xff] %v2854
    %2889 = vst.msk [vmem:[#allocation3 + $0xb8] sm:$0xff] %vm2872, %v2855
    %2890 = vst.msk [vmem:[#allocation3 + $0xc0] sm:$0xff] %vm2864, %v2856
    %2891 = vst [vmem:[#allocation3 + $0xc8] sm:$0xff] %v2857
    %2892 = vst [vmem:[#allocation3 + $0xd0] sm:$0xff] %v2858
    %2893 = vst [vmem:[#allocation3 + $0xd8] sm:$0xff] %v2859
    %2894 = vst [vmem:[#allocation3 + $0xe0] sm:$0xff] %v2860
    %2895 = vst [vmem:[#allocation3 + $0xe8] sm:$0xff] %v2861
    %2896 = vst [vmem:[#allocation3 + $0xf0] sm:$0xff] %v2862
    %2897 = vst.msk [vmem:[#allocation3 + $0xf8] sm:$0xff] %vm2872, %v2863
    %v2898 = vld [vmem:[#allocation2 + $0x540] sm:$0xff]
    %v2899 = vld [vmem:[#allocation2 + $0x548] sm:$0xff]
    %v2900 = vld [vmem:[#allocation2 + $0x550] sm:$0xff]
    %v2901 = vld [vmem:[#allocation2 + $0x558] sm:$0xff]
    %v2902 = vld [vmem:[#allocation2 + $0x560] sm:$0xff]
    %v2903 = vld [vmem:[#allocation2 + $0x568] sm:$0xff]
    %v2904 = vld [vmem:[#allocation2 + $0x570] sm:$0xff]
    %v2905 = vld [vmem:[#allocation2 + $0x578] sm:$0xff]
    %v2906 = vld [vmem:[#allocation2 + $0x580] sm:$0xff]
    %v2907 = vld [vmem:[#allocation2 + $0x588] sm:$0xff]
    %v2908 = vld [vmem:[#allocation2 + $0x590] sm:$0xff]
    %v2909 = vld [vmem:[#allocation2 + $0x598] sm:$0xff]
    %v2910 = vld [vmem:[#allocation2 + $0x5a0] sm:$0xff]
    %v2911 = vld [vmem:[#allocation2 + $0x5a8] sm:$0xff]
    %v2912 = vld [vmem:[#allocation2 + $0x5b0] sm:$0xff]
    %v2913 = vld [vmem:[#allocation2 + $0x5b8] sm:$0xff]
    %v2914 = vld [vmem:[#allocation2 + $0x5c0] sm:$0xff]
    %v2915 = vld [vmem:[#allocation2 + $0x5c8] sm:$0xff]
    %v2916 = vld [vmem:[#allocation2 + $0x5d0] sm:$0xff]
    %v2917 = vld [vmem:[#allocation2 + $0x5d8] sm:$0xff]
    %v2918 = vld [vmem:[#allocation2 + $0x5e0] sm:$0xff]
    %v2919 = vld [vmem:[#allocation2 + $0x5e8] sm:$0xff]
    %v2920 = vld [vmem:[#allocation2 + $0x5f0] sm:$0xff]
    %v2921 = vld [vmem:[#allocation2 + $0x5f8] sm:$0xff]
    %v2922 = vld [vmem:[#allocation2 + $0x600] sm:$0xff]
    %v2923 = vld [vmem:[#allocation2 + $0x608] sm:$0xff]
    %v2924 = vld [vmem:[#allocation2 + $0x610] sm:$0xff]
    %v2925 = vld [vmem:[#allocation2 + $0x618] sm:$0xff]
    %v2926 = vld [vmem:[%s2] ss:$2 sm:$0x7f]
    %v2928 = vperm.slane %v2926, 0
    %v2929 = vperm.slane %v2926, 1
    %v2930 = vperm.slane %v2926, 2
    %v2931 = vperm.slane %v2926, 3
    %v2932 = vperm.slane %v2926, 4
    %v2933 = vperm.slane %v2926, 5
    %v2934 = vperm.slane %v2926, 6
    %v2942 = vmul.f32 %v2898, %v2928
    %v2943 = vmul.f32 %v2899, %v2929
    %v2944 = vmul.f32 %v2900, %v2930
    %v2945 = vmul.f32 %v2901, %v2931
    %v2946 = vmul.f32 %v2902, %v2932
    %v2947 = vmul.f32 %v2903, %v2933
    %v2948 = vmul.f32 %v2904, %v2934
    %v2949 = vmul.f32 %v2905, %v2928
    %v2950 = vmul.f32 %v2906, %v2929
    %v2951 = vmul.f32 %v2907, %v2930
    %v2952 = vmul.f32 %v2908, %v2931
    %v2953 = vmul.f32 %v2909, %v2932
    %v2954 = vmul.f32 %v2910, %v2933
    %v2955 = vmul.f32 %v2911, %v2934
    %v2956 = vmul.f32 %v2912, %v2928
    %v2957 = vmul.f32 %v2913, %v2929
    %v2958 = vmul.f32 %v2914, %v2930
    %v2959 = vmul.f32 %v2915, %v2931
    %v2960 = vmul.f32 %v2916, %v2932
    %v2961 = vmul.f32 %v2917, %v2933
    %v2962 = vmul.f32 %v2918, %v2934
    %v2963 = vmul.f32 %v2919, %v2928
    %v2964 = vmul.f32 %v2920, %v2929
    %v2965 = vmul.f32 %v2921, %v2930
    %v2966 = vmul.f32 %v2922, %v2931
    %v2967 = vmul.f32 %v2923, %v2932
    %v2968 = vmul.f32 %v2924, %v2933
    %v2969 = vmul.f32 %v2925, %v2934
    %v2970 = vld [vmem:[#allocation3] sm:$0xff]
    %v2971 = vld [vmem:[#allocation3 + $0x8] sm:$0xff]
    %v2972 = vld [vmem:[#allocation3 + $0x10] sm:$0xff]
    %v2973 = vld [vmem:[#allocation3 + $0x18] sm:$0xff]
    %v2974 = vld [vmem:[#allocation3 + $0x20] sm:$0xff]
    %v2975 = vld [vmem:[#allocation3 + $0x28] sm:$0xff]
    %v2976 = vld [vmem:[#allocation3 + $0x30] sm:$0xff]
    %v2977 = vld [vmem:[#allocation3 + $0x40] sm:$0xff]
    %v2978 = vld [vmem:[#allocation3 + $0x48] sm:$0xff]
    %v2979 = vld [vmem:[#allocation3 + $0x50] sm:$0xff]
    %v2980 = vld [vmem:[#allocation3 + $0x58] sm:$0xff]
    %v2981 = vld [vmem:[#allocation3 + $0x60] sm:$0xff]
    %v2982 = vld [vmem:[#allocation3 + $0x68] sm:$0xff]
    %v2983 = vld [vmem:[#allocation3 + $0x70] sm:$0xff]
    %v2984 = vld [vmem:[#allocation3 + $0x80] sm:$0xff]
    %v2985 = vld [vmem:[#allocation3 + $0x88] sm:$0xff]
    %v2986 = vld [vmem:[#allocation3 + $0x90] sm:$0xff]
    %v2987 = vld [vmem:[#allocation3 + $0x98] sm:$0xff]
    %v2988 = vld [vmem:[#allocation3 + $0xa0] sm:$0xff]
    %v2989 = vld [vmem:[#allocation3 + $0xa8] sm:$0xff]
    %v2990 = vld [vmem:[#allocation3 + $0xb0] sm:$0xff]
    %v2991 = vld [vmem:[#allocation3 + $0xc0] sm:$0xff]
    %v2992 = vld [vmem:[#allocation3 + $0xc8] sm:$0xff]
    %v2993 = vld [vmem:[#allocation3 + $0xd0] sm:$0xff]
    %v2994 = vld [vmem:[#allocation3 + $0xd8] sm:$0xff]
    %v2995 = vld [vmem:[#allocation3 + $0xe0] sm:$0xff]
    %v2996 = vld [vmem:[#allocation3 + $0xe8] sm:$0xff]
    %v2997 = vld [vmem:[#allocation3 + $0xf0] sm:$0xff]
    %3026 = vrot.lane.b32.xlu0 %v2942, 101
    %v3027 = vpop.permute.xlu0 %3026
    %3028 = vrot.lane.b32.xlu0 %v2943, 101
    %v3029 = vpop.permute.xlu0 %3028
    %3030 = vrot.lane.b32.xlu0 %v2944, 101
    %v3031 = vpop.permute.xlu0 %3030
    %3032 = vrot.lane.b32.xlu0 %v2945, 101
    %v3033 = vpop.permute.xlu0 %3032
    %3034 = vrot.lane.b32.xlu0 %v2946, 101
    %v3035 = vpop.permute.xlu0 %3034
    %3036 = vrot.lane.b32.xlu0 %v2947, 101
    %v3037 = vpop.permute.xlu0 %3036
    %3038 = vrot.lane.b32.xlu0 %v2948, 101
    %v3039 = vpop.permute.xlu0 %3038
    %3040 = vrot.lane.b32.xlu0 %v2949, 101
    %v3041 = vpop.permute.xlu0 %3040
    %3042 = vrot.lane.b32.xlu0 %v2950, 101
    %v3043 = vpop.permute.xlu0 %3042
    %3044 = vrot.lane.b32.xlu0 %v2951, 101
    %v3045 = vpop.permute.xlu0 %3044
    %3046 = vrot.lane.b32.xlu0 %v2952, 101
    %v3047 = vpop.permute.xlu0 %3046
    %3048 = vrot.lane.b32.xlu0 %v2953, 101
    %v3049 = vpop.permute.xlu0 %3048
    %3050 = vrot.lane.b32.xlu0 %v2954, 101
    %v3051 = vpop.permute.xlu0 %3050
    %3052 = vrot.lane.b32.xlu0 %v2955, 101
    %v3053 = vpop.permute.xlu0 %3052
    %3054 = vrot.lane.b32.xlu0 %v2956, 101
    %v3055 = vpop.permute.xlu0 %3054
    %3056 = vrot.lane.b32.xlu0 %v2957, 101
    %v3057 = vpop.permute.xlu0 %3056
    %3058 = vrot.lane.b32.xlu0 %v2958, 101
    %v3059 = vpop.permute.xlu0 %3058
    %3060 = vrot.lane.b32.xlu0 %v2959, 101
    %v3061 = vpop.permute.xlu0 %3060
    %3062 = vrot.lane.b32.xlu0 %v2960, 101
    %v3063 = vpop.permute.xlu0 %3062
    %3064 = vrot.lane.b32.xlu0 %v2961, 101
    %v3065 = vpop.permute.xlu0 %3064
    %3066 = vrot.lane.b32.xlu0 %v2962, 101
    %v3067 = vpop.permute.xlu0 %3066
    %3068 = vrot.lane.b32.xlu0 %v2963, 101
    %v3069 = vpop.permute.xlu0 %3068
    %3070 = vrot.lane.b32.xlu0 %v2964, 101
    %v3071 = vpop.permute.xlu0 %3070
    %3072 = vrot.lane.b32.xlu0 %v2965, 101
    %v3073 = vpop.permute.xlu0 %3072
    %3074 = vrot.lane.b32.xlu0 %v2966, 101
    %v3075 = vpop.permute.xlu0 %3074
    %3076 = vrot.lane.b32.xlu0 %v2967, 101
    %v3077 = vpop.permute.xlu0 %3076
    %3078 = vrot.lane.b32.xlu0 %v2968, 101
    %v3079 = vpop.permute.xlu0 %3078
    %3080 = vrot.lane.b32.xlu0 %v2969, 101
    %v3081 = vpop.permute.xlu0 %3080
    %vm3082 = vcmask 826368
    %v3083 = vsel %vm3082, %v3027, %v3029
    %v3084 = vsel %vm3082, %v3029, %v3031
    %v3085 = vsel %vm3082, %v3031, %v3033
    %v3086 = vsel %vm3082, %v3033, %v3035
    %v3087 = vsel %vm3082, %v3035, %v3037
    %v3088 = vsel %vm3082, %v3037, %v3039
    %v3089 = vsel %vm3082, %v3041, %v3043
    %v3090 = vsel %vm3082, %v3043, %v3045
    %v3091 = vsel %vm3082, %v3045, %v3047
    %v3092 = vsel %vm3082, %v3047, %v3049
    %v3093 = vsel %vm3082, %v3049, %v3051
    %v3094 = vsel %vm3082, %v3051, %v3053
    %v3095 = vsel %vm3082, %v3055, %v3057
    %v3096 = vsel %vm3082, %v3057, %v3059
    %v3097 = vsel %vm3082, %v3059, %v3061
    %v3098 = vsel %vm3082, %v3061, %v3063
    %v3099 = vsel %vm3082, %v3063, %v3065
    %v3100 = vsel %vm3082, %v3065, %v3067
    %v3101 = vsel %vm3082, %v3069, %v3071
    %v3102 = vsel %vm3082, %v3071, %v3073
    %v3103 = vsel %vm3082, %v3073, %v3075
    %v3104 = vsel %vm3082, %v3075, %v3077
    %v3105 = vsel %vm3082, %v3077, %v3079
    %v3106 = vsel %vm3082, %v3079, %v3081
    %v3135 = vadd.f32 %v2970, %v3027
    %v3136 = vadd.f32 %v2971, %v3083
    %v3137 = vadd.f32 %v2972, %v3084
    %v3138 = vadd.f32 %v2973, %v3085
    %v3139 = vadd.f32 %v2974, %v3086
    %v3140 = vadd.f32 %v2975, %v3087
    %v3141 = vadd.f32 %v2976, %v3088
    %v3142 = vadd.f32 %v2977, %v3041
    %v3143 = vadd.f32 %v2978, %v3089
    %v3144 = vadd.f32 %v2979, %v3090
    %v3145 = vadd.f32 %v2980, %v3091
    %v3146 = vadd.f32 %v2981, %v3092
    %v3147 = vadd.f32 %v2982, %v3093
    %v3148 = vadd.f32 %v2983, %v3094
    %v3149 = vadd.f32 %v2984, %v3055
    %v3150 = vadd.f32 %v2985, %v3095
    %v3151 = vadd.f32 %v2986, %v3096
    %v3152 = vadd.f32 %v2987, %v3097
    %v3153 = vadd.f32 %v2988, %v3098
    %v3154 = vadd.f32 %v2989, %v3099
    %v3155 = vadd.f32 %v2990, %v3100
    %v3156 = vadd.f32 %v2991, %v3069
    %v3157 = vadd.f32 %v2992, %v3101
    %v3158 = vadd.f32 %v2993, %v3102
    %v3159 = vadd.f32 %v2994, %v3103
    %v3160 = vadd.f32 %v2995, %v3104
    %v3161 = vadd.f32 %v2996, %v3105
    %v3162 = vadd.f32 %v2997, %v3106
    %vm3163 = vcmask 1048360
    %3164 = vst.msk [vmem:[#allocation3] sm:$0xff] %vm3163, %v3135
    %3165 = vst [vmem:[#allocation3 + $0x8] sm:$0xff] %v3136
    %3166 = vst [vmem:[#allocation3 + $0x10] sm:$0xff] %v3137
    %3167 = vst [vmem:[#allocation3 + $0x18] sm:$0xff] %v3138
    %3168 = vst [vmem:[#allocation3 + $0x20] sm:$0xff] %v3139
    %3169 = vst [vmem:[#allocation3 + $0x28] sm:$0xff] %v3140
    %vm3170 = vcmask 957440
    %3171 = vst.msk [vmem:[#allocation3 + $0x30] sm:$0xff] %vm3170, %v3141
    %3172 = vst.msk [vmem:[#allocation3 + $0x40] sm:$0xff] %vm3163, %v3142
    %3173 = vst [vmem:[#allocation3 + $0x48] sm:$0xff] %v3143
    %3174 = vst [vmem:[#allocation3 + $0x50] sm:$0xff] %v3144
    %3175 = vst [vmem:[#allocation3 + $0x58] sm:$0xff] %v3145
    %3176 = vst [vmem:[#allocation3 + $0x60] sm:$0xff] %v3146
    %3177 = vst [vmem:[#allocation3 + $0x68] sm:$0xff] %v3147
    %3178 = vst.msk [vmem:[#allocation3 + $0x70] sm:$0xff] %vm3170, %v3148
    %3179 = vst.msk [vmem:[#allocation3 + $0x80] sm:$0xff] %vm3163, %v3149
    %3180 = vst [vmem:[#allocation3 + $0x88] sm:$0xff] %v3150
    %3181 = vst [vmem:[#allocation3 + $0x90] sm:$0xff] %v3151
    %3182 = vst [vmem:[#allocation3 + $0x98] sm:$0xff] %v3152
    %3183 = vst [vmem:[#allocation3 + $0xa0] sm:$0xff] %v3153
    %3184 = vst [vmem:[#allocation3 + $0xa8] sm:$0xff] %v3154
    %3185 = vst.msk [vmem:[#allocation3 + $0xb0] sm:$0xff] %vm3170, %v3155
    %3186 = vst.msk [vmem:[#allocation3 + $0xc0] sm:$0xff] %vm3163, %v3156
    %3187 = vst [vmem:[#allocation3 + $0xc8] sm:$0xff] %v3157
    %3188 = vst [vmem:[#allocation3 + $0xd0] sm:$0xff] %v3158
    %3189 = vst [vmem:[#allocation3 + $0xd8] sm:$0xff] %v3159
    %3190 = vst [vmem:[#allocation3 + $0xe0] sm:$0xff] %v3160
    %3191 = vst [vmem:[#allocation3 + $0xe8] sm:$0xff] %v3161
    %3192 = vst.msk [vmem:[#allocation3 + $0xf0] sm:$0xff] %vm3170, %v3162
    %v3193 = vld [vmem:[#allocation2 + $0x620] sm:$0xff]
    %v3194 = vld [vmem:[#allocation2 + $0x628] sm:$0xff]
    %v3195 = vld [vmem:[#allocation2 + $0x630] sm:$0xff]
    %v3196 = vld [vmem:[#allocation2 + $0x638] sm:$0xff]
    %v3197 = vld [vmem:[#allocation2 + $0x640] sm:$0xff]
    %v3198 = vld [vmem:[#allocation2 + $0x648] sm:$0xff]
    %v3199 = vld [vmem:[#allocation2 + $0x650] sm:$0xff]
    %v3200 = vld [vmem:[#allocation2 + $0x658] sm:$0xff]
    %v3201 = vld [vmem:[#allocation2 + $0x660] sm:$0xff]
    %v3202 = vld [vmem:[#allocation2 + $0x668] sm:$0xff]
    %v3203 = vld [vmem:[#allocation2 + $0x670] sm:$0xff]
    %v3204 = vld [vmem:[#allocation2 + $0x678] sm:$0xff]
    %v3205 = vld [vmem:[#allocation2 + $0x680] sm:$0xff]
    %v3206 = vld [vmem:[#allocation2 + $0x688] sm:$0xff]
    %v3207 = vld [vmem:[#allocation2 + $0x690] sm:$0xff]
    %v3208 = vld [vmem:[#allocation2 + $0x698] sm:$0xff]
    %v3209 = vld [vmem:[#allocation2 + $0x6a0] sm:$0xff]
    %v3210 = vld [vmem:[#allocation2 + $0x6a8] sm:$0xff]
    %v3211 = vld [vmem:[#allocation2 + $0x6b0] sm:$0xff]
    %v3212 = vld [vmem:[#allocation2 + $0x6b8] sm:$0xff]
    %v3213 = vld [vmem:[#allocation2 + $0x6c0] sm:$0xff]
    %v3214 = vld [vmem:[#allocation2 + $0x6c8] sm:$0xff]
    %v3215 = vld [vmem:[#allocation2 + $0x6d0] sm:$0xff]
    %v3216 = vld [vmem:[#allocation2 + $0x6d8] sm:$0xff]
    %v3217 = vld [vmem:[#allocation2 + $0x6e0] sm:$0xff]
    %v3218 = vld [vmem:[#allocation2 + $0x6e8] sm:$0xff]
    %v3219 = vld [vmem:[#allocation2 + $0x6f0] sm:$0xff]
    %v3220 = vld [vmem:[#allocation2 + $0x6f8] sm:$0xff]
    %v3221 = vld [vmem:[#allocation3] sm:$0xff]
    %v3222 = vld [vmem:[#allocation3 + $0x8] sm:$0xff]
    %v3223 = vld [vmem:[#allocation3 + $0x10] sm:$0xff]
    %v3224 = vld [vmem:[#allocation3 + $0x18] sm:$0xff]
    %v3225 = vld [vmem:[#allocation3 + $0x20] sm:$0xff]
    %v3226 = vld [vmem:[#allocation3 + $0x28] sm:$0xff]
    %v3227 = vld [vmem:[#allocation3 + $0x30] sm:$0xff]
    %v3228 = vld [vmem:[#allocation3 + $0x40] sm:$0xff]
    %v3229 = vld [vmem:[#allocation3 + $0x48] sm:$0xff]
    %v3230 = vld [vmem:[#allocation3 + $0x50] sm:$0xff]
    %v3231 = vld [vmem:[#allocation3 + $0x58] sm:$0xff]
    %v3232 = vld [vmem:[#allocation3 + $0x60] sm:$0xff]
    %v3233 = vld [vmem:[#allocation3 + $0x68] sm:$0xff]
    %v3234 = vld [vmem:[#allocation3 + $0x70] sm:$0xff]
    %v3235 = vld [vmem:[#allocation3 + $0x80] sm:$0xff]
    %v3236 = vld [vmem:[#allocation3 + $0x88] sm:$0xff]
    %v3237 = vld [vmem:[#allocation3 + $0x90] sm:$0xff]
    %v3238 = vld [vmem:[#allocation3 + $0x98] sm:$0xff]
    %v3239 = vld [vmem:[#allocation3 + $0xa0] sm:$0xff]
    %v3240 = vld [vmem:[#allocation3 + $0xa8] sm:$0xff]
    %v3241 = vld [vmem:[#allocation3 + $0xb0] sm:$0xff]
    %v3242 = vld [vmem:[#allocation3 + $0xc0] sm:$0xff]
    %v3243 = vld [vmem:[#allocation3 + $0xc8] sm:$0xff]
    %v3244 = vld [vmem:[#allocation3 + $0xd0] sm:$0xff]
    %v3245 = vld [vmem:[#allocation3 + $0xd8] sm:$0xff]
    %v3246 = vld [vmem:[#allocation3 + $0xe0] sm:$0xff]
    %v3247 = vld [vmem:[#allocation3 + $0xe8] sm:$0xff]
    %v3248 = vld [vmem:[#allocation3 + $0xf0] sm:$0xff]
    %3277 = vrot.lane.b32.xlu0 %v3193, 100
    %v3278 = vpop.permute.xlu0 %3277
    %3279 = vrot.lane.b32.xlu0 %v3194, 100
    %v3280 = vpop.permute.xlu0 %3279
    %3281 = vrot.lane.b32.xlu0 %v3195, 100
    %v3282 = vpop.permute.xlu0 %3281
    %3283 = vrot.lane.b32.xlu0 %v3196, 100
    %v3284 = vpop.permute.xlu0 %3283
    %3285 = vrot.lane.b32.xlu0 %v3197, 100
    %v3286 = vpop.permute.xlu0 %3285
    %3287 = vrot.lane.b32.xlu0 %v3198, 100
    %v3288 = vpop.permute.xlu0 %3287
    %3289 = vrot.lane.b32.xlu0 %v3199, 100
    %v3290 = vpop.permute.xlu0 %3289
    %3291 = vrot.lane.b32.xlu0 %v3200, 100
    %v3292 = vpop.permute.xlu0 %3291
    %3293 = vrot.lane.b32.xlu0 %v3201, 100
    %v3294 = vpop.permute.xlu0 %3293
    %3295 = vrot.lane.b32.xlu0 %v3202, 100
    %v3296 = vpop.permute.xlu0 %3295
    %3297 = vrot.lane.b32.xlu0 %v3203, 100
    %v3298 = vpop.permute.xlu0 %3297
    %3299 = vrot.lane.b32.xlu0 %v3204, 100
    %v3300 = vpop.permute.xlu0 %3299
    %3301 = vrot.lane.b32.xlu0 %v3205, 100
    %v3302 = vpop.permute.xlu0 %3301
    %3303 = vrot.lane.b32.xlu0 %v3206, 100
    %v3304 = vpop.permute.xlu0 %3303
    %3305 = vrot.lane.b32.xlu0 %v3207, 100
    %v3306 = vpop.permute.xlu0 %3305
    %3307 = vrot.lane.b32.xlu0 %v3208, 100
    %v3308 = vpop.permute.xlu0 %3307
    %3309 = vrot.lane.b32.xlu0 %v3209, 100
    %v3310 = vpop.permute.xlu0 %3309
    %3311 = vrot.lane.b32.xlu0 %v3210, 100
    %v3312 = vpop.permute.xlu0 %3311
    %3313 = vrot.lane.b32.xlu0 %v3211, 100
    %v3314 = vpop.permute.xlu0 %3313
    %3315 = vrot.lane.b32.xlu0 %v3212, 100
    %v3316 = vpop.permute.xlu0 %3315
    %3317 = vrot.lane.b32.xlu0 %v3213, 100
    %v3318 = vpop.permute.xlu0 %3317
    %3319 = vrot.lane.b32.xlu0 %v3214, 100
    %v3320 = vpop.permute.xlu0 %3319
    %3321 = vrot.lane.b32.xlu0 %v3215, 100
    %v3322 = vpop.permute.xlu0 %3321
    %3323 = vrot.lane.b32.xlu0 %v3216, 100
    %v3324 = vpop.permute.xlu0 %3323
    %3325 = vrot.lane.b32.xlu0 %v3217, 100
    %v3326 = vpop.permute.xlu0 %3325
    %3327 = vrot.lane.b32.xlu0 %v3218, 100
    %v3328 = vpop.permute.xlu0 %3327
    %3329 = vrot.lane.b32.xlu0 %v3219, 100
    %v3330 = vpop.permute.xlu0 %3329
    %3331 = vrot.lane.b32.xlu0 %v3220, 100
    %v3332 = vpop.permute.xlu0 %3331
    %vm3333 = vcmask 818176
    %v3334 = vsel %vm3333, %v3278, %v3280
    %v3335 = vsel %vm3333, %v3280, %v3282
    %v3336 = vsel %vm3333, %v3282, %v3284
    %v3337 = vsel %vm3333, %v3284, %v3286
    %v3338 = vsel %vm3333, %v3286, %v3288
    %v3339 = vsel %vm3333, %v3288, %v3290
    %v3340 = vsel %vm3333, %v3292, %v3294
    %v3341 = vsel %vm3333, %v3294, %v3296
    %v3342 = vsel %vm3333, %v3296, %v3298
    %v3343 = vsel %vm3333, %v3298, %v3300
    %v3344 = vsel %vm3333, %v3300, %v3302
    %v3345 = vsel %vm3333, %v3302, %v3304
    %v3346 = vsel %vm3333, %v3306, %v3308
    %v3347 = vsel %vm3333, %v3308, %v3310
    %v3348 = vsel %vm3333, %v3310, %v3312
    %v3349 = vsel %vm3333, %v3312, %v3314
    %v3350 = vsel %vm3333, %v3314, %v3316
    %v3351 = vsel %vm3333, %v3316, %v3318
    %v3352 = vsel %vm3333, %v3320, %v3322
    %v3353 = vsel %vm3333, %v3322, %v3324
    %v3354 = vsel %vm3333, %v3324, %v3326
    %v3355 = vsel %vm3333, %v3326, %v3328
    %v3356 = vsel %vm3333, %v3328, %v3330
    %v3357 = vsel %vm3333, %v3330, %v3332
    %v3386 = vadd.f32 %v3221, %v3278
    %v3387 = vadd.f32 %v3222, %v3334
    %v3388 = vadd.f32 %v3223, %v3335
    %v3389 = vadd.f32 %v3224, %v3336
    %v3390 = vadd.f32 %v3225, %v3337
    %v3391 = vadd.f32 %v3226, %v3338
    %v3392 = vadd.f32 %v3227, %v3339
    %v3393 = vadd.f32 %v3228, %v3292
    %v3394 = vadd.f32 %v3229, %v3340
    %v3395 = vadd.f32 %v3230, %v3341
    %v3396 = vadd.f32 %v3231, %v3342
    %v3397 = vadd.f32 %v3232, %v3343
    %v3398 = vadd.f32 %v3233, %v3344
    %v3399 = vadd.f32 %v3234, %v3345
    %v3400 = vadd.f32 %v3235, %v3306
    %v3401 = vadd.f32 %v3236, %v3346
    %v3402 = vadd.f32 %v3237, %v3347
    %v3403 = vadd.f32 %v3238, %v3348
    %v3404 = vadd.f32 %v3239, %v3349
    %v3405 = vadd.f32 %v3240, %v3350
    %v3406 = vadd.f32 %v3241, %v3351
    %v3407 = vadd.f32 %v3242, %v3320
    %v3408 = vadd.f32 %v3243, %v3352
    %v3409 = vadd.f32 %v3244, %v3353
    %v3410 = vadd.f32 %v3245, %v3354
    %v3411 = vadd.f32 %v3246, %v3355
    %v3412 = vadd.f32 %v3247, %v3356
    %v3413 = vadd.f32 %v3248, %v3357
    %vm3414 = vcmask 1048352
    %3415 = vst.msk [vmem:[#allocation3] sm:$0xff] %vm3414, %v3386
    %3416 = vst [vmem:[#allocation3 + $0x8] sm:$0xff] %v3387
    %3417 = vst [vmem:[#allocation3 + $0x10] sm:$0xff] %v3388
    %3418 = vst [vmem:[#allocation3 + $0x18] sm:$0xff] %v3389
    %3419 = vst [vmem:[#allocation3 + $0x20] sm:$0xff] %v3390
    %3420 = vst [vmem:[#allocation3 + $0x28] sm:$0xff] %v3391
    %vm3421 = vcmask 949248
    %3422 = vst.msk [vmem:[#allocation3 + $0x30] sm:$0xff] %vm3421, %v3392
    %3423 = vst.msk [vmem:[#allocation3 + $0x40] sm:$0xff] %vm3414, %v3393
    %3424 = vst [vmem:[#allocation3 + $0x48] sm:$0xff] %v3394
    %3425 = vst [vmem:[#allocation3 + $0x50] sm:$0xff] %v3395
    %3426 = vst [vmem:[#allocation3 + $0x58] sm:$0xff] %v3396
    %3427 = vst [vmem:[#allocation3 + $0x60] sm:$0xff] %v3397
    %3428 = vst [vmem:[#allocation3 + $0x68] sm:$0xff] %v3398
    %3429 = vst.msk [vmem:[#allocation3 + $0x70] sm:$0xff] %vm3421, %v3399
    %3430 = vst.msk [vmem:[#allocation3 + $0x80] sm:$0xff] %vm3414, %v3400
    %3431 = vst [vmem:[#allocation3 + $0x88] sm:$0xff] %v3401
    %3432 = vst [vmem:[#allocation3 + $0x90] sm:$0xff] %v3402
    %3433 = vst [vmem:[#allocation3 + $0x98] sm:$0xff] %v3403
    %3434 = vst [vmem:[#allocation3 + $0xa0] sm:$0xff] %v3404
    %3435 = vst [vmem:[#allocation3 + $0xa8] sm:$0xff] %v3405
    %3436 = vst.msk [vmem:[#allocation3 + $0xb0] sm:$0xff] %vm3421, %v3406
    %3437 = vst.msk [vmem:[#allocation3 + $0xc0] sm:$0xff] %vm3414, %v3407
    %3438 = vst [vmem:[#allocation3 + $0xc8] sm:$0xff] %v3408
    %3439 = vst [vmem:[#allocation3 + $0xd0] sm:$0xff] %v3409
    %3440 = vst [vmem:[#allocation3 + $0xd8] sm:$0xff] %v3410
    %3441 = vst [vmem:[#allocation3 + $0xe0] sm:$0xff] %v3411
    %3442 = vst [vmem:[#allocation3 + $0xe8] sm:$0xff] %v3412
    %3443 = vst.msk [vmem:[#allocation3 + $0xf0] sm:$0xff] %vm3421, %v3413
    %v3444 = vld [vmem:[#allocation2 + $0x700] sm:$0xff]
    %v3445 = vld [vmem:[#allocation2 + $0x708] sm:$0xff]
    %v3446 = vld [vmem:[#allocation2 + $0x710] sm:$0xff]
    %v3447 = vld [vmem:[#allocation2 + $0x718] sm:$0xff]
    %v3448 = vld [vmem:[#allocation2 + $0x720] sm:$0xff]
    %v3449 = vld [vmem:[#allocation2 + $0x728] sm:$0xff]
    %v3450 = vld [vmem:[#allocation2 + $0x730] sm:$0xff]
    %v3451 = vld [vmem:[#allocation2 + $0x738] sm:$0xff]
    %v3452 = vld [vmem:[#allocation2 + $0x740] sm:$0xff]
    %v3453 = vld [vmem:[#allocation2 + $0x748] sm:$0xff]
    %v3454 = vld [vmem:[#allocation2 + $0x750] sm:$0xff]
    %v3455 = vld [vmem:[#allocation2 + $0x758] sm:$0xff]
    %v3456 = vld [vmem:[#allocation2 + $0x760] sm:$0xff]
    %v3457 = vld [vmem:[#allocation2 + $0x768] sm:$0xff]
    %v3458 = vld [vmem:[#allocation2 + $0x770] sm:$0xff]
    %v3459 = vld [vmem:[#allocation2 + $0x778] sm:$0xff]
    %v3460 = vld [vmem:[#allocation2 + $0x780] sm:$0xff]
    %v3461 = vld [vmem:[#allocation2 + $0x788] sm:$0xff]
    %v3462 = vld [vmem:[#allocation2 + $0x790] sm:$0xff]
    %v3463 = vld [vmem:[#allocation2 + $0x798] sm:$0xff]
    %v3464 = vld [vmem:[#allocation2 + $0x7a0] sm:$0xff]
    %v3465 = vld [vmem:[#allocation2 + $0x7a8] sm:$0xff]
    %v3466 = vld [vmem:[#allocation2 + $0x7b0] sm:$0xff]
    %v3467 = vld [vmem:[#allocation2 + $0x7b8] sm:$0xff]
    %v3468 = vld [vmem:[#allocation2 + $0x7c0] sm:$0xff]
    %v3469 = vld [vmem:[#allocation2 + $0x7c8] sm:$0xff]
    %v3470 = vld [vmem:[#allocation2 + $0x7d0] sm:$0xff]
    %v3471 = vld [vmem:[#allocation2 + $0x7d8] sm:$0xff]
    %v3472 = vld [vmem:[%s1912] ss:$2 sm:$0x7f]
    %v3474 = vperm.slane %v3472, 0
    %v3475 = vperm.slane %v3472, 1
    %v3476 = vperm.slane %v3472, 2
    %v3477 = vperm.slane %v3472, 3
    %v3478 = vperm.slane %v3472, 4
    %v3479 = vperm.slane %v3472, 5
    %v3480 = vperm.slane %v3472, 6
    %v3488 = vmul.f32 %v3444, %v3474
    %v3489 = vmul.f32 %v3445, %v3475
    %v3490 = vmul.f32 %v3446, %v3476
    %v3491 = vmul.f32 %v3447, %v3477
    %v3492 = vmul.f32 %v3448, %v3478
    %v3493 = vmul.f32 %v3449, %v3479
    %v3494 = vmul.f32 %v3450, %v3480
    %v3495 = vmul.f32 %v3451, %v3474
    %v3496 = vmul.f32 %v3452, %v3475
    %v3497 = vmul.f32 %v3453, %v3476
    %v3498 = vmul.f32 %v3454, %v3477
    %v3499 = vmul.f32 %v3455, %v3478
    %v3500 = vmul.f32 %v3456, %v3479
    %v3501 = vmul.f32 %v3457, %v3480
    %v3502 = vmul.f32 %v3458, %v3474
    %v3503 = vmul.f32 %v3459, %v3475
    %v3504 = vmul.f32 %v3460, %v3476
    %v3505 = vmul.f32 %v3461, %v3477
    %v3506 = vmul.f32 %v3462, %v3478
    %v3507 = vmul.f32 %v3463, %v3479
    %v3508 = vmul.f32 %v3464, %v3480
    %v3509 = vmul.f32 %v3465, %v3474
    %v3510 = vmul.f32 %v3466, %v3475
    %v3511 = vmul.f32 %v3467, %v3476
    %v3512 = vmul.f32 %v3468, %v3477
    %v3513 = vmul.f32 %v3469, %v3478
    %v3514 = vmul.f32 %v3470, %v3479
    %v3515 = vmul.f32 %v3471, %v3480
    %v3516 = vld [vmem:[#allocation3] sm:$0xff]
    %v3517 = vld [vmem:[#allocation3 + $0x8] sm:$0xff]
    %v3518 = vld [vmem:[#allocation3 + $0x10] sm:$0xff]
    %v3519 = vld [vmem:[#allocation3 + $0x18] sm:$0xff]
    %v3520 = vld [vmem:[#allocation3 + $0x20] sm:$0xff]
    %v3521 = vld [vmem:[#allocation3 + $0x28] sm:$0xff]
    %v3522 = vld [vmem:[#allocation3 + $0x30] sm:$0xff]
    %v3523 = vld [vmem:[#allocation3 + $0x40] sm:$0xff]
    %v3524 = vld [vmem:[#allocation3 + $0x48] sm:$0xff]
    %v3525 = vld [vmem:[#allocation3 + $0x50] sm:$0xff]
    %v3526 = vld [vmem:[#allocation3 + $0x58] sm:$0xff]
    %v3527 = vld [vmem:[#allocation3 + $0x60] sm:$0xff]
    %v3528 = vld [vmem:[#allocation3 + $0x68] sm:$0xff]
    %v3529 = vld [vmem:[#allocation3 + $0x70] sm:$0xff]
    %v3530 = vld [vmem:[#allocation3 + $0x80] sm:$0xff]
    %v3531 = vld [vmem:[#allocation3 + $0x88] sm:$0xff]
    %v3532 = vld [vmem:[#allocation3 + $0x90] sm:$0xff]
    %v3533 = vld [vmem:[#allocation3 + $0x98] sm:$0xff]
    %v3534 = vld [vmem:[#allocation3 + $0xa0] sm:$0xff]
    %v3535 = vld [vmem:[#allocation3 + $0xa8] sm:$0xff]
    %v3536 = vld [vmem:[#allocation3 + $0xb0] sm:$0xff]
    %v3537 = vld [vmem:[#allocation3 + $0xc0] sm:$0xff]
    %v3538 = vld [vmem:[#allocation3 + $0xc8] sm:$0xff]
    %v3539 = vld [vmem:[#allocation3 + $0xd0] sm:$0xff]
    %v3540 = vld [vmem:[#allocation3 + $0xd8] sm:$0xff]
    %v3541 = vld [vmem:[#allocation3 + $0xe0] sm:$0xff]
    %v3542 = vld [vmem:[#allocation3 + $0xe8] sm:$0xff]
    %v3543 = vld [vmem:[#allocation3 + $0xf0] sm:$0xff]
    %3572 = vrot.lane.b32.xlu0 %v3488, 99
    %v3573 = vpop.permute.xlu0 %3572
    %3574 = vrot.lane.b32.xlu0 %v3489, 99
    %v3575 = vpop.permute.xlu0 %3574
    %3576 = vrot.lane.b32.xlu0 %v3490, 99
    %v3577 = vpop.permute.xlu0 %3576
    %3578 = vrot.lane.b32.xlu0 %v3491, 99
    %v3579 = vpop.permute.xlu0 %3578
    %3580 = vrot.lane.b32.xlu0 %v3492, 99
    %v3581 = vpop.permute.xlu0 %3580
    %3582 = vrot.lane.b32.xlu0 %v3493, 99
    %v3583 = vpop.permute.xlu0 %3582
    %3584 = vrot.lane.b32.xlu0 %v3494, 99
    %v3585 = vpop.permute.xlu0 %3584
    %3586 = vrot.lane.b32.xlu0 %v3495, 99
    %v3587 = vpop.permute.xlu0 %3586
    %3588 = vrot.lane.b32.xlu0 %v3496, 99
    %v3589 = vpop.permute.xlu0 %3588
    %3590 = vrot.lane.b32.xlu0 %v3497, 99
    %v3591 = vpop.permute.xlu0 %3590
    %3592 = vrot.lane.b32.xlu0 %v3498, 99
    %v3593 = vpop.permute.xlu0 %3592
    %3594 = vrot.lane.b32.xlu0 %v3499, 99
    %v3595 = vpop.permute.xlu0 %3594
    %3596 = vrot.lane.b32.xlu0 %v3500, 99
    %v3597 = vpop.permute.xlu0 %3596
    %3598 = vrot.lane.b32.xlu0 %v3501, 99
    %v3599 = vpop.permute.xlu0 %3598
    %3600 = vrot.lane.b32.xlu0 %v3502, 99
    %v3601 = vpop.permute.xlu0 %3600
    %3602 = vrot.lane.b32.xlu0 %v3503, 99
    %v3603 = vpop.permute.xlu0 %3602
    %3604 = vrot.lane.b32.xlu0 %v3504, 99
    %v3605 = vpop.permute.xlu0 %3604
    %3606 = vrot.lane.b32.xlu0 %v3505, 99
    %v3607 = vpop.permute.xlu0 %3606
    %3608 = vrot.lane.b32.xlu0 %v3506, 99
    %v3609 = vpop.permute.xlu0 %3608
    %3610 = vrot.lane.b32.xlu0 %v3507, 99
    %v3611 = vpop.permute.xlu0 %3610
    %3612 = vrot.lane.b32.xlu0 %v3508, 99
    %v3613 = vpop.permute.xlu0 %3612
    %3614 = vrot.lane.b32.xlu0 %v3509, 99
    %v3615 = vpop.permute.xlu0 %3614
    %3616 = vrot.lane.b32.xlu0 %v3510, 99
    %v3617 = vpop.permute.xlu0 %3616
    %3618 = vrot.lane.b32.xlu0 %v3511, 99
    %v3619 = vpop.permute.xlu0 %3618
    %3620 = vrot.lane.b32.xlu0 %v3512, 99
    %v3621 = vpop.permute.xlu0 %3620
    %3622 = vrot.lane.b32.xlu0 %v3513, 99
    %v3623 = vpop.permute.xlu0 %3622
    %3624 = vrot.lane.b32.xlu0 %v3514, 99
    %v3625 = vpop.permute.xlu0 %3624
    %3626 = vrot.lane.b32.xlu0 %v3515, 99
    %v3627 = vpop.permute.xlu0 %3626
    %vm3628 = vcmask 809984
    %v3629 = vsel %vm3628, %v3573, %v3575
    %v3630 = vsel %vm3628, %v3575, %v3577
    %v3631 = vsel %vm3628, %v3577, %v3579
    %v3632 = vsel %vm3628, %v3579, %v3581
    %v3633 = vsel %vm3628, %v3581, %v3583
    %v3634 = vsel %vm3628, %v3583, %v3585
    %v3635 = vsel %vm3628, %v3587, %v3589
    %v3636 = vsel %vm3628, %v3589, %v3591
    %v3637 = vsel %vm3628, %v3591, %v3593
    %v3638 = vsel %vm3628, %v3593, %v3595
    %v3639 = vsel %vm3628, %v3595, %v3597
    %v3640 = vsel %vm3628, %v3597, %v3599
    %v3641 = vsel %vm3628, %v3601, %v3603
    %v3642 = vsel %vm3628, %v3603, %v3605
    %v3643 = vsel %vm3628, %v3605, %v3607
    %v3644 = vsel %vm3628, %v3607, %v3609
    %v3645 = vsel %vm3628, %v3609, %v3611
    %v3646 = vsel %vm3628, %v3611, %v3613
    %v3647 = vsel %vm3628, %v3615, %v3617
    %v3648 = vsel %vm3628, %v3617, %v3619
    %v3649 = vsel %vm3628, %v3619, %v3621
    %v3650 = vsel %vm3628, %v3621, %v3623
    %v3651 = vsel %vm3628, %v3623, %v3625
    %v3652 = vsel %vm3628, %v3625, %v3627
    %v3681 = vadd.f32 %v3516, %v3573
    %v3682 = vadd.f32 %v3517, %v3629
    %v3683 = vadd.f32 %v3518, %v3630
    %v3684 = vadd.f32 %v3519, %v3631
    %v3685 = vadd.f32 %v3520, %v3632
    %v3686 = vadd.f32 %v3521, %v3633
    %v3687 = vadd.f32 %v3522, %v3634
    %v3688 = vadd.f32 %v3523, %v3587
    %v3689 = vadd.f32 %v3524, %v3635
    %v3690 = vadd.f32 %v3525, %v3636
    %v3691 = vadd.f32 %v3526, %v3637
    %v3692 = vadd.f32 %v3527, %v3638
    %v3693 = vadd.f32 %v3528, %v3639
    %v3694 = vadd.f32 %v3529, %v3640
    %v3695 = vadd.f32 %v3530, %v3601
    %v3696 = vadd.f32 %v3531, %v3641
    %v3697 = vadd.f32 %v3532, %v3642
    %v3698 = vadd.f32 %v3533, %v3643
    %v3699 = vadd.f32 %v3534, %v3644
    %v3700 = vadd.f32 %v3535, %v3645
    %v3701 = vadd.f32 %v3536, %v3646
    %v3702 = vadd.f32 %v3537, %v3615
    %v3703 = vadd.f32 %v3538, %v3647
    %v3704 = vadd.f32 %v3539, %v3648
    %v3705 = vadd.f32 %v3540, %v3649
    %v3706 = vadd.f32 %v3541, %v3650
    %v3707 = vadd.f32 %v3542, %v3651
    %v3708 = vadd.f32 %v3543, %v3652
    %vm3709 = vcmask 1048344
    %3710 = vst.msk [vmem:[#allocation3] sm:$0xff] %vm3709, %v3681
    %3711 = vst [vmem:[#allocation3 + $0x8] sm:$0xff] %v3682
    %3712 = vst [vmem:[#allocation3 + $0x10] sm:$0xff] %v3683
    %3713 = vst [vmem:[#allocation3 + $0x18] sm:$0xff] %v3684
    %3714 = vst [vmem:[#allocation3 + $0x20] sm:$0xff] %v3685
    %3715 = vst [vmem:[#allocation3 + $0x28] sm:$0xff] %v3686
    %vm3716 = vcmask 941056
    %3717 = vst.msk [vmem:[#allocation3 + $0x30] sm:$0xff] %vm3716, %v3687
    %3718 = vst.msk [vmem:[#allocation3 + $0x40] sm:$0xff] %vm3709, %v3688
    %3719 = vst [vmem:[#allocation3 + $0x48] sm:$0xff] %v3689
    %3720 = vst [vmem:[#allocation3 + $0x50] sm:$0xff] %v3690
    %3721 = vst [vmem:[#allocation3 + $0x58] sm:$0xff] %v3691
    %3722 = vst [vmem:[#allocation3 + $0x60] sm:$0xff] %v3692
    %3723 = vst [vmem:[#allocation3 + $0x68] sm:$0xff] %v3693
    %3724 = vst.msk [vmem:[#allocation3 + $0x70] sm:$0xff] %vm3716, %v3694
    %3725 = vst.msk [vmem:[#allocation3 + $0x80] sm:$0xff] %vm3709, %v3695
    %3726 = vst [vmem:[#allocation3 + $0x88] sm:$0xff] %v3696
    %3727 = vst [vmem:[#allocation3 + $0x90] sm:$0xff] %v3697
    %3728 = vst [vmem:[#allocation3 + $0x98] sm:$0xff] %v3698
    %3729 = vst [vmem:[#allocation3 + $0xa0] sm:$0xff] %v3699
    %3730 = vst [vmem:[#allocation3 + $0xa8] sm:$0xff] %v3700
    %3731 = vst.msk [vmem:[#allocation3 + $0xb0] sm:$0xff] %vm3716, %v3701
    %3732 = vst.msk [vmem:[#allocation3 + $0xc0] sm:$0xff] %vm3709, %v3702
    %3733 = vst [vmem:[#allocation3 + $0xc8] sm:$0xff] %v3703
    %3734 = vst [vmem:[#allocation3 + $0xd0] sm:$0xff] %v3704
    %3735 = vst [vmem:[#allocation3 + $0xd8] sm:$0xff] %v3705
    %3736 = vst [vmem:[#allocation3 + $0xe0] sm:$0xff] %v3706
    %3737 = vst [vmem:[#allocation3 + $0xe8] sm:$0xff] %v3707
    %3738 = vst.msk [vmem:[#allocation3 + $0xf0] sm:$0xff] %vm3716, %v3708
    %v3739 = vld [vmem:[#allocation3 + $0x8] sm:$0xff]
    %v3740 = vld [vmem:[#allocation3 + $0x10] sm:$0xff]
    %v3741 = vld [vmem:[#allocation3 + $0x18] sm:$0xff]
    %v3742 = vld [vmem:[#allocation3 + $0x20] sm:$0xff]
    %v3743 = vld [vmem:[#allocation3 + $0x28] sm:$0xff]
    %v3744 = vld [vmem:[#allocation3 + $0x30] sm:$0xff]
    %v3745 = vld [vmem:[#allocation3 + $0x38] sm:$0xff]
    %v3746 = vld [vmem:[#allocation3 + $0x48] sm:$0xff]
    %v3747 = vld [vmem:[#allocation3 + $0x50] sm:$0xff]
    %v3748 = vld [vmem:[#allocation3 + $0x58] sm:$0xff]
    %v3749 = vld [vmem:[#allocation3 + $0x60] sm:$0xff]
    %v3750 = vld [vmem:[#allocation3 + $0x68] sm:$0xff]
    %v3751 = vld [vmem:[#allocation3 + $0x70] sm:$0xff]
    %v3752 = vld [vmem:[#allocation3 + $0x78] sm:$0xff]
    %v3753 = vld [vmem:[#allocation3 + $0x88] sm:$0xff]
    %v3754 = vld [vmem:[#allocation3 + $0x90] sm:$0xff]
    %v3755 = vld [vmem:[#allocation3 + $0x98] sm:$0xff]
    %v3756 = vld [vmem:[#allocation3 + $0xa0] sm:$0xff]
    %v3757 = vld [vmem:[#allocation3 + $0xa8] sm:$0xff]
    %v3758 = vld [vmem:[#allocation3 + $0xb0] sm:$0xff]
    %v3759 = vld [vmem:[#allocation3 + $0xb8] sm:$0xff]
    %v3760 = vld [vmem:[#allocation3 + $0xc8] sm:$0xff]
    %v3761 = vld [vmem:[#allocation3 + $0xd0] sm:$0xff]
    %v3762 = vld [vmem:[#allocation3 + $0xd8] sm:$0xff]
    %v3763 = vld [vmem:[#allocation3 + $0xe0] sm:$0xff]
    %v3764 = vld [vmem:[#allocation3 + $0xe8] sm:$0xff]
    %v3765 = vld [vmem:[#allocation3 + $0xf0] sm:$0xff]
    %v3766 = vld [vmem:[#allocation3 + $0xf8] sm:$0xff]
    %3767 = vst [vmem:[%s3] sm:$0xff] %v3739
    %3768 = vst [vmem:[%s3 + $0x8] sm:$0xff] %v3740
    %3769 = vst [vmem:[%s3 + $0x10] sm:$0xff] %v3741
    %3770 = vst [vmem:[%s3 + $0x18] sm:$0xff] %v3742
    %3771 = vst [vmem:[%s3 + $0x20] sm:$0xff] %v3743
    %3772 = vst [vmem:[%s3 + $0x28] sm:$0xff] %v3744
    %3773 = vst.msk [vmem:[%s3 + $0x30] sm:$0xff] %vm1059, %v3745
    %3774 = vst [vmem:[%s3 + $0x38] sm:$0xff] %v3746
    %3775 = vst [vmem:[%s3 + $0x40] sm:$0xff] %v3747
    %3776 = vst [vmem:[%s3 + $0x48] sm:$0xff] %v3748
    %3777 = vst [vmem:[%s3 + $0x50] sm:$0xff] %v3749
    %3778 = vst [vmem:[%s3 + $0x58] sm:$0xff] %v3750
    %3779 = vst [vmem:[%s3 + $0x60] sm:$0xff] %v3751
    %3780 = vst.msk [vmem:[%s3 + $0x68] sm:$0xff] %vm1059, %v3752
    %3781 = vst [vmem:[%s3 + $0x70] sm:$0xff] %v3753
    %3782 = vst [vmem:[%s3 + $0x78] sm:$0xff] %v3754
    %3783 = vst [vmem:[%s3 + $0x80] sm:$0xff] %v3755
    %3784 = vst [vmem:[%s3 + $0x88] sm:$0xff] %v3756
    %3785 = vst [vmem:[%s3 + $0x90] sm:$0xff] %v3757
    %3786 = vst [vmem:[%s3 + $0x98] sm:$0xff] %v3758
    %3787 = vst.msk [vmem:[%s3 + $0xa0] sm:$0xff] %vm1059, %v3759
    %3788 = vst [vmem:[%s3 + $0xa8] sm:$0xff] %v3760
    %3789 = vst [vmem:[%s3 + $0xb0] sm:$0xff] %v3761
    %3790 = vst [vmem:[%s3 + $0xb8] sm:$0xff] %v3762
    %3791 = vst [vmem:[%s3 + $0xc0] sm:$0xff] %v3763
    %3792 = vst [vmem:[%s3 + $0xc8] sm:$0xff] %v3764
    %3793 = vst [vmem:[%s3 + $0xd0] sm:$0xff] %v3765
    %3794 = vst.msk [vmem:[%s3 + $0xd8] sm:$0xff] %vm1059, %v3766
    // Predicated region
    $region18: #{forward.1} parent=1 // pred_check
      _
    $region19: #{forward.1} parent=1 // pred_check_branch
      %3796 = sbr.rel (0) target = $region21
    $region20: #{forward.1} parent=1 // pred_region
      _
    $region21: #{forward.1} parent=1 // pred_fallthru
      _
    // Predicated region
    $region22: #{forward.1} parent=1 // pred_check
      _
    $region23: #{forward.1} parent=1 // pred_check_branch
      %3798 = sbr.rel (0) target = $region25
    $region24: #{forward.1} parent=1 // pred_region
      _
    $region25: #{forward.1} parent=1 // pred_fallthru
      _
    %3799 = vsyncpa [#allocation5], 1

</llo_original>
